<compile_context>
chip_gen: v7x
topology: tpu7x:2x2x1
jax: 0.10.0
libtpu: 0.0.40
codegen_flags: <defaults>
</compile_context>

<pallas_src>
import jax
import jax.numpy as jnp
from jax.experimental import pallas as pl
from jax.experimental.pallas import tpu as pltpu

# ----------------------------- model dimensions -----------------------------
H_DIM = 128          # hidden dim of the GGNN
X_DIM = 128          # aggregator output dim / GRU input dim
CLASS_DIM = 90       # one-hot class dim
C_PAD = 128          # class dim padded to a full lane group
FEAT_DIM = 2048      # ResNet-without-FC feature dim
NUM_TASKS = 14       # output_model.num_tasks (COCO-Tasks)
OUT_PAD = 128        # lane-padded output width (sliced back to NUM_TASKS)
MAX_STEPS = 3
PATCH = 8            # patch size of the stand-in extractor

_VMEM = pl.BlockSpec(memory_space=pltpu.MemorySpace.VMEM)


# ------------------------------ Pallas kernel --------------------------------
def _ggnn_fused_kernel(p_ref, avg_ref, cpad_ref, d_ref,
                       w_ext_ref, b_ext_ref,
                       wi_ref, bi_ref,
                       wa_h_ref, wa_phi_ref, wa_d_ref, ba_ref,
                       w_gru_ref, b_gru_ref,
                       wo_ref, bo_ref,
                       out_ref):
    # --- stand-in extractor: per-patch affine -> ReLU -> mean (as an avg matmul) ---
    y = jnp.dot(p_ref[...], w_ext_ref[...],
                preferred_element_type=jnp.float32) + b_ext_ref[...]     # [B*Np, FEAT]
    y = jnp.maximum(y, 0.0)
    phi = jnp.dot(avg_ref[...], y, preferred_element_type=jnp.float32)   # [B, FEAT]
    phi_bf = phi.astype(jnp.bfloat16)

    # --- initializer: h0 = tanh([phi_o, c] @ Wi + bi)  (single fused bf16 dot) ---
    init_in = jnp.concatenate([phi_bf, cpad_ref[...]], axis=1)           # [B, FEAT+C_PAD]
    h0 = jnp.tanh(jnp.dot(init_in, wi_ref[...],
                          preferred_element_type=jnp.float32) + bi_ref[...])

    # --- aggregator loop-invariants, hoisted (phi@Wa_phi issued exactly once) ---
    agg_const = (jnp.dot(phi_bf, wa_phi_ref[...], preferred_element_type=jnp.float32)
                 + d_ref[...] * wa_d_ref[...]        # [B,1] * [1,X] == d @ Wa_d
                 + ba_ref[...])

    h = h0
    for _ in range(MAX_STEPS):
        # aggregator: x_t = tanh(h @ Wa_h + agg_const)
        x_t = jnp.tanh(jnp.dot(h, wa_h_ref[...],
                               preferred_element_type=jnp.float32) + agg_const)

        # propagator: torch.nn.GRUCell, single fused dot -> [r | z | i_n | h_n]
        g = jnp.dot(jnp.concatenate([x_t, h], axis=1), w_gru_ref[...],
                    preferred_element_type=jnp.float32) + b_gru_ref[...]  # [B, 4H]
        r = jax.nn.sigmoid(g[:, :H_DIM])
        z = jax.nn.sigmoid(g[:, H_DIM:2 * H_DIM])
        n = jnp.tanh(g[:, 2 * H_DIM:3 * H_DIM] + r * g[:, 3 * H_DIM:])
        h = (1.0 - z) * n + z * h

    # --- output head: lane-dense (B, 128) store; wrapper slices to NUM_TASKS ---
    out_ref[...] = (jnp.dot(jnp.concatenate([h0, h], axis=1), wo_ref[...],
                            preferred_element_type=jnp.float32) + bo_ref[...])


# ------------------------------- wrapper --------------------------------------
@jax.jit
def ggnn_forward(patches_flat, avg_mat, c_pad, d, kparams):
    B = avg_mat.shape[0]
    out = pl.pallas_call(
        _ggnn_fused_kernel,
        out_shape=jax.ShapeDtypeStruct((B, OUT_PAD), jnp.float32),
        in_specs=[_VMEM] * (4 + len(kparams)),
        out_specs=_VMEM,
    )(patches_flat, avg_mat, c_pad, d, *kparams)
    return out[:, :NUM_TASKS]


# ------------------------------ pure-JAX reference -----------------------------
def reference_forward(patches, c, d, ext_params, ggnn_params):
    """f32 reference with the original (unfused) math for correctness checking."""
    w_ext, b_ext = ext_params
    B, Np, Pd = patches.shape
    y = jnp.maximum(patches.reshape(B * Np, Pd) @ w_ext + b_ext, 0.0)
    phi_o = jnp.mean(y.reshape(B, Np, FEAT_DIM), axis=1)

    (wi_phi, wi_c, bi, wa_h, wa_phi, wa_d, ba,
     wih, whh, bih, bhh, wo_h0, wo_ht, bo) = ggnn_params
    h0 = jnp.tanh(phi_o @ wi_phi + c @ wi_c + bi)
    h = h0
    for _ in range(MAX_STEPS):
        x_t = jnp.tanh(h @ wa_h + phi_o @ wa_phi + d * wa_d + ba)
        gi = x_t @ wih + bih
        gh = h @ whh + bhh
        i_r, i_z, i_n = gi[:, :H_DIM], gi[:, H_DIM:2 * H_DIM], gi[:, 2 * H_DIM:]
        h_r, h_z, h_n = gh[:, :H_DIM], gh[:, H_DIM:2 * H_DIM], gh[:, 2 * H_DIM:]
        r = jax.nn.sigmoid(i_r + h_r)
        z = jax.nn.sigmoid(i_z + h_z)
        n = jnp.tanh(i_n + r * h_n)
        h = (1.0 - z) * n + z * h
    return h0 @ wo_h0 + h @ wo_ht + bo


# ------------------------------ param helpers --------------------------------
def _uniform(key, shape, fan_in):
    bound = 1.0 / jnp.sqrt(jnp.float32(fan_in))
    return jax.random.uniform(key, shape, jnp.float32, -bound, bound)


def init_params(key):
    ks = list(jax.random.split(key, 20))
    patch_dim = 3 * PATCH * PATCH
    # stand-in extractor
    w_ext = _uniform(ks[0], (patch_dim, FEAT_DIM), patch_dim)
    b_ext = _uniform(ks[1], (1, FEAT_DIM), patch_dim)
    # initializer:  [FEAT_DIM + CLASS_DIM] -> H_DIM
    fi = FEAT_DIM + CLASS_DIM
    wi_phi = _uniform(ks[2], (FEAT_DIM, H_DIM), fi)
    wi_c = _uniform(ks[3], (CLASS_DIM, H_DIM), fi)
    bi = _uniform(ks[4], (1, H_DIM), fi)
    # aggregator:  [H_DIM + FEAT_DIM + 1] -> X_DIM
    fa = H_DIM + FEAT_DIM + 1
    wa_h = _uniform(ks[5], (H_DIM, X_DIM), fa)
    wa_phi = _uniform(ks[6], (FEAT_DIM, X_DIM), fa)
    wa_d = _uniform(ks[7], (1, X_DIM), fa)
    ba = _uniform(ks[8], (1, X_DIM), fa)
    # GRUCell (torch layout weight_ih: [3H, X]; stored transposed for x @ W)
    wih = _uniform(ks[9], (X_DIM, 3 * H_DIM), H_DIM)
    whh = _uniform(ks[10], (H_DIM, 3 * H_DIM), H_DIM)
    bih = _uniform(ks[11], (1, 3 * H_DIM), H_DIM)
    bhh = _uniform(ks[12], (1, 3 * H_DIM), H_DIM)
    # output model:  [2 * H_DIM] -> NUM_TASKS
    fo = 2 * H_DIM
    wo_h0 = _uniform(ks[13], (H_DIM, NUM_TASKS), fo)
    wo_ht = _uniform(ks[14], (H_DIM, NUM_TASKS), fo)
    bo = _uniform(ks[15], (1, NUM_TASKS), fo)
    ggnn_params = (wi_phi, wi_c, bi, wa_h, wa_phi, wa_d, ba,
                   wih, whh, bih, bhh, wo_h0, wo_ht, bo)
    return (w_ext, b_ext), ggnn_params


def pack_kernel_params(ext_params, ggnn_params):
    """Fuse / pad / bf16-cast the torch-layout params into the kernel layout."""
    w_ext, b_ext = ext_params
    (wi_phi, wi_c, bi, wa_h, wa_phi, wa_d, ba,
     wih, whh, bih, bhh, wo_h0, wo_ht, bo) = ggnn_params

    # initializer: rows = [phi (2048) | c padded to 128]; zero rows for the pad.
    wi_c_pad = jnp.zeros((C_PAD, H_DIM), jnp.float32).at[:CLASS_DIM].set(wi_c)
    wi = jnp.concatenate([wi_phi, wi_c_pad], axis=0).astype(jnp.bfloat16)   # [2176,128]

    # GRU fused weight: rows = [x (128) | h (128)], cols = [r | z | i_n | h_n].
    wih_r, wih_z, wih_n = wih[:, :H_DIM], wih[:, H_DIM:2 * H_DIM], wih[:, 2 * H_DIM:]
    whh_r, whh_z, whh_n = whh[:, :H_DIM], whh[:, H_DIM:2 * H_DIM], whh[:, 2 * H_DIM:]
    zx = jnp.zeros((X_DIM, H_DIM), jnp.float32)
    zh = jnp.zeros((H_DIM, H_DIM), jnp.float32)
    w_gru = jnp.concatenate(
        [jnp.concatenate([wih_r, wih_z, wih_n, zx], axis=1),
         jnp.concatenate([whh_r, whh_z, zh, whh_n], axis=1)], axis=0)       # [256, 512]
    bih_r, bih_z, bih_n = bih[:, :H_DIM], bih[:, H_DIM:2 * H_DIM], bih[:, 2 * H_DIM:]
    bhh_r, bhh_z, bhh_n = bhh[:, :H_DIM], bhh[:, H_DIM:2 * H_DIM], bhh[:, 2 * H_DIM:]
    b_gru = jnp.concatenate([bih_r + bhh_r, bih_z + bhh_z, bih_n, bhh_n], axis=1)  # [1, 512]

    # output head: rows = [h0 | hT], cols lane-padded 14 -> 128.
    wo = jnp.concatenate([wo_h0, wo_ht], axis=0)                            # [256, 14]
    wo_pad = jnp.zeros((2 * H_DIM, OUT_PAD), jnp.float32).at[:, :NUM_TASKS].set(wo)
    bo_pad = jnp.zeros((1, OUT_PAD), jnp.float32).at[:, :NUM_TASKS].set(bo)

    return (w_ext.astype(jnp.bfloat16), b_ext,
            wi, bi,
            wa_h, wa_phi.astype(jnp.bfloat16), wa_d, ba,
            w_gru, b_gru,
            wo_pad, bo_pad)


def patchify_nchw(o):
    """[B,3,H,W] (NCHW) -> [B, num_patches, 3*P*P] row-major patches."""
    B, C, H, W = o.shape
    o = o.reshape(B, C, H // PATCH, PATCH, W // PATCH, PATCH)
    o = o.transpose(0, 2, 4, 1, 3, 5)
    return o.reshape(B, (H // PATCH) * (W // PATCH), C * PATCH * PATCH)


# --------------------------------- main ---------------------------------------
if __name__ == "__main__":
    key = jax.random.PRNGKey(0)
    k_o, k_c, k_d, k_p = jax.random.split(key, 4)

    B, H_IMG, W_IMG = 4, 32, 32
    o = jax.random.normal(k_o, (B, 3, H_IMG, W_IMG), jnp.float32)          # image crops
    cls_ids = jax.random.randint(k_c, (B,), 0, CLASS_DIM)
    c = jax.nn.one_hot(cls_ids, CLASS_DIM, dtype=jnp.float32)              # [B, class_dim]
    d = jax.random.uniform(k_d, (B, 1), jnp.float32)                       # detection score

    ext_params, ggnn_params = init_params(k_p)
    kparams = pack_kernel_params(ext_params, ggnn_params)

    # wrapper-side layout plumbing (flatten patches, averaging matrix, padded c)
    patches = patchify_nchw(o)                                             # [B, Np, 3*P*P]
    Np = patches.shape[1]
    patches_flat = patches.reshape(B * Np, -1).astype(jnp.bfloat16)        # [B*Np, Pd]
    avg_mat = jnp.repeat(jnp.eye(B, dtype=jnp.float32), Np, axis=1) / Np   # [B, B*Np]
    c_pad = jnp.zeros((B, C_PAD), jnp.float32).at[:, :CLASS_DIM].set(c).astype(jnp.bfloat16)

    # fused Pallas forward: extractor -> initializer -> [aggregator+GRU]*3 -> output
    logits = ggnn_forward(patches_flat, avg_mat, c_pad, d, kparams)
    logits = jax.block_until_ready(logits)

    # correctness check against a pure-JAX f32 reference of the original math
    ref = reference_forward(patches, c, d, ext_params, ggnn_params)
    assert logits.shape == (B, NUM_TASKS)
    assert bool(jnp.all(jnp.isfinite(logits)))
    assert bool(jnp.allclose(logits, ref, rtol=2e-2, atol=2e-2)), "mismatch vs reference"

    print("KERNEL_OK")
</pallas_src>

<mosaic_0001>
module attributes {stable_mosaic.version = 11 : i64} {
  func.func @_ggnn_fused_kernel(%arg0: memref<64x192xbf16, #tpu.memory_space<vmem>>, %arg1: memref<4x64xf32, #tpu.memory_space<vmem>>, %arg2: memref<4x128xbf16, #tpu.memory_space<vmem>>, %arg3: memref<4x1xf32, #tpu.memory_space<vmem>>, %arg4: memref<192x2048xbf16, #tpu.memory_space<vmem>>, %arg5: memref<1x2048xf32, #tpu.memory_space<vmem>>, %arg6: memref<2176x128xbf16, #tpu.memory_space<vmem>>, %arg7: memref<1x128xf32, #tpu.memory_space<vmem>>, %arg8: memref<128x128xf32, #tpu.memory_space<vmem>>, %arg9: memref<2048x128xbf16, #tpu.memory_space<vmem>>, %arg10: memref<1x128xf32, #tpu.memory_space<vmem>>, %arg11: memref<1x128xf32, #tpu.memory_space<vmem>>, %arg12: memref<256x512xf32, #tpu.memory_space<vmem>>, %arg13: memref<1x512xf32, #tpu.memory_space<vmem>>, %arg14: memref<256x128xf32, #tpu.memory_space<vmem>>, %arg15: memref<1x128xf32, #tpu.memory_space<vmem>>, %arg16: memref<4x128xf32, #tpu.memory_space<vmem>>) attributes {dimension_semantics = [], scalar_prefetch = 0 : i64, scratch_operands = 0 : i64, tpu.core_type = #tpu.core_type<tc>} {
    %c0 = arith.constant 0 : index
    %c0_0 = arith.constant 0 : index
    %0 = vector.load %arg0[%c0, %c0_0] : memref<64x192xbf16, #tpu.memory_space<vmem>>, vector<64x192xbf16>
    %c0_1 = arith.constant 0 : index
    %c0_2 = arith.constant 0 : index
    %1 = vector.load %arg4[%c0_1, %c0_2] : memref<192x2048xbf16, #tpu.memory_space<vmem>>, vector<192x2048xbf16>
    %cst = arith.constant dense<0.000000e+00> : vector<64x2048xf32>
    %2 = tpu.matmul %0, %1, %cst {dimension_numbers = #tpu.dot_dimension_numbers<[1], [0], [0], [1], [0, 0, 1, 1], [], []>} : vector<64x192xbf16>, vector<192x2048xbf16>, vector<64x2048xf32> -> vector<64x2048xf32>
    %c0_3 = arith.constant 0 : index
    %c0_4 = arith.constant 0 : index
    %3 = vector.load %arg5[%c0_3, %c0_4] : memref<1x2048xf32, #tpu.memory_space<vmem>>, vector<1x2048xf32>
    %4 = vector.broadcast %3 : vector<1x2048xf32> to vector<64x2048xf32>
    %5 = arith.addf %2, %4 : vector<64x2048xf32>
    %cst_5 = arith.constant 0.000000e+00 : f32
    %6 = vector.broadcast %cst_5 : f32 to vector<64x2048xf32>
    %7 = arith.maximumf %5, %6 : vector<64x2048xf32>
    %c0_6 = arith.constant 0 : index
    %c0_7 = arith.constant 0 : index
    %8 = vector.load %arg1[%c0_6, %c0_7] : memref<4x64xf32, #tpu.memory_space<vmem>>, vector<4x64xf32>
    %cst_8 = arith.constant dense<0.000000e+00> : vector<4x2048xf32>
    %9 = tpu.matmul %8, %7, %cst_8 {dimension_numbers = #tpu.dot_dimension_numbers<[1], [0], [0], [1], [0, 0, 1, 1], [], []>} : vector<4x64xf32>, vector<64x2048xf32>, vector<4x2048xf32> -> vector<4x2048xf32>
    %10 = arith.truncf %9 : vector<4x2048xf32> to vector<4x2048xbf16>
    %c0_9 = arith.constant 0 : index
    %c0_10 = arith.constant 0 : index
    %11 = vector.load %arg2[%c0_9, %c0_10] : memref<4x128xbf16, #tpu.memory_space<vmem>>, vector<4x128xbf16>
    %12 = tpu.concatenate %10, %11 in 1 : vector<4x2048xbf16>, vector<4x128xbf16> -> vector<4x2176xbf16>
    %c0_11 = arith.constant 0 : index
    %c0_12 = arith.constant 0 : index
    %13 = vector.load %arg6[%c0_11, %c0_12] : memref<2176x128xbf16, #tpu.memory_space<vmem>>, vector<2176x128xbf16>
    %cst_13 = arith.constant dense<0.000000e+00> : vector<4x128xf32>
    %14 = tpu.matmul %12, %13, %cst_13 {dimension_numbers = #tpu.dot_dimension_numbers<[1], [0], [0], [1], [0, 0, 1, 1], [], []>} : vector<4x2176xbf16>, vector<2176x128xbf16>, vector<4x128xf32> -> vector<4x128xf32>
    %c0_14 = arith.constant 0 : index
    %c0_15 = arith.constant 0 : index
    %15 = vector.load %arg7[%c0_14, %c0_15] : memref<1x128xf32, #tpu.memory_space<vmem>>, vector<1x128xf32>
    %16 = vector.broadcast %15 : vector<1x128xf32> to vector<4x128xf32>
    %17 = arith.addf %14, %16 : vector<4x128xf32>
    %18 = math.tanh %17 : vector<4x128xf32>
    %c0_16 = arith.constant 0 : index
    %c0_17 = arith.constant 0 : index
    %19 = vector.load %arg9[%c0_16, %c0_17] : memref<2048x128xbf16, #tpu.memory_space<vmem>>, vector<2048x128xbf16>
    %cst_18 = arith.constant dense<0.000000e+00> : vector<4x128xf32>
    %20 = tpu.matmul %10, %19, %cst_18 {dimension_numbers = #tpu.dot_dimension_numbers<[1], [0], [0], [1], [0, 0, 1, 1], [], []>} : vector<4x2048xbf16>, vector<2048x128xbf16>, vector<4x128xf32> -> vector<4x128xf32>
    %c0_19 = arith.constant 0 : index
    %c0_20 = arith.constant 0 : index
    %21 = vector.load %arg3[%c0_19, %c0_20] : memref<4x1xf32, #tpu.memory_space<vmem>>, vector<4x1xf32>
    %c0_21 = arith.constant 0 : index
    %c0_22 = arith.constant 0 : index
    %22 = vector.load %arg10[%c0_21, %c0_22] : memref<1x128xf32, #tpu.memory_space<vmem>>, vector<1x128xf32>
    %23 = vector.broadcast %21 : vector<4x1xf32> to vector<4x128xf32>
    %24 = vector.broadcast %22 : vector<1x128xf32> to vector<4x128xf32>
    %25 = arith.mulf %23, %24 : vector<4x128xf32>
    %26 = arith.addf %20, %25 : vector<4x128xf32>
    %c0_23 = arith.constant 0 : index
    %c0_24 = arith.constant 0 : index
    %27 = vector.load %arg11[%c0_23, %c0_24] : memref<1x128xf32, #tpu.memory_space<vmem>>, vector<1x128xf32>
    %28 = vector.broadcast %27 : vector<1x128xf32> to vector<4x128xf32>
    %29 = arith.addf %26, %28 : vector<4x128xf32>
    %c0_25 = arith.constant 0 : index
    %c0_26 = arith.constant 0 : index
    %30 = vector.load %arg8[%c0_25, %c0_26] : memref<128x128xf32, #tpu.memory_space<vmem>>, vector<128x128xf32>
    %cst_27 = arith.constant dense<0.000000e+00> : vector<4x128xf32>
    %31 = tpu.matmul %18, %30, %cst_27 {dimension_numbers = #tpu.dot_dimension_numbers<[1], [0], [0], [1], [0, 0, 1, 1], [], []>} : vector<4x128xf32>, vector<128x128xf32>, vector<4x128xf32> -> vector<4x128xf32>
    %32 = arith.addf %31, %29 : vector<4x128xf32>
    %33 = math.tanh %32 : vector<4x128xf32>
    %34 = tpu.concatenate %33, %18 in 1 : vector<4x128xf32>, vector<4x128xf32> -> vector<4x256xf32>
    %c0_28 = arith.constant 0 : index
    %c0_29 = arith.constant 0 : index
    %35 = vector.load %arg12[%c0_28, %c0_29] : memref<256x512xf32, #tpu.memory_space<vmem>>, vector<256x512xf32>
    %cst_30 = arith.constant dense<0.000000e+00> : vector<4x512xf32>
    %36 = tpu.matmul %34, %35, %cst_30 {dimension_numbers = #tpu.dot_dimension_numbers<[1], [0], [0], [1], [0, 0, 1, 1], [], []>} : vector<4x256xf32>, vector<256x512xf32>, vector<4x512xf32> -> vector<4x512xf32>
    %c0_31 = arith.constant 0 : index
    %c0_32 = arith.constant 0 : index
    %37 = vector.load %arg13[%c0_31, %c0_32] : memref<1x512xf32, #tpu.memory_space<vmem>>, vector<1x512xf32>
    %38 = vector.broadcast %37 : vector<1x512xf32> to vector<4x512xf32>
    %39 = arith.addf %36, %38 : vector<4x512xf32>
    %40 = vector.extract_strided_slice %39 {offsets = [0, 0], sizes = [4, 128], strides = [1, 1]} : vector<4x512xf32> to vector<4x128xf32>
    %41 = arith.negf %40 : vector<4x128xf32>
    %42 = math.exp %41 : vector<4x128xf32>
    %cst_33 = arith.constant 1.000000e+00 : f32
    %43 = vector.broadcast %cst_33 : f32 to vector<4x128xf32>
    %44 = arith.addf %43, %42 : vector<4x128xf32>
    %45 = arith.divf %43, %44 : vector<4x128xf32>
    %46 = vector.extract_strided_slice %39 {offsets = [0, 128], sizes = [4, 128], strides = [1, 1]} : vector<4x512xf32> to vector<4x128xf32>
    %47 = arith.negf %46 : vector<4x128xf32>
    %48 = math.exp %47 : vector<4x128xf32>
    %cst_34 = arith.constant 1.000000e+00 : f32
    %49 = vector.broadcast %cst_34 : f32 to vector<4x128xf32>
    %50 = arith.addf %49, %48 : vector<4x128xf32>
    %51 = arith.divf %49, %50 : vector<4x128xf32>
    %52 = vector.extract_strided_slice %39 {offsets = [0, 256], sizes = [4, 128], strides = [1, 1]} : vector<4x512xf32> to vector<4x128xf32>
    %53 = vector.extract_strided_slice %39 {offsets = [0, 384], sizes = [4, 128], strides = [1, 1]} : vector<4x512xf32> to vector<4x128xf32>
    %54 = arith.mulf %45, %53 : vector<4x128xf32>
    %55 = arith.addf %52, %54 : vector<4x128xf32>
    %56 = math.tanh %55 : vector<4x128xf32>
    %cst_35 = arith.constant 1.000000e+00 : f32
    %57 = vector.broadcast %cst_35 : f32 to vector<4x128xf32>
    %58 = arith.subf %57, %51 : vector<4x128xf32>
    %59 = arith.mulf %58, %56 : vector<4x128xf32>
    %60 = arith.mulf %51, %18 : vector<4x128xf32>
    %61 = arith.addf %59, %60 : vector<4x128xf32>
    %c0_36 = arith.constant 0 : index
    %c0_37 = arith.constant 0 : index
    %62 = vector.load %arg8[%c0_36, %c0_37] : memref<128x128xf32, #tpu.memory_space<vmem>>, vector<128x128xf32>
    %cst_38 = arith.constant dense<0.000000e+00> : vector<4x128xf32>
    %63 = tpu.matmul %61, %62, %cst_38 {dimension_numbers = #tpu.dot_dimension_numbers<[1], [0], [0], [1], [0, 0, 1, 1], [], []>} : vector<4x128xf32>, vector<128x128xf32>, vector<4x128xf32> -> vector<4x128xf32>
    %64 = arith.addf %63, %29 : vector<4x128xf32>
    %65 = math.tanh %64 : vector<4x128xf32>
    %66 = tpu.concatenate %65, %61 in 1 : vector<4x128xf32>, vector<4x128xf32> -> vector<4x256xf32>
    %c0_39 = arith.constant 0 : index
    %c0_40 = arith.constant 0 : index
    %67 = vector.load %arg12[%c0_39, %c0_40] : memref<256x512xf32, #tpu.memory_space<vmem>>, vector<256x512xf32>
    %cst_41 = arith.constant dense<0.000000e+00> : vector<4x512xf32>
    %68 = tpu.matmul %66, %67, %cst_41 {dimension_numbers = #tpu.dot_dimension_numbers<[1], [0], [0], [1], [0, 0, 1, 1], [], []>} : vector<4x256xf32>, vector<256x512xf32>, vector<4x512xf32> -> vector<4x512xf32>
    %c0_42 = arith.constant 0 : index
    %c0_43 = arith.constant 0 : index
    %69 = vector.load %arg13[%c0_42, %c0_43] : memref<1x512xf32, #tpu.memory_space<vmem>>, vector<1x512xf32>
    %70 = vector.broadcast %69 : vector<1x512xf32> to vector<4x512xf32>
    %71 = arith.addf %68, %70 : vector<4x512xf32>
    %72 = vector.extract_strided_slice %71 {offsets = [0, 0], sizes = [4, 128], strides = [1, 1]} : vector<4x512xf32> to vector<4x128xf32>
    %73 = arith.negf %72 : vector<4x128xf32>
    %74 = math.exp %73 : vector<4x128xf32>
    %cst_44 = arith.constant 1.000000e+00 : f32
    %75 = vector.broadcast %cst_44 : f32 to vector<4x128xf32>
    %76 = arith.addf %75, %74 : vector<4x128xf32>
    %77 = arith.divf %75, %76 : vector<4x128xf32>
    %78 = vector.extract_strided_slice %71 {offsets = [0, 128], sizes = [4, 128], strides = [1, 1]} : vector<4x512xf32> to vector<4x128xf32>
    %79 = arith.negf %78 : vector<4x128xf32>
    %80 = math.exp %79 : vector<4x128xf32>
    %cst_45 = arith.constant 1.000000e+00 : f32
    %81 = vector.broadcast %cst_45 : f32 to vector<4x128xf32>
    %82 = arith.addf %81, %80 : vector<4x128xf32>
    %83 = arith.divf %81, %82 : vector<4x128xf32>
    %84 = vector.extract_strided_slice %71 {offsets = [0, 256], sizes = [4, 128], strides = [1, 1]} : vector<4x512xf32> to vector<4x128xf32>
    %85 = vector.extract_strided_slice %71 {offsets = [0, 384], sizes = [4, 128], strides = [1, 1]} : vector<4x512xf32> to vector<4x128xf32>
    %86 = arith.mulf %77, %85 : vector<4x128xf32>
    %87 = arith.addf %84, %86 : vector<4x128xf32>
    %88 = math.tanh %87 : vector<4x128xf32>
    %cst_46 = arith.constant 1.000000e+00 : f32
    %89 = vector.broadcast %cst_46 : f32 to vector<4x128xf32>
    %90 = arith.subf %89, %83 : vector<4x128xf32>
    %91 = arith.mulf %90, %88 : vector<4x128xf32>
    %92 = arith.mulf %83, %61 : vector<4x128xf32>
    %93 = arith.addf %91, %92 : vector<4x128xf32>
    %c0_47 = arith.constant 0 : index
    %c0_48 = arith.constant 0 : index
    %94 = vector.load %arg8[%c0_47, %c0_48] : memref<128x128xf32, #tpu.memory_space<vmem>>, vector<128x128xf32>
    %cst_49 = arith.constant dense<0.000000e+00> : vector<4x128xf32>
    %95 = tpu.matmul %93, %94, %cst_49 {dimension_numbers = #tpu.dot_dimension_numbers<[1], [0], [0], [1], [0, 0, 1, 1], [], []>} : vector<4x128xf32>, vector<128x128xf32>, vector<4x128xf32> -> vector<4x128xf32>
    %96 = arith.addf %95, %29 : vector<4x128xf32>
    %97 = math.tanh %96 : vector<4x128xf32>
    %98 = tpu.concatenate %97, %93 in 1 : vector<4x128xf32>, vector<4x128xf32> -> vector<4x256xf32>
    %c0_50 = arith.constant 0 : index
    %c0_51 = arith.constant 0 : index
    %99 = vector.load %arg12[%c0_50, %c0_51] : memref<256x512xf32, #tpu.memory_space<vmem>>, vector<256x512xf32>
    %cst_52 = arith.constant dense<0.000000e+00> : vector<4x512xf32>
    %100 = tpu.matmul %98, %99, %cst_52 {dimension_numbers = #tpu.dot_dimension_numbers<[1], [0], [0], [1], [0, 0, 1, 1], [], []>} : vector<4x256xf32>, vector<256x512xf32>, vector<4x512xf32> -> vector<4x512xf32>
    %c0_53 = arith.constant 0 : index
    %c0_54 = arith.constant 0 : index
    %101 = vector.load %arg13[%c0_53, %c0_54] : memref<1x512xf32, #tpu.memory_space<vmem>>, vector<1x512xf32>
    %102 = vector.broadcast %101 : vector<1x512xf32> to vector<4x512xf32>
    %103 = arith.addf %100, %102 : vector<4x512xf32>
    %104 = vector.extract_strided_slice %103 {offsets = [0, 0], sizes = [4, 128], strides = [1, 1]} : vector<4x512xf32> to vector<4x128xf32>
    %105 = arith.negf %104 : vector<4x128xf32>
    %106 = math.exp %105 : vector<4x128xf32>
    %cst_55 = arith.constant 1.000000e+00 : f32
    %107 = vector.broadcast %cst_55 : f32 to vector<4x128xf32>
    %108 = arith.addf %107, %106 : vector<4x128xf32>
    %109 = arith.divf %107, %108 : vector<4x128xf32>
    %110 = vector.extract_strided_slice %103 {offsets = [0, 128], sizes = [4, 128], strides = [1, 1]} : vector<4x512xf32> to vector<4x128xf32>
    %111 = arith.negf %110 : vector<4x128xf32>
    %112 = math.exp %111 : vector<4x128xf32>
    %cst_56 = arith.constant 1.000000e+00 : f32
    %113 = vector.broadcast %cst_56 : f32 to vector<4x128xf32>
    %114 = arith.addf %113, %112 : vector<4x128xf32>
    %115 = arith.divf %113, %114 : vector<4x128xf32>
    %116 = vector.extract_strided_slice %103 {offsets = [0, 256], sizes = [4, 128], strides = [1, 1]} : vector<4x512xf32> to vector<4x128xf32>
    %117 = vector.extract_strided_slice %103 {offsets = [0, 384], sizes = [4, 128], strides = [1, 1]} : vector<4x512xf32> to vector<4x128xf32>
    %118 = arith.mulf %109, %117 : vector<4x128xf32>
    %119 = arith.addf %116, %118 : vector<4x128xf32>
    %120 = math.tanh %119 : vector<4x128xf32>
    %cst_57 = arith.constant 1.000000e+00 : f32
    %121 = vector.broadcast %cst_57 : f32 to vector<4x128xf32>
    %122 = arith.subf %121, %115 : vector<4x128xf32>
    %123 = arith.mulf %122, %120 : vector<4x128xf32>
    %124 = arith.mulf %115, %93 : vector<4x128xf32>
    %125 = arith.addf %123, %124 : vector<4x128xf32>
    %126 = tpu.concatenate %18, %125 in 1 : vector<4x128xf32>, vector<4x128xf32> -> vector<4x256xf32>
    %c0_58 = arith.constant 0 : index
    %c0_59 = arith.constant 0 : index
    %127 = vector.load %arg14[%c0_58, %c0_59] : memref<256x128xf32, #tpu.memory_space<vmem>>, vector<256x128xf32>
    %cst_60 = arith.constant dense<0.000000e+00> : vector<4x128xf32>
    %128 = tpu.matmul %126, %127, %cst_60 {dimension_numbers = #tpu.dot_dimension_numbers<[1], [0], [0], [1], [0, 0, 1, 1], [], []>} : vector<4x256xf32>, vector<256x128xf32>, vector<4x128xf32> -> vector<4x128xf32>
    %c0_61 = arith.constant 0 : index
    %c0_62 = arith.constant 0 : index
    %129 = vector.load %arg15[%c0_61, %c0_62] : memref<1x128xf32, #tpu.memory_space<vmem>>, vector<1x128xf32>
    %130 = vector.broadcast %129 : vector<1x128xf32> to vector<4x128xf32>
    %131 = arith.addf %128, %130 : vector<4x128xf32>
    %c0_63 = arith.constant 0 : index
    %c0_64 = arith.constant 0 : index
    %132 = vector.load %arg16[%c0_63, %c0_64] : memref<4x128xf32, #tpu.memory_space<vmem>>, vector<4x128xf32>
    tpu.vector_store %arg16[%c0_63, %c0_64], %131 {strides = array<i32>} : memref<4x128xf32, #tpu.memory_space<vmem>>, vector<4x128xf32>,
    return
  }
}

</mosaic_0001>

<llo_original>
// kernel: ggnn_forward.1
$region0: #{ggnn_forward.1}
  #allocation0 [shape = 'u32[]', space=smem, size = 0x4, offset = 0x4, fixed_abs, tag = 'smem constant byte address 0x4 - core index']
  #allocation1 [shape = 'u32[144,128]{1,0:T(1,128)}', space=vmem, size = 0x12000, scoped, tag = 'internal scratch']
  %s0 = inlined_call_operand.hbm [shape: bf16[64,192], index: 0, kind: input, shape index: {}]
  %s1 = inlined_call_operand.vmem [shape: f32[4,64], index: 1, kind: input, shape index: {}]
  %s2 = inlined_call_operand.vmem [shape: bf16[4,128], index: 2, kind: input, shape index: {}]
  %s3 = inlined_call_operand.vmem [shape: f32[4,1], index: 3, kind: input, shape index: {}]
  %s4 = inlined_call_operand.hbm [shape: bf16[192,2048], index: 4, kind: input, shape index: {}]
  %s5 = inlined_call_operand.vmem [shape: f32[1,2048], index: 5, kind: input, shape index: {}]
  %s6 = inlined_call_operand.hbm [shape: bf16[2176,128], index: 6, kind: input, shape index: {}]
  %s7 = inlined_call_operand.vmem [shape: f32[1,128], index: 7, kind: input, shape index: {}]
  %s8 = inlined_call_operand.hbm [shape: f32[128,128], index: 8, kind: input, shape index: {}]
  %s9 = inlined_call_operand.hbm [shape: bf16[2048,128], index: 9, kind: input, shape index: {}]
  %s10 = inlined_call_operand.vmem [shape: f32[1,128], index: 10, kind: input, shape index: {}]
  %s11 = inlined_call_operand.vmem [shape: f32[1,128], index: 11, kind: input, shape index: {}]
  %s12 = inlined_call_operand.hbm [shape: f32[256,512], index: 12, kind: input, shape index: {}]
  %s13 = inlined_call_operand.vmem [shape: f32[1,512], index: 13, kind: input, shape index: {}]
  %s14 = inlined_call_operand.hbm [shape: f32[256,128], index: 14, kind: input, shape index: {}]
  %s15 = inlined_call_operand.vmem [shape: f32[1,128], index: 15, kind: input, shape index: {}]
  %s16 = inlined_call_operand.hbm [shape: f32[4,128], index: 16, kind: output, shape index: {}]
  %s17 = sld [smem:[#allocation0]]
  $region102: #{ggnn_forward.1} parent=0
    _
  %s19 = ssub.s32 1, %s17
  %s20 = scalar_select 0, %s19, %s17
  $region1: #{ggnn_forward.1} parent=0
    #allocation2 [shape = 'u8[32768]{0}', space=vmem, size = 0x8000, scoped, tag = 'input window, operand 0, single buffered']
    #allocation3 [shape = 's32[1]{0}', space=sflag, size = 0x4, scoped, tag = 'scoped memory for ggnn_forward.1']
    #allocation4 [shape = 's32[1]{0}', space=sflag, size = 0x4, scoped, tag = 'scoped memory for ggnn_forward.1']
    #allocation5 [shape = 'u8[786432]{0}', space=vmem, size = 0xc0000, scoped, tag = 'input window, operand 4, single buffered']
    #allocation6 [shape = 's32[1]{0}', space=sflag, size = 0x4, scoped, tag = 'scoped memory for ggnn_forward.1']
    #allocation7 [shape = 'u8[557056]{0}', space=vmem, size = 0x88000, scoped, tag = 'input window, operand 6, single buffered']
    #allocation8 [shape = 'u8[65536]{0}', space=vmem, size = 0x10000, scoped, tag = 'input window, operand 8, single buffered']
    #allocation9 [shape = 's32[1]{0}', space=sflag, size = 0x4, scoped, tag = 'scoped memory for ggnn_forward.1']
    #allocation10 [shape = 'u8[524288]{0}', space=vmem, size = 0x80000, scoped, tag = 'input window, operand 9, single buffered']
    #allocation11 [shape = 'u8[524288]{0}', space=vmem, size = 0x80000, scoped, tag = 'input window, operand 12, single buffered']
    #allocation12 [shape = 's32[1]{0}', space=sflag, size = 0x4, scoped, tag = 'scoped memory for ggnn_forward.1']
    #allocation13 [shape = 'u8[131072]{0}', space=vmem, size = 0x20000, scoped, tag = 'input window, operand 14, single buffered']
    #allocation14 [shape = 'u8[2048]{0}', space=vmem, size = 0x800, scoped, tag = 'output window, operand 0, single buffered']
    %21 = vsyncpa [#allocation3], 0
    %22 = vsyncpa [#allocation6], 0
    %23 = vsyncpa [#allocation9], 0
    %24 = vsyncpa [#allocation12], 0
    %25 = vsyncpa [#allocation4], 0
    // Predicated region
    $region2: #{ggnn_forward.1} parent=1 // pred_check
      _
    $region3: #{ggnn_forward.1} parent=1 // pred_check_branch
      %27 = sbr.rel (0) target = $region5
    $region4: #{ggnn_forward.1} parent=1 // pred_region
      %s29 = ssub.s32 1024, 1024
      %30 = vsyncadd [#allocation3], %s29
      %s31 = sshll.u32 [#allocation2], 4
      %s32 = int_to_ptr.vmem [resolvable:$true] %s31
      %37 = dma.hbm_to_vmem [thread:$0]  %s0, 1024, %s32, [#allocation3], 128, 128, 8
    $region5: #{ggnn_forward.1} parent=1 // pred_fallthru
      _
    // Predicated region
    $region6: #{ggnn_forward.1} parent=1 // pred_check
      _
    $region7: #{ggnn_forward.1} parent=1 // pred_check_branch
      %39 = sbr.rel (0) target = $region9
    $region8: #{ggnn_forward.1} parent=1 // pred_region
      _
    $region9: #{ggnn_forward.1} parent=1 // pred_fallthru
      _
    // Predicated region
    $region10: #{ggnn_forward.1} parent=1 // pred_check
      _
    $region11: #{ggnn_forward.1} parent=1 // pred_check_branch
      %41 = sbr.rel (0) target = $region13
    $region12: #{ggnn_forward.1} parent=1 // pred_region
      _
    $region13: #{ggnn_forward.1} parent=1 // pred_fallthru
      _
    // Predicated region
    $region14: #{ggnn_forward.1} parent=1 // pred_check
      _
    $region15: #{ggnn_forward.1} parent=1 // pred_check_branch
      %43 = sbr.rel (0) target = $region17
    $region16: #{ggnn_forward.1} parent=1 // pred_region
      _
    $region17: #{ggnn_forward.1} parent=1 // pred_fallthru
      _
    // Predicated region
    $region18: #{ggnn_forward.1} parent=1 // pred_check
      _
    $region19: #{ggnn_forward.1} parent=1 // pred_check_branch
      %45 = sbr.rel (0) target = $region21
    $region20: #{ggnn_forward.1} parent=1 // pred_region
      %s47 = ssub.s32 24576, 24576
      %48 = vsyncadd [#allocation6], %s47
      %s49 = sshll.u32 [#allocation5], 4
      %s50 = int_to_ptr.vmem [resolvable:$true] %s49
      %55 = dma.hbm_to_vmem [thread:$0]  %s4, 24576, %s50, [#allocation6], 1024, 1024, 64
    $region21: #{ggnn_forward.1} parent=1 // pred_fallthru
      _
    // Predicated region
    $region22: #{ggnn_forward.1} parent=1 // pred_check
      _
    $region23: #{ggnn_forward.1} parent=1 // pred_check_branch
      %57 = sbr.rel (0) target = $region25
    $region24: #{ggnn_forward.1} parent=1 // pred_region
      _
    $region25: #{ggnn_forward.1} parent=1 // pred_fallthru
      _
    // Predicated region
    $region26: #{ggnn_forward.1} parent=1 // pred_check
      _
    $region27: #{ggnn_forward.1} parent=1 // pred_check_branch
      %59 = sbr.rel (0) target = $region29
    $region28: #{ggnn_forward.1} parent=1 // pred_region
      %s61 = ssub.s32 17408, 17408
      %62 = vsyncadd [#allocation6], %s61
      %s63 = sshll.u32 [#allocation7], 4
      %s64 = int_to_ptr.vmem [resolvable:$true] %s63
      %69 = dma.hbm_to_vmem [thread:$0]  %s6, 17408, %s64, [#allocation6], 64, 64, 4
    $region29: #{ggnn_forward.1} parent=1 // pred_fallthru
      _
    // Predicated region
    $region30: #{ggnn_forward.1} parent=1 // pred_check
      _
    $region31: #{ggnn_forward.1} parent=1 // pred_check_branch
      %71 = sbr.rel (0) target = $region33
    $region32: #{ggnn_forward.1} parent=1 // pred_region
      _
    $region33: #{ggnn_forward.1} parent=1 // pred_fallthru
      _
    // Predicated region
    $region34: #{ggnn_forward.1} parent=1 // pred_check
      _
    $region35: #{ggnn_forward.1} parent=1 // pred_check_branch
      %73 = sbr.rel (0) target = $region37
    $region36: #{ggnn_forward.1} parent=1 // pred_region
      %s75 = ssub.s32 2048, 2048
      %76 = vsyncadd [#allocation9], %s75
      %s77 = sshll.u32 [#allocation8], 4
      %s78 = int_to_ptr.vmem [resolvable:$true] %s77
      %83 = dma.hbm_to_vmem [thread:$0]  %s8, 2048, %s78, [#allocation9], 128, 128, 8
    $region37: #{ggnn_forward.1} parent=1 // pred_fallthru
      _
    // Predicated region
    $region38: #{ggnn_forward.1} parent=1 // pred_check
      _
    $region39: #{ggnn_forward.1} parent=1 // pred_check_branch
      %85 = sbr.rel (0) target = $region41
    $region40: #{ggnn_forward.1} parent=1 // pred_region
      %s87 = ssub.s32 16384, 16384
      %88 = vsyncadd [#allocation9], %s87
      %s89 = sshll.u32 [#allocation10], 4
      %s90 = int_to_ptr.vmem [resolvable:$true] %s89
      %95 = dma.hbm_to_vmem [thread:$0]  %s9, 16384, %s90, [#allocation9], 64, 64, 4
    $region41: #{ggnn_forward.1} parent=1 // pred_fallthru
      _
    // Predicated region
    $region42: #{ggnn_forward.1} parent=1 // pred_check
      _
    $region43: #{ggnn_forward.1} parent=1 // pred_check_branch
      %97 = sbr.rel (0) target = $region45
    $region44: #{ggnn_forward.1} parent=1 // pred_region
      _
    $region45: #{ggnn_forward.1} parent=1 // pred_fallthru
      _
    // Predicated region
    $region46: #{ggnn_forward.1} parent=1 // pred_check
      _
    $region47: #{ggnn_forward.1} parent=1 // pred_check_branch
      %99 = sbr.rel (0) target = $region49
    $region48: #{ggnn_forward.1} parent=1 // pred_region
      _
    $region49: #{ggnn_forward.1} parent=1 // pred_fallthru
      _
    // Predicated region
    $region50: #{ggnn_forward.1} parent=1 // pred_check
      _
    $region51: #{ggnn_forward.1} parent=1 // pred_check_branch
      %101 = sbr.rel (0) target = $region53
    $region52: #{ggnn_forward.1} parent=1 // pred_region
      %s103 = ssub.s32 16384, 16384
      %104 = vsyncadd [#allocation12], %s103
      %s105 = sshll.u32 [#allocation11], 4
      %s106 = int_to_ptr.vmem [resolvable:$true] %s105
      %111 = dma.hbm_to_vmem [thread:$0]  %s12, 16384, %s106, [#allocation12], 512, 512, 32
    $region53: #{ggnn_forward.1} parent=1 // pred_fallthru
      _
    // Predicated region
    $region54: #{ggnn_forward.1} parent=1 // pred_check
      _
    $region55: #{ggnn_forward.1} parent=1 // pred_check_branch
      %113 = sbr.rel (0) target = $region57
    $region56: #{ggnn_forward.1} parent=1 // pred_region
      _
    $region57: #{ggnn_forward.1} parent=1 // pred_fallthru
      _
    // Predicated region
    $region58: #{ggnn_forward.1} parent=1 // pred_check
      _
    $region59: #{ggnn_forward.1} parent=1 // pred_check_branch
      %115 = sbr.rel (0) target = $region61
    $region60: #{ggnn_forward.1} parent=1 // pred_region
      %s117 = ssub.s32 4096, 4096
      %118 = vsyncadd [#allocation12], %s117
      %s119 = sshll.u32 [#allocation13], 4
      %s120 = int_to_ptr.vmem [resolvable:$true] %s119
      %125 = dma.hbm_to_vmem [thread:$0]  %s14, 4096, %s120, [#allocation12], 128, 128, 8
    $region61: #{ggnn_forward.1} parent=1 // pred_fallthru
      _
    // Predicated region
    $region62: #{ggnn_forward.1} parent=1 // pred_check
      _
    $region63: #{ggnn_forward.1} parent=1 // pred_check_branch
      %127 = sbr.rel (0) target = $region65
    $region64: #{ggnn_forward.1} parent=1 // pred_region
      _
    $region65: #{ggnn_forward.1} parent=1 // pred_fallthru
      _
    // Predicated region
    $region66: #{ggnn_forward.1} parent=1 // pred_check
      _
    $region67: #{ggnn_forward.1} parent=1 // pred_check_branch
      %129 = sbr.rel (0) target = $region69
    $region68: #{ggnn_forward.1} parent=1 // pred_region
      %130 = dma.done [#allocation3], 1024
    $region69: #{ggnn_forward.1} parent=1 // pred_fallthru
      _
    // Predicated region
    $region70: #{ggnn_forward.1} parent=1 // pred_check
      _
    $region71: #{ggnn_forward.1} parent=1 // pred_check_branch
      %132 = sbr.rel (0) target = $region73
    $region72: #{ggnn_forward.1} parent=1 // pred_region
      %133 = dma.done [#allocation6], 24576
    $region73: #{ggnn_forward.1} parent=1 // pred_fallthru
      _
    // Predicated region
    $region74: #{ggnn_forward.1} parent=1 // pred_check
      _
    $region75: #{ggnn_forward.1} parent=1 // pred_check_branch
      %135 = sbr.rel (0) target = $region77
    $region76: #{ggnn_forward.1} parent=1 // pred_region
      %136 = dma.done [#allocation6], 17408
    $region77: #{ggnn_forward.1} parent=1 // pred_fallthru
      _
    // Predicated region
    $region78: #{ggnn_forward.1} parent=1 // pred_check
      _
    $region79: #{ggnn_forward.1} parent=1 // pred_check_branch
      %138 = sbr.rel (0) target = $region81
    $region80: #{ggnn_forward.1} parent=1 // pred_region
      %139 = dma.done [#allocation9], 2048
    $region81: #{ggnn_forward.1} parent=1 // pred_fallthru
      _
    // Predicated region
    $region82: #{ggnn_forward.1} parent=1 // pred_check
      _
    $region83: #{ggnn_forward.1} parent=1 // pred_check_branch
      %141 = sbr.rel (0) target = $region85
    $region84: #{ggnn_forward.1} parent=1 // pred_region
      %142 = dma.done [#allocation9], 16384
    $region85: #{ggnn_forward.1} parent=1 // pred_fallthru
      _
    // Predicated region
    $region86: #{ggnn_forward.1} parent=1 // pred_check
      _
    $region87: #{ggnn_forward.1} parent=1 // pred_check_branch
      %144 = sbr.rel (0) target = $region89
    $region88: #{ggnn_forward.1} parent=1 // pred_region
      %145 = dma.done [#allocation12], 16384
    $region89: #{ggnn_forward.1} parent=1 // pred_fallthru
      _
    // Predicated region
    $region90: #{ggnn_forward.1} parent=1 // pred_check
      _
    $region91: #{ggnn_forward.1} parent=1 // pred_check_branch
      %147 = sbr.rel (0) target = $region93
    $region92: #{ggnn_forward.1} parent=1 // pred_region
      %148 = dma.done [#allocation12], 4096
    $region93: #{ggnn_forward.1} parent=1 // pred_fallthru
      _
    %v150 = vld [vmem:[#allocation2] sm:$0xff]
    %v151 = vld [vmem:[#allocation2 + $0x8] sm:$0xff]
    %v152 = vld [vmem:[#allocation2 + $0x10] sm:$0xff]
    %v153 = vld [vmem:[#allocation2 + $0x18] sm:$0xff]
    %v154 = vld [vmem:[#allocation2 + $0x20] sm:$0xff]
    %v155 = vld [vmem:[#allocation2 + $0x28] sm:$0xff]
    %v156 = vld [vmem:[#allocation2 + $0x30] sm:$0xff]
    %v157 = vld [vmem:[#allocation2 + $0x38] sm:$0xff]
    %v158 = vld [vmem:[#allocation5] sm:$0xff]
    %v159 = vld [vmem:[#allocation5 + $0x8] sm:$0xff]
    %v160 = vld [vmem:[#allocation5 + $0x10] sm:$0xff]
    %v161 = vld [vmem:[#allocation5 + $0x18] sm:$0xff]
    %v162 = vld [vmem:[#allocation5 + $0x20] sm:$0xff]
    %v163 = vld [vmem:[#allocation5 + $0x28] sm:$0xff]
    %v164 = vld [vmem:[#allocation5 + $0x30] sm:$0xff]
    %v165 = vld [vmem:[#allocation5 + $0x38] sm:$0xff]
    %v166 = vld [vmem:[#allocation5 + $0x40] sm:$0xff]
    %v167 = vld [vmem:[#allocation5 + $0x48] sm:$0xff]
    %v168 = vld [vmem:[#allocation5 + $0x50] sm:$0xff]
    %v169 = vld [vmem:[#allocation5 + $0x58] sm:$0xff]
    %v170 = vld [vmem:[#allocation5 + $0x60] sm:$0xff]
    %v171 = vld [vmem:[#allocation5 + $0x68] sm:$0xff]
    %v172 = vld [vmem:[#allocation5 + $0x70] sm:$0xff]
    %v173 = vld [vmem:[#allocation5 + $0x78] sm:$0xff]
    %v174 = vld [vmem:[#allocation5 + $0x80] sm:$0xff]
    %v175 = vld [vmem:[#allocation5 + $0x88] sm:$0xff]
    %v176 = vld [vmem:[#allocation5 + $0x90] sm:$0xff]
    %v177 = vld [vmem:[#allocation5 + $0x98] sm:$0xff]
    %v178 = vld [vmem:[#allocation5 + $0xa0] sm:$0xff]
    %v179 = vld [vmem:[#allocation5 + $0xa8] sm:$0xff]
    %v180 = vld [vmem:[#allocation5 + $0xb0] sm:$0xff]
    %v181 = vld [vmem:[#allocation5 + $0xb8] sm:$0xff]
    %v182 = vld [vmem:[#allocation5 + $0xc0] sm:$0xff]
    %v183 = vld [vmem:[#allocation5 + $0xc8] sm:$0xff]
    %v184 = vld [vmem:[#allocation5 + $0xd0] sm:$0xff]
    %v185 = vld [vmem:[#allocation5 + $0xd8] sm:$0xff]
    %v186 = vld [vmem:[#allocation5 + $0xe0] sm:$0xff]
    %v187 = vld [vmem:[#allocation5 + $0xe8] sm:$0xff]
    %v188 = vld [vmem:[#allocation5 + $0xf0] sm:$0xff]
    %v189 = vld [vmem:[#allocation5 + $0xf8] sm:$0xff]
    %v190 = vld [vmem:[#allocation5 + $0x100] sm:$0xff]
    %v191 = vld [vmem:[#allocation5 + $0x108] sm:$0xff]
    %v192 = vld [vmem:[#allocation5 + $0x110] sm:$0xff]
    %v193 = vld [vmem:[#allocation5 + $0x118] sm:$0xff]
    %v194 = vld [vmem:[#allocation5 + $0x120] sm:$0xff]
    %v195 = vld [vmem:[#allocation5 + $0x128] sm:$0xff]
    %v196 = vld [vmem:[#allocation5 + $0x130] sm:$0xff]
    %v197 = vld [vmem:[#allocation5 + $0x138] sm:$0xff]
    %v198 = vld [vmem:[#allocation5 + $0x140] sm:$0xff]
    %v199 = vld [vmem:[#allocation5 + $0x148] sm:$0xff]
    %v200 = vld [vmem:[#allocation5 + $0x150] sm:$0xff]
    %v201 = vld [vmem:[#allocation5 + $0x158] sm:$0xff]
    %v202 = vld [vmem:[#allocation5 + $0x160] sm:$0xff]
    %v203 = vld [vmem:[#allocation5 + $0x168] sm:$0xff]
    %v204 = vld [vmem:[#allocation5 + $0x170] sm:$0xff]
    %v205 = vld [vmem:[#allocation5 + $0x178] sm:$0xff]
    %v206 = vld [vmem:[#allocation5 + $0x180] sm:$0xff]
    %v207 = vld [vmem:[#allocation5 + $0x188] sm:$0xff]
    %v208 = vld [vmem:[#allocation5 + $0x190] sm:$0xff]
    %v209 = vld [vmem:[#allocation5 + $0x198] sm:$0xff]
    %v210 = vld [vmem:[#allocation5 + $0x1a0] sm:$0xff]
    %v211 = vld [vmem:[#allocation5 + $0x1a8] sm:$0xff]
    %v212 = vld [vmem:[#allocation5 + $0x1b0] sm:$0xff]
    %v213 = vld [vmem:[#allocation5 + $0x1b8] sm:$0xff]
    %v214 = vld [vmem:[#allocation5 + $0x1c0] sm:$0xff]
    %v215 = vld [vmem:[#allocation5 + $0x1c8] sm:$0xff]
    %v216 = vld [vmem:[#allocation5 + $0x1d0] sm:$0xff]
    %v217 = vld [vmem:[#allocation5 + $0x1d8] sm:$0xff]
    %v218 = vld [vmem:[#allocation5 + $0x1e0] sm:$0xff]
    %v219 = vld [vmem:[#allocation5 + $0x1e8] sm:$0xff]
    %v220 = vld [vmem:[#allocation5 + $0x1f0] sm:$0xff]
    %v221 = vld [vmem:[#allocation5 + $0x1f8] sm:$0xff]
    %v222 = vld [vmem:[#allocation5 + $0x200] sm:$0xff]
    %v223 = vld [vmem:[#allocation5 + $0x208] sm:$0xff]
    %v224 = vld [vmem:[#allocation5 + $0x210] sm:$0xff]
    %v225 = vld [vmem:[#allocation5 + $0x218] sm:$0xff]
    %v226 = vld [vmem:[#allocation5 + $0x220] sm:$0xff]
    %v227 = vld [vmem:[#allocation5 + $0x228] sm:$0xff]
    %v228 = vld [vmem:[#allocation5 + $0x230] sm:$0xff]
    %v229 = vld [vmem:[#allocation5 + $0x238] sm:$0xff]
    %v230 = vld [vmem:[#allocation5 + $0x240] sm:$0xff]
    %v231 = vld [vmem:[#allocation5 + $0x248] sm:$0xff]
    %v232 = vld [vmem:[#allocation5 + $0x250] sm:$0xff]
    %v233 = vld [vmem:[#allocation5 + $0x258] sm:$0xff]
    %v234 = vld [vmem:[#allocation5 + $0x260] sm:$0xff]
    %v235 = vld [vmem:[#allocation5 + $0x268] sm:$0xff]
    %v236 = vld [vmem:[#allocation5 + $0x270] sm:$0xff]
    %v237 = vld [vmem:[#allocation5 + $0x278] sm:$0xff]
    %v238 = vld [vmem:[#allocation5 + $0x280] sm:$0xff]
    %v239 = vld [vmem:[#allocation5 + $0x288] sm:$0xff]
    %v240 = vld [vmem:[#allocation5 + $0x290] sm:$0xff]
    %v241 = vld [vmem:[#allocation5 + $0x298] sm:$0xff]
    %v242 = vld [vmem:[#allocation5 + $0x2a0] sm:$0xff]
    %v243 = vld [vmem:[#allocation5 + $0x2a8] sm:$0xff]
    %v244 = vld [vmem:[#allocation5 + $0x2b0] sm:$0xff]
    %v245 = vld [vmem:[#allocation5 + $0x2b8] sm:$0xff]
    %v246 = vld [vmem:[#allocation5 + $0x2c0] sm:$0xff]
    %v247 = vld [vmem:[#allocation5 + $0x2c8] sm:$0xff]
    %v248 = vld [vmem:[#allocation5 + $0x2d0] sm:$0xff]
    %v249 = vld [vmem:[#allocation5 + $0x2d8] sm:$0xff]
    %v250 = vld [vmem:[#allocation5 + $0x2e0] sm:$0xff]
    %v251 = vld [vmem:[#allocation5 + $0x2e8] sm:$0xff]
    %v252 = vld [vmem:[#allocation5 + $0x2f0] sm:$0xff]
    %v253 = vld [vmem:[#allocation5 + $0x2f8] sm:$0xff]
    %v254 = vld [vmem:[#allocation5 + $0x300] sm:$0xff]
    %v255 = vld [vmem:[#allocation5 + $0x308] sm:$0xff]
    %v256 = vld [vmem:[#allocation5 + $0x310] sm:$0xff]
    %v257 = vld [vmem:[#allocation5 + $0x318] sm:$0xff]
    %v258 = vld [vmem:[#allocation5 + $0x320] sm:$0xff]
    %v259 = vld [vmem:[#allocation5 + $0x328] sm:$0xff]
    %v260 = vld [vmem:[#allocation5 + $0x330] sm:$0xff]
    %v261 = vld [vmem:[#allocation5 + $0x338] sm:$0xff]
    %v262 = vld [vmem:[#allocation5 + $0x340] sm:$0xff]
    %v263 = vld [vmem:[#allocation5 + $0x348] sm:$0xff]
    %v264 = vld [vmem:[#allocation5 + $0x350] sm:$0xff]
    %v265 = vld [vmem:[#allocation5 + $0x358] sm:$0xff]
    %v266 = vld [vmem:[#allocation5 + $0x360] sm:$0xff]
    %v267 = vld [vmem:[#allocation5 + $0x368] sm:$0xff]
    %v268 = vld [vmem:[#allocation5 + $0x370] sm:$0xff]
    %v269 = vld [vmem:[#allocation5 + $0x378] sm:$0xff]
    %v270 = vld [vmem:[#allocation5 + $0x380] sm:$0xff]
    %v271 = vld [vmem:[#allocation5 + $0x388] sm:$0xff]
    %v272 = vld [vmem:[#allocation5 + $0x390] sm:$0xff]
    %v273 = vld [vmem:[#allocation5 + $0x398] sm:$0xff]
    %v274 = vld [vmem:[#allocation5 + $0x3a0] sm:$0xff]
    %v275 = vld [vmem:[#allocation5 + $0x3a8] sm:$0xff]
    %v276 = vld [vmem:[#allocation5 + $0x3b0] sm:$0xff]
    %v277 = vld [vmem:[#allocation5 + $0x3b8] sm:$0xff]
    %v278 = vld [vmem:[#allocation5 + $0x3c0] sm:$0xff]
    %v279 = vld [vmem:[#allocation5 + $0x3c8] sm:$0xff]
    %v280 = vld [vmem:[#allocation5 + $0x3d0] sm:$0xff]
    %v281 = vld [vmem:[#allocation5 + $0x3d8] sm:$0xff]
    %v282 = vld [vmem:[#allocation5 + $0x3e0] sm:$0xff]
    %v283 = vld [vmem:[#allocation5 + $0x3e8] sm:$0xff]
    %v284 = vld [vmem:[#allocation5 + $0x3f0] sm:$0xff]
    %v285 = vld [vmem:[#allocation5 + $0x3f8] sm:$0xff]
    %v286 = vld [vmem:[#allocation5 + $0x400] sm:$0xff]
    %v287 = vld [vmem:[#allocation5 + $0x408] sm:$0xff]
    %v288 = vld [vmem:[#allocation5 + $0x410] sm:$0xff]
    %v289 = vld [vmem:[#allocation5 + $0x418] sm:$0xff]
    %v290 = vld [vmem:[#allocation5 + $0x420] sm:$0xff]
    %v291 = vld [vmem:[#allocation5 + $0x428] sm:$0xff]
    %v292 = vld [vmem:[#allocation5 + $0x430] sm:$0xff]
    %v293 = vld [vmem:[#allocation5 + $0x438] sm:$0xff]
    %v294 = vld [vmem:[#allocation5 + $0x440] sm:$0xff]
    %v295 = vld [vmem:[#allocation5 + $0x448] sm:$0xff]
    %v296 = vld [vmem:[#allocation5 + $0x450] sm:$0xff]
    %v297 = vld [vmem:[#allocation5 + $0x458] sm:$0xff]
    %v298 = vld [vmem:[#allocation5 + $0x460] sm:$0xff]
    %v299 = vld [vmem:[#allocation5 + $0x468] sm:$0xff]
    %v300 = vld [vmem:[#allocation5 + $0x470] sm:$0xff]
    %v301 = vld [vmem:[#allocation5 + $0x478] sm:$0xff]
    %v302 = vld [vmem:[#allocation5 + $0x480] sm:$0xff]
    %v303 = vld [vmem:[#allocation5 + $0x488] sm:$0xff]
    %v304 = vld [vmem:[#allocation5 + $0x490] sm:$0xff]
    %v305 = vld [vmem:[#allocation5 + $0x498] sm:$0xff]
    %v306 = vld [vmem:[#allocation5 + $0x4a0] sm:$0xff]
    %v307 = vld [vmem:[#allocation5 + $0x4a8] sm:$0xff]
    %v308 = vld [vmem:[#allocation5 + $0x4b0] sm:$0xff]
    %v309 = vld [vmem:[#allocation5 + $0x4b8] sm:$0xff]
    %v310 = vld [vmem:[#allocation5 + $0x4c0] sm:$0xff]
    %v311 = vld [vmem:[#allocation5 + $0x4c8] sm:$0xff]
    %v312 = vld [vmem:[#allocation5 + $0x4d0] sm:$0xff]
    %v313 = vld [vmem:[#allocation5 + $0x4d8] sm:$0xff]
    %v314 = vld [vmem:[#allocation5 + $0x4e0] sm:$0xff]
    %v315 = vld [vmem:[#allocation5 + $0x4e8] sm:$0xff]
    %v316 = vld [vmem:[#allocation5 + $0x4f0] sm:$0xff]
    %v317 = vld [vmem:[#allocation5 + $0x4f8] sm:$0xff]
    %v318 = vld [vmem:[#allocation5 + $0x500] sm:$0xff]
    %v319 = vld [vmem:[#allocation5 + $0x508] sm:$0xff]
    %v320 = vld [vmem:[#allocation5 + $0x510] sm:$0xff]
    %v321 = vld [vmem:[#allocation5 + $0x518] sm:$0xff]
    %v322 = vld [vmem:[#allocation5 + $0x520] sm:$0xff]
    %v323 = vld [vmem:[#allocation5 + $0x528] sm:$0xff]
    %v324 = vld [vmem:[#allocation5 + $0x530] sm:$0xff]
    %v325 = vld [vmem:[#allocation5 + $0x538] sm:$0xff]
    %v326 = vld [vmem:[#allocation5 + $0x540] sm:$0xff]
    %v327 = vld [vmem:[#allocation5 + $0x548] sm:$0xff]
    %v328 = vld [vmem:[#allocation5 + $0x550] sm:$0xff]
    %v329 = vld [vmem:[#allocation5 + $0x558] sm:$0xff]
    %v330 = vld [vmem:[#allocation5 + $0x560] sm:$0xff]
    %v331 = vld [vmem:[#allocation5 + $0x568] sm:$0xff]
    %v332 = vld [vmem:[#allocation5 + $0x570] sm:$0xff]
    %v333 = vld [vmem:[#allocation5 + $0x578] sm:$0xff]
    %v334 = vld [vmem:[#allocation5 + $0x580] sm:$0xff]
    %v335 = vld [vmem:[#allocation5 + $0x588] sm:$0xff]
    %v336 = vld [vmem:[#allocation5 + $0x590] sm:$0xff]
    %v337 = vld [vmem:[#allocation5 + $0x598] sm:$0xff]
    %v338 = vld [vmem:[#allocation5 + $0x5a0] sm:$0xff]
    %v339 = vld [vmem:[#allocation5 + $0x5a8] sm:$0xff]
    %v340 = vld [vmem:[#allocation5 + $0x5b0] sm:$0xff]
    %v341 = vld [vmem:[#allocation5 + $0x5b8] sm:$0xff]
    %v342 = vld [vmem:[#allocation5 + $0x5c0] sm:$0xff]
    %v343 = vld [vmem:[#allocation5 + $0x5c8] sm:$0xff]
    %v344 = vld [vmem:[#allocation5 + $0x5d0] sm:$0xff]
    %v345 = vld [vmem:[#allocation5 + $0x5d8] sm:$0xff]
    %v346 = vld [vmem:[#allocation5 + $0x5e0] sm:$0xff]
    %v347 = vld [vmem:[#allocation5 + $0x5e8] sm:$0xff]
    %v348 = vld [vmem:[#allocation5 + $0x5f0] sm:$0xff]
    %v349 = vld [vmem:[#allocation5 + $0x5f8] sm:$0xff]
    %v350 = vld [vmem:[%s5] sm:$0xff]
    %v351 = vld [vmem:[%s5 + $0x8] sm:$0xff]
    %v354 = vlaneseq
    %v355 = vshrl.u32 %v354, 7
    %v356 = vsub.s32 0, %v355
    %v357 = vrot.slane %v350, %v356
    %v358 = vlaneseq
    %v359 = vshrl.u32 %v358, 7
    %v360 = vsub.s32 1, %v359
    %v361 = vrot.slane %v350, %v360
    %v362 = vlaneseq
    %v363 = vshrl.u32 %v362, 7
    %v364 = vsub.s32 2, %v363
    %v365 = vrot.slane %v350, %v364
    %v366 = vlaneseq
    %v367 = vshrl.u32 %v366, 7
    %v368 = vsub.s32 3, %v367
    %v369 = vrot.slane %v350, %v368
    %v370 = vlaneseq
    %v371 = vshrl.u32 %v370, 7
    %v372 = vsub.s32 4, %v371
    %v373 = vrot.slane %v350, %v372
    %v374 = vlaneseq
    %v375 = vshrl.u32 %v374, 7
    %v376 = vsub.s32 5, %v375
    %v377 = vrot.slane %v350, %v376
    %v378 = vlaneseq
    %v379 = vshrl.u32 %v378, 7
    %v380 = vsub.s32 6, %v379
    %v381 = vrot.slane %v350, %v380
    %v382 = vlaneseq
    %v383 = vshrl.u32 %v382, 7
    %v384 = vsub.s32 7, %v383
    %v385 = vrot.slane %v350, %v384
    %v386 = vlaneseq
    %v387 = vshrl.u32 %v386, 7
    %v388 = vsub.s32 0, %v387
    %v389 = vrot.slane %v351, %v388
    %v390 = vlaneseq
    %v391 = vshrl.u32 %v390, 7
    %v392 = vsub.s32 1, %v391
    %v393 = vrot.slane %v351, %v392
    %v394 = vlaneseq
    %v395 = vshrl.u32 %v394, 7
    %v396 = vsub.s32 2, %v395
    %v397 = vrot.slane %v351, %v396
    %v398 = vlaneseq
    %v399 = vshrl.u32 %v398, 7
    %v400 = vsub.s32 3, %v399
    %v401 = vrot.slane %v351, %v400
    %v402 = vlaneseq
    %v403 = vshrl.u32 %v402, 7
    %v404 = vsub.s32 4, %v403
    %v405 = vrot.slane %v351, %v404
    %v406 = vlaneseq
    %v407 = vshrl.u32 %v406, 7
    %v408 = vsub.s32 5, %v407
    %v409 = vrot.slane %v351, %v408
    %v410 = vlaneseq
    %v411 = vshrl.u32 %v410, 7
    %v412 = vsub.s32 6, %v411
    %v413 = vrot.slane %v351, %v412
    %v414 = vlaneseq
    %v415 = vshrl.u32 %v414, 7
    %v416 = vsub.s32 7, %v415
    %v417 = vrot.slane %v351, %v416
    %v442 = vunpack.c.l.b16 %v150
    %v443 = vunpack.c.h.b16 %v150
    %v444 = vunpack.c.l.b16 %v151
    %v445 = vunpack.c.h.b16 %v151
    %v446 = vunpack.c.l.b16 %v152
    %v447 = vunpack.c.h.b16 %v152
    %v448 = vunpack.c.l.b16 %v153
    %v449 = vunpack.c.h.b16 %v153
    %v450 = vunpack.c.l.b16 %v154
    %v451 = vunpack.c.h.b16 %v154
    %v452 = vunpack.c.l.b16 %v155
    %v453 = vunpack.c.h.b16 %v155
    %v454 = vunpack.c.l.b16 %v156
    %v455 = vunpack.c.h.b16 %v156
    %v456 = vunpack.c.l.b16 %v157
    %v457 = vunpack.c.h.b16 %v157
    %v458 = vpack.c.b16 %v444, %v442
    %v459 = vpack.c.b16 %v445, %v443
    %v460 = vpack.c.b16 %v448, %v446
    %v461 = vpack.c.b16 %v449, %v447
    %v462 = vpack.c.b16 %v452, %v450
    %v463 = vpack.c.b16 %v453, %v451
    %v464 = vpack.c.b16 %v456, %v454
    %v465 = vpack.c.b16 %v457, %v455
    %v662 = vunpack.c.l.b16 %v158
    %v663 = vunpack.c.h.b16 %v158
    %v664 = vunpack.c.l.b16 %v159
    %v665 = vunpack.c.h.b16 %v159
    %v666 = vunpack.c.l.b16 %v160
    %v667 = vunpack.c.h.b16 %v160
    %v668 = vunpack.c.l.b16 %v161
    %v669 = vunpack.c.h.b16 %v161
    %v670 = vunpack.c.l.b16 %v162
    %v671 = vunpack.c.h.b16 %v162
    %v672 = vunpack.c.l.b16 %v163
    %v673 = vunpack.c.h.b16 %v163
    %v674 = vunpack.c.l.b16 %v164
    %v675 = vunpack.c.h.b16 %v164
    %v676 = vunpack.c.l.b16 %v165
    %v677 = vunpack.c.h.b16 %v165
    %v678 = vunpack.c.l.b16 %v166
    %v679 = vunpack.c.h.b16 %v166
    %v680 = vunpack.c.l.b16 %v167
    %v681 = vunpack.c.h.b16 %v167
    %v682 = vunpack.c.l.b16 %v168
    %v683 = vunpack.c.h.b16 %v168
    %v684 = vunpack.c.l.b16 %v169
    %v685 = vunpack.c.h.b16 %v169
    %v686 = vunpack.c.l.b16 %v170
    %v687 = vunpack.c.h.b16 %v170
    %v688 = vunpack.c.l.b16 %v171
    %v689 = vunpack.c.h.b16 %v171
    %v690 = vunpack.c.l.b16 %v172
    %v691 = vunpack.c.h.b16 %v172
    %v692 = vunpack.c.l.b16 %v173
    %v693 = vunpack.c.h.b16 %v173
    %v694 = vunpack.c.l.b16 %v174
    %v695 = vunpack.c.h.b16 %v174
    %v696 = vunpack.c.l.b16 %v175
    %v697 = vunpack.c.h.b16 %v175
    %v698 = vunpack.c.l.b16 %v176
    %v699 = vunpack.c.h.b16 %v176
    %v700 = vunpack.c.l.b16 %v177
    %v701 = vunpack.c.h.b16 %v177
    %v702 = vunpack.c.l.b16 %v178
    %v703 = vunpack.c.h.b16 %v178
    %v704 = vunpack.c.l.b16 %v179
    %v705 = vunpack.c.h.b16 %v179
    %v706 = vunpack.c.l.b16 %v180
    %v707 = vunpack.c.h.b16 %v180
    %v708 = vunpack.c.l.b16 %v181
    %v709 = vunpack.c.h.b16 %v181
    %v710 = vunpack.c.l.b16 %v182
    %v711 = vunpack.c.h.b16 %v182
    %v712 = vunpack.c.l.b16 %v183
    %v713 = vunpack.c.h.b16 %v183
    %v714 = vunpack.c.l.b16 %v184
    %v715 = vunpack.c.h.b16 %v184
    %v716 = vunpack.c.l.b16 %v185
    %v717 = vunpack.c.h.b16 %v185
    %v718 = vunpack.c.l.b16 %v186
    %v719 = vunpack.c.h.b16 %v186
    %v720 = vunpack.c.l.b16 %v187
    %v721 = vunpack.c.h.b16 %v187
    %v722 = vunpack.c.l.b16 %v188
    %v723 = vunpack.c.h.b16 %v188
    %v724 = vunpack.c.l.b16 %v189
    %v725 = vunpack.c.h.b16 %v189
    %v726 = vunpack.c.l.b16 %v190
    %v727 = vunpack.c.h.b16 %v190
    %v728 = vunpack.c.l.b16 %v191
    %v729 = vunpack.c.h.b16 %v191
    %v730 = vunpack.c.l.b16 %v192
    %v731 = vunpack.c.h.b16 %v192
    %v732 = vunpack.c.l.b16 %v193
    %v733 = vunpack.c.h.b16 %v193
    %v734 = vunpack.c.l.b16 %v194
    %v735 = vunpack.c.h.b16 %v194
    %v736 = vunpack.c.l.b16 %v195
    %v737 = vunpack.c.h.b16 %v195
    %v738 = vunpack.c.l.b16 %v196
    %v739 = vunpack.c.h.b16 %v196
    %v740 = vunpack.c.l.b16 %v197
    %v741 = vunpack.c.h.b16 %v197
    %v742 = vunpack.c.l.b16 %v198
    %v743 = vunpack.c.h.b16 %v198
    %v744 = vunpack.c.l.b16 %v199
    %v745 = vunpack.c.h.b16 %v199
    %v746 = vunpack.c.l.b16 %v200
    %v747 = vunpack.c.h.b16 %v200
    %v748 = vunpack.c.l.b16 %v201
    %v749 = vunpack.c.h.b16 %v201
    %v750 = vunpack.c.l.b16 %v202
    %v751 = vunpack.c.h.b16 %v202
    %v752 = vunpack.c.l.b16 %v203
    %v753 = vunpack.c.h.b16 %v203
    %v754 = vunpack.c.l.b16 %v204
    %v755 = vunpack.c.h.b16 %v204
    %v756 = vunpack.c.l.b16 %v205
    %v757 = vunpack.c.h.b16 %v205
    %v758 = vunpack.c.l.b16 %v206
    %v759 = vunpack.c.h.b16 %v206
    %v760 = vunpack.c.l.b16 %v207
    %v761 = vunpack.c.h.b16 %v207
    %v762 = vunpack.c.l.b16 %v208
    %v763 = vunpack.c.h.b16 %v208
    %v764 = vunpack.c.l.b16 %v209
    %v765 = vunpack.c.h.b16 %v209
    %v766 = vunpack.c.l.b16 %v210
    %v767 = vunpack.c.h.b16 %v210
    %v768 = vunpack.c.l.b16 %v211
    %v769 = vunpack.c.h.b16 %v211
    %v770 = vunpack.c.l.b16 %v212
    %v771 = vunpack.c.h.b16 %v212
    %v772 = vunpack.c.l.b16 %v213
    %v773 = vunpack.c.h.b16 %v213
    %v774 = vunpack.c.l.b16 %v214
    %v775 = vunpack.c.h.b16 %v214
    %v776 = vunpack.c.l.b16 %v215
    %v777 = vunpack.c.h.b16 %v215
    %v778 = vunpack.c.l.b16 %v216
    %v779 = vunpack.c.h.b16 %v216
    %v780 = vunpack.c.l.b16 %v217
    %v781 = vunpack.c.h.b16 %v217
    %v782 = vunpack.c.l.b16 %v218
    %v783 = vunpack.c.h.b16 %v218
    %v784 = vunpack.c.l.b16 %v219
    %v785 = vunpack.c.h.b16 %v219
    %v786 = vunpack.c.l.b16 %v220
    %v787 = vunpack.c.h.b16 %v220
    %v788 = vunpack.c.l.b16 %v221
    %v789 = vunpack.c.h.b16 %v221
    %v790 = vunpack.c.l.b16 %v222
    %v791 = vunpack.c.h.b16 %v222
    %v792 = vunpack.c.l.b16 %v223
    %v793 = vunpack.c.h.b16 %v223
    %v794 = vunpack.c.l.b16 %v224
    %v795 = vunpack.c.h.b16 %v224
    %v796 = vunpack.c.l.b16 %v225
    %v797 = vunpack.c.h.b16 %v225
    %v798 = vunpack.c.l.b16 %v226
    %v799 = vunpack.c.h.b16 %v226
    %v800 = vunpack.c.l.b16 %v227
    %v801 = vunpack.c.h.b16 %v227
    %v802 = vunpack.c.l.b16 %v228
    %v803 = vunpack.c.h.b16 %v228
    %v804 = vunpack.c.l.b16 %v229
    %v805 = vunpack.c.h.b16 %v229
    %v806 = vunpack.c.l.b16 %v230
    %v807 = vunpack.c.h.b16 %v230
    %v808 = vunpack.c.l.b16 %v231
    %v809 = vunpack.c.h.b16 %v231
    %v810 = vunpack.c.l.b16 %v232
    %v811 = vunpack.c.h.b16 %v232
    %v812 = vunpack.c.l.b16 %v233
    %v813 = vunpack.c.h.b16 %v233
    %v814 = vunpack.c.l.b16 %v234
    %v815 = vunpack.c.h.b16 %v234
    %v816 = vunpack.c.l.b16 %v235
    %v817 = vunpack.c.h.b16 %v235
    %v818 = vunpack.c.l.b16 %v236
    %v819 = vunpack.c.h.b16 %v236
    %v820 = vunpack.c.l.b16 %v237
    %v821 = vunpack.c.h.b16 %v237
    %v822 = vunpack.c.l.b16 %v238
    %v823 = vunpack.c.h.b16 %v238
    %v824 = vunpack.c.l.b16 %v239
    %v825 = vunpack.c.h.b16 %v239
    %v826 = vunpack.c.l.b16 %v240
    %v827 = vunpack.c.h.b16 %v240
    %v828 = vunpack.c.l.b16 %v241
    %v829 = vunpack.c.h.b16 %v241
    %v830 = vunpack.c.l.b16 %v242
    %v831 = vunpack.c.h.b16 %v242
    %v832 = vunpack.c.l.b16 %v243
    %v833 = vunpack.c.h.b16 %v243
    %v834 = vunpack.c.l.b16 %v244
    %v835 = vunpack.c.h.b16 %v244
    %v836 = vunpack.c.l.b16 %v245
    %v837 = vunpack.c.h.b16 %v245
    %v838 = vunpack.c.l.b16 %v246
    %v839 = vunpack.c.h.b16 %v246
    %v840 = vunpack.c.l.b16 %v247
    %v841 = vunpack.c.h.b16 %v247
    %v842 = vunpack.c.l.b16 %v248
    %v843 = vunpack.c.h.b16 %v248
    %v844 = vunpack.c.l.b16 %v249
    %v845 = vunpack.c.h.b16 %v249
    %v846 = vunpack.c.l.b16 %v250
    %v847 = vunpack.c.h.b16 %v250
    %v848 = vunpack.c.l.b16 %v251
    %v849 = vunpack.c.h.b16 %v251
    %v850 = vunpack.c.l.b16 %v252
    %v851 = vunpack.c.h.b16 %v252
    %v852 = vunpack.c.l.b16 %v253
    %v853 = vunpack.c.h.b16 %v253
    %v854 = vunpack.c.l.b16 %v254
    %v855 = vunpack.c.h.b16 %v254
    %v856 = vunpack.c.l.b16 %v255
    %v857 = vunpack.c.h.b16 %v255
    %v858 = vunpack.c.l.b16 %v256
    %v859 = vunpack.c.h.b16 %v256
    %v860 = vunpack.c.l.b16 %v257
    %v861 = vunpack.c.h.b16 %v257
    %v862 = vunpack.c.l.b16 %v258
    %v863 = vunpack.c.h.b16 %v258
    %v864 = vunpack.c.l.b16 %v259
    %v865 = vunpack.c.h.b16 %v259
    %v866 = vunpack.c.l.b16 %v260
    %v867 = vunpack.c.h.b16 %v260
    %v868 = vunpack.c.l.b16 %v261
    %v869 = vunpack.c.h.b16 %v261
    %v870 = vunpack.c.l.b16 %v262
    %v871 = vunpack.c.h.b16 %v262
    %v872 = vunpack.c.l.b16 %v263
    %v873 = vunpack.c.h.b16 %v263
    %v874 = vunpack.c.l.b16 %v264
    %v875 = vunpack.c.h.b16 %v264
    %v876 = vunpack.c.l.b16 %v265
    %v877 = vunpack.c.h.b16 %v265
    %v878 = vunpack.c.l.b16 %v266
    %v879 = vunpack.c.h.b16 %v266
    %v880 = vunpack.c.l.b16 %v267
    %v881 = vunpack.c.h.b16 %v267
    %v882 = vunpack.c.l.b16 %v268
    %v883 = vunpack.c.h.b16 %v268
    %v884 = vunpack.c.l.b16 %v269
    %v885 = vunpack.c.h.b16 %v269
    %v886 = vunpack.c.l.b16 %v270
    %v887 = vunpack.c.h.b16 %v270
    %v888 = vunpack.c.l.b16 %v271
    %v889 = vunpack.c.h.b16 %v271
    %v890 = vunpack.c.l.b16 %v272
    %v891 = vunpack.c.h.b16 %v272
    %v892 = vunpack.c.l.b16 %v273
    %v893 = vunpack.c.h.b16 %v273
    %v894 = vunpack.c.l.b16 %v274
    %v895 = vunpack.c.h.b16 %v274
    %v896 = vunpack.c.l.b16 %v275
    %v897 = vunpack.c.h.b16 %v275
    %v898 = vunpack.c.l.b16 %v276
    %v899 = vunpack.c.h.b16 %v276
    %v900 = vunpack.c.l.b16 %v277
    %v901 = vunpack.c.h.b16 %v277
    %v902 = vunpack.c.l.b16 %v278
    %v903 = vunpack.c.h.b16 %v278
    %v904 = vunpack.c.l.b16 %v279
    %v905 = vunpack.c.h.b16 %v279
    %v906 = vunpack.c.l.b16 %v280
    %v907 = vunpack.c.h.b16 %v280
    %v908 = vunpack.c.l.b16 %v281
    %v909 = vunpack.c.h.b16 %v281
    %v910 = vunpack.c.l.b16 %v282
    %v911 = vunpack.c.h.b16 %v282
    %v912 = vunpack.c.l.b16 %v283
    %v913 = vunpack.c.h.b16 %v283
    %v914 = vunpack.c.l.b16 %v284
    %v915 = vunpack.c.h.b16 %v284
    %v916 = vunpack.c.l.b16 %v285
    %v917 = vunpack.c.h.b16 %v285
    %v918 = vunpack.c.l.b16 %v286
    %v919 = vunpack.c.h.b16 %v286
    %v920 = vunpack.c.l.b16 %v287
    %v921 = vunpack.c.h.b16 %v287
    %v922 = vunpack.c.l.b16 %v288
    %v923 = vunpack.c.h.b16 %v288
    %v924 = vunpack.c.l.b16 %v289
    %v925 = vunpack.c.h.b16 %v289
    %v926 = vunpack.c.l.b16 %v290
    %v927 = vunpack.c.h.b16 %v290
    %v928 = vunpack.c.l.b16 %v291
    %v929 = vunpack.c.h.b16 %v291
    %v930 = vunpack.c.l.b16 %v292
    %v931 = vunpack.c.h.b16 %v292
    %v932 = vunpack.c.l.b16 %v293
    %v933 = vunpack.c.h.b16 %v293
    %v934 = vunpack.c.l.b16 %v294
    %v935 = vunpack.c.h.b16 %v294
    %v936 = vunpack.c.l.b16 %v295
    %v937 = vunpack.c.h.b16 %v295
    %v938 = vunpack.c.l.b16 %v296
    %v939 = vunpack.c.h.b16 %v296
    %v940 = vunpack.c.l.b16 %v297
    %v941 = vunpack.c.h.b16 %v297
    %v942 = vunpack.c.l.b16 %v298
    %v943 = vunpack.c.h.b16 %v298
    %v944 = vunpack.c.l.b16 %v299
    %v945 = vunpack.c.h.b16 %v299
    %v946 = vunpack.c.l.b16 %v300
    %v947 = vunpack.c.h.b16 %v300
    %v948 = vunpack.c.l.b16 %v301
    %v949 = vunpack.c.h.b16 %v301
    %v950 = vunpack.c.l.b16 %v302
    %v951 = vunpack.c.h.b16 %v302
    %v952 = vunpack.c.l.b16 %v303
    %v953 = vunpack.c.h.b16 %v303
    %v954 = vunpack.c.l.b16 %v304
    %v955 = vunpack.c.h.b16 %v304
    %v956 = vunpack.c.l.b16 %v305
    %v957 = vunpack.c.h.b16 %v305
    %v958 = vunpack.c.l.b16 %v306
    %v959 = vunpack.c.h.b16 %v306
    %v960 = vunpack.c.l.b16 %v307
    %v961 = vunpack.c.h.b16 %v307
    %v962 = vunpack.c.l.b16 %v308
    %v963 = vunpack.c.h.b16 %v308
    %v964 = vunpack.c.l.b16 %v309
    %v965 = vunpack.c.h.b16 %v309
    %v966 = vunpack.c.l.b16 %v310
    %v967 = vunpack.c.h.b16 %v310
    %v968 = vunpack.c.l.b16 %v311
    %v969 = vunpack.c.h.b16 %v311
    %v970 = vunpack.c.l.b16 %v312
    %v971 = vunpack.c.h.b16 %v312
    %v972 = vunpack.c.l.b16 %v313
    %v973 = vunpack.c.h.b16 %v313
    %v974 = vunpack.c.l.b16 %v314
    %v975 = vunpack.c.h.b16 %v314
    %v976 = vunpack.c.l.b16 %v315
    %v977 = vunpack.c.h.b16 %v315
    %v978 = vunpack.c.l.b16 %v316
    %v979 = vunpack.c.h.b16 %v316
    %v980 = vunpack.c.l.b16 %v317
    %v981 = vunpack.c.h.b16 %v317
    %v982 = vunpack.c.l.b16 %v318
    %v983 = vunpack.c.h.b16 %v318
    %v984 = vunpack.c.l.b16 %v319
    %v985 = vunpack.c.h.b16 %v319
    %v986 = vunpack.c.l.b16 %v320
    %v987 = vunpack.c.h.b16 %v320
    %v988 = vunpack.c.l.b16 %v321
    %v989 = vunpack.c.h.b16 %v321
    %v990 = vunpack.c.l.b16 %v322
    %v991 = vunpack.c.h.b16 %v322
    %v992 = vunpack.c.l.b16 %v323
    %v993 = vunpack.c.h.b16 %v323
    %v994 = vunpack.c.l.b16 %v324
    %v995 = vunpack.c.h.b16 %v324
    %v996 = vunpack.c.l.b16 %v325
    %v997 = vunpack.c.h.b16 %v325
    %v998 = vunpack.c.l.b16 %v326
    %v999 = vunpack.c.h.b16 %v326
    %v1000 = vunpack.c.l.b16 %v327
    %v1001 = vunpack.c.h.b16 %v327
    %v1002 = vunpack.c.l.b16 %v328
    %v1003 = vunpack.c.h.b16 %v328
    %v1004 = vunpack.c.l.b16 %v329
    %v1005 = vunpack.c.h.b16 %v329
    %v1006 = vunpack.c.l.b16 %v330
    %v1007 = vunpack.c.h.b16 %v330
    %v1008 = vunpack.c.l.b16 %v331
    %v1009 = vunpack.c.h.b16 %v331
    %v1010 = vunpack.c.l.b16 %v332
    %v1011 = vunpack.c.h.b16 %v332
    %v1012 = vunpack.c.l.b16 %v333
    %v1013 = vunpack.c.h.b16 %v333
    %v1014 = vunpack.c.l.b16 %v334
    %v1015 = vunpack.c.h.b16 %v334
    %v1016 = vunpack.c.l.b16 %v335
    %v1017 = vunpack.c.h.b16 %v335
    %v1018 = vunpack.c.l.b16 %v336
    %v1019 = vunpack.c.h.b16 %v336
    %v1020 = vunpack.c.l.b16 %v337
    %v1021 = vunpack.c.h.b16 %v337
    %v1022 = vunpack.c.l.b16 %v338
    %v1023 = vunpack.c.h.b16 %v338
    %v1024 = vunpack.c.l.b16 %v339
    %v1025 = vunpack.c.h.b16 %v339
    %v1026 = vunpack.c.l.b16 %v340
    %v1027 = vunpack.c.h.b16 %v340
    %v1028 = vunpack.c.l.b16 %v341
    %v1029 = vunpack.c.h.b16 %v341
    %v1030 = vunpack.c.l.b16 %v342
    %v1031 = vunpack.c.h.b16 %v342
    %v1032 = vunpack.c.l.b16 %v343
    %v1033 = vunpack.c.h.b16 %v343
    %v1034 = vunpack.c.l.b16 %v344
    %v1035 = vunpack.c.h.b16 %v344
    %v1036 = vunpack.c.l.b16 %v345
    %v1037 = vunpack.c.h.b16 %v345
    %v1038 = vunpack.c.l.b16 %v346
    %v1039 = vunpack.c.h.b16 %v346
    %v1040 = vunpack.c.l.b16 %v347
    %v1041 = vunpack.c.h.b16 %v347
    %v1042 = vunpack.c.l.b16 %v348
    %v1043 = vunpack.c.h.b16 %v348
    %v1044 = vunpack.c.l.b16 %v349
    %v1045 = vunpack.c.h.b16 %v349
    %v1046 = vpack.c.b16 %v678, %v662
    %v1047 = vpack.c.b16 %v679, %v663
    %v1048 = vpack.c.b16 %v680, %v664
    %v1049 = vpack.c.b16 %v681, %v665
    %v1050 = vpack.c.b16 %v682, %v666
    %v1051 = vpack.c.b16 %v683, %v667
    %v1052 = vpack.c.b16 %v684, %v668
    %v1053 = vpack.c.b16 %v685, %v669
    %v1054 = vpack.c.b16 %v686, %v670
    %v1055 = vpack.c.b16 %v687, %v671
    %v1056 = vpack.c.b16 %v688, %v672
    %v1057 = vpack.c.b16 %v689, %v673
    %v1058 = vpack.c.b16 %v690, %v674
    %v1059 = vpack.c.b16 %v691, %v675
    %v1060 = vpack.c.b16 %v692, %v676
    %v1061 = vpack.c.b16 %v693, %v677
    %v1062 = vpack.c.b16 %v710, %v694
    %v1063 = vpack.c.b16 %v711, %v695
    %v1064 = vpack.c.b16 %v712, %v696
    %v1065 = vpack.c.b16 %v713, %v697
    %v1066 = vpack.c.b16 %v714, %v698
    %v1067 = vpack.c.b16 %v715, %v699
    %v1068 = vpack.c.b16 %v716, %v700
    %v1069 = vpack.c.b16 %v717, %v701
    %v1070 = vpack.c.b16 %v718, %v702
    %v1071 = vpack.c.b16 %v719, %v703
    %v1072 = vpack.c.b16 %v720, %v704
    %v1073 = vpack.c.b16 %v721, %v705
    %v1074 = vpack.c.b16 %v722, %v706
    %v1075 = vpack.c.b16 %v723, %v707
    %v1076 = vpack.c.b16 %v724, %v708
    %v1077 = vpack.c.b16 %v725, %v709
    %v1078 = vpack.c.b16 %v742, %v726
    %v1079 = vpack.c.b16 %v743, %v727
    %v1080 = vpack.c.b16 %v744, %v728
    %v1081 = vpack.c.b16 %v745, %v729
    %v1082 = vpack.c.b16 %v746, %v730
    %v1083 = vpack.c.b16 %v747, %v731
    %v1084 = vpack.c.b16 %v748, %v732
    %v1085 = vpack.c.b16 %v749, %v733
    %v1086 = vpack.c.b16 %v750, %v734
    %v1087 = vpack.c.b16 %v751, %v735
    %v1088 = vpack.c.b16 %v752, %v736
    %v1089 = vpack.c.b16 %v753, %v737
    %v1090 = vpack.c.b16 %v754, %v738
    %v1091 = vpack.c.b16 %v755, %v739
    %v1092 = vpack.c.b16 %v756, %v740
    %v1093 = vpack.c.b16 %v757, %v741
    %v1094 = vpack.c.b16 %v774, %v758
    %v1095 = vpack.c.b16 %v775, %v759
    %v1096 = vpack.c.b16 %v776, %v760
    %v1097 = vpack.c.b16 %v777, %v761
    %v1098 = vpack.c.b16 %v778, %v762
    %v1099 = vpack.c.b16 %v779, %v763
    %v1100 = vpack.c.b16 %v780, %v764
    %v1101 = vpack.c.b16 %v781, %v765
    %v1102 = vpack.c.b16 %v782, %v766
    %v1103 = vpack.c.b16 %v783, %v767
    %v1104 = vpack.c.b16 %v784, %v768
    %v1105 = vpack.c.b16 %v785, %v769
    %v1106 = vpack.c.b16 %v786, %v770
    %v1107 = vpack.c.b16 %v787, %v771
    %v1108 = vpack.c.b16 %v788, %v772
    %v1109 = vpack.c.b16 %v789, %v773
    %v1110 = vpack.c.b16 %v806, %v790
    %v1111 = vpack.c.b16 %v807, %v791
    %v1112 = vpack.c.b16 %v808, %v792
    %v1113 = vpack.c.b16 %v809, %v793
    %v1114 = vpack.c.b16 %v810, %v794
    %v1115 = vpack.c.b16 %v811, %v795
    %v1116 = vpack.c.b16 %v812, %v796
    %v1117 = vpack.c.b16 %v813, %v797
    %v1118 = vpack.c.b16 %v814, %v798
    %v1119 = vpack.c.b16 %v815, %v799
    %v1120 = vpack.c.b16 %v816, %v800
    %v1121 = vpack.c.b16 %v817, %v801
    %v1122 = vpack.c.b16 %v818, %v802
    %v1123 = vpack.c.b16 %v819, %v803
    %v1124 = vpack.c.b16 %v820, %v804
    %v1125 = vpack.c.b16 %v821, %v805
    %v1126 = vpack.c.b16 %v838, %v822
    %v1127 = vpack.c.b16 %v839, %v823
    %v1128 = vpack.c.b16 %v840, %v824
    %v1129 = vpack.c.b16 %v841, %v825
    %v1130 = vpack.c.b16 %v842, %v826
    %v1131 = vpack.c.b16 %v843, %v827
    %v1132 = vpack.c.b16 %v844, %v828
    %v1133 = vpack.c.b16 %v845, %v829
    %v1134 = vpack.c.b16 %v846, %v830
    %v1135 = vpack.c.b16 %v847, %v831
    %v1136 = vpack.c.b16 %v848, %v832
    %v1137 = vpack.c.b16 %v849, %v833
    %v1138 = vpack.c.b16 %v850, %v834
    %v1139 = vpack.c.b16 %v851, %v835
    %v1140 = vpack.c.b16 %v852, %v836
    %v1141 = vpack.c.b16 %v853, %v837
    %v1142 = vpack.c.b16 %v870, %v854
    %v1143 = vpack.c.b16 %v871, %v855
    %v1144 = vpack.c.b16 %v872, %v856
    %v1145 = vpack.c.b16 %v873, %v857
    %v1146 = vpack.c.b16 %v874, %v858
    %v1147 = vpack.c.b16 %v875, %v859
    %v1148 = vpack.c.b16 %v876, %v860
    %v1149 = vpack.c.b16 %v877, %v861
    %v1150 = vpack.c.b16 %v878, %v862
    %v1151 = vpack.c.b16 %v879, %v863
    %v1152 = vpack.c.b16 %v880, %v864
    %v1153 = vpack.c.b16 %v881, %v865
    %v1154 = vpack.c.b16 %v882, %v866
    %v1155 = vpack.c.b16 %v883, %v867
    %v1156 = vpack.c.b16 %v884, %v868
    %v1157 = vpack.c.b16 %v885, %v869
    %v1158 = vpack.c.b16 %v902, %v886
    %v1159 = vpack.c.b16 %v903, %v887
    %v1160 = vpack.c.b16 %v904, %v888
    %v1161 = vpack.c.b16 %v905, %v889
    %v1162 = vpack.c.b16 %v906, %v890
    %v1163 = vpack.c.b16 %v907, %v891
    %v1164 = vpack.c.b16 %v908, %v892
    %v1165 = vpack.c.b16 %v909, %v893
    %v1166 = vpack.c.b16 %v910, %v894
    %v1167 = vpack.c.b16 %v911, %v895
    %v1168 = vpack.c.b16 %v912, %v896
    %v1169 = vpack.c.b16 %v913, %v897
    %v1170 = vpack.c.b16 %v914, %v898
    %v1171 = vpack.c.b16 %v915, %v899
    %v1172 = vpack.c.b16 %v916, %v900
    %v1173 = vpack.c.b16 %v917, %v901
    %v1174 = vpack.c.b16 %v934, %v918
    %v1175 = vpack.c.b16 %v935, %v919
    %v1176 = vpack.c.b16 %v936, %v920
    %v1177 = vpack.c.b16 %v937, %v921
    %v1178 = vpack.c.b16 %v938, %v922
    %v1179 = vpack.c.b16 %v939, %v923
    %v1180 = vpack.c.b16 %v940, %v924
    %v1181 = vpack.c.b16 %v941, %v925
    %v1182 = vpack.c.b16 %v942, %v926
    %v1183 = vpack.c.b16 %v943, %v927
    %v1184 = vpack.c.b16 %v944, %v928
    %v1185 = vpack.c.b16 %v945, %v929
    %v1186 = vpack.c.b16 %v946, %v930
    %v1187 = vpack.c.b16 %v947, %v931
    %v1188 = vpack.c.b16 %v948, %v932
    %v1189 = vpack.c.b16 %v949, %v933
    %v1190 = vpack.c.b16 %v966, %v950
    %v1191 = vpack.c.b16 %v967, %v951
    %v1192 = vpack.c.b16 %v968, %v952
    %v1193 = vpack.c.b16 %v969, %v953
    %v1194 = vpack.c.b16 %v970, %v954
    %v1195 = vpack.c.b16 %v971, %v955
    %v1196 = vpack.c.b16 %v972, %v956
    %v1197 = vpack.c.b16 %v973, %v957
    %v1198 = vpack.c.b16 %v974, %v958
    %v1199 = vpack.c.b16 %v975, %v959
    %v1200 = vpack.c.b16 %v976, %v960
    %v1201 = vpack.c.b16 %v977, %v961
    %v1202 = vpack.c.b16 %v978, %v962
    %v1203 = vpack.c.b16 %v979, %v963
    %v1204 = vpack.c.b16 %v980, %v964
    %v1205 = vpack.c.b16 %v981, %v965
    %v1206 = vpack.c.b16 %v998, %v982
    %v1207 = vpack.c.b16 %v999, %v983
    %v1208 = vpack.c.b16 %v1000, %v984
    %v1209 = vpack.c.b16 %v1001, %v985
    %v1210 = vpack.c.b16 %v1002, %v986
    %v1211 = vpack.c.b16 %v1003, %v987
    %v1212 = vpack.c.b16 %v1004, %v988
    %v1213 = vpack.c.b16 %v1005, %v989
    %v1214 = vpack.c.b16 %v1006, %v990
    %v1215 = vpack.c.b16 %v1007, %v991
    %v1216 = vpack.c.b16 %v1008, %v992
    %v1217 = vpack.c.b16 %v1009, %v993
    %v1218 = vpack.c.b16 %v1010, %v994
    %v1219 = vpack.c.b16 %v1011, %v995
    %v1220 = vpack.c.b16 %v1012, %v996
    %v1221 = vpack.c.b16 %v1013, %v997
    %v1222 = vpack.c.b16 %v1030, %v1014
    %v1223 = vpack.c.b16 %v1031, %v1015
    %v1224 = vpack.c.b16 %v1032, %v1016
    %v1225 = vpack.c.b16 %v1033, %v1017
    %v1226 = vpack.c.b16 %v1034, %v1018
    %v1227 = vpack.c.b16 %v1035, %v1019
    %v1228 = vpack.c.b16 %v1036, %v1020
    %v1229 = vpack.c.b16 %v1037, %v1021
    %v1230 = vpack.c.b16 %v1038, %v1022
    %v1231 = vpack.c.b16 %v1039, %v1023
    %v1232 = vpack.c.b16 %v1040, %v1024
    %v1233 = vpack.c.b16 %v1041, %v1025
    %v1234 = vpack.c.b16 %v1042, %v1026
    %v1235 = vpack.c.b16 %v1043, %v1027
    %v1236 = vpack.c.b16 %v1044, %v1028
    %v1237 = vpack.c.b16 %v1045, %v1029
    %vm1430 = vcmask 523264
    %v1432 = vsel %vm1430, %v459, 0
    %v1435 = vsel %vm1430, %v461, 0
    %v1438 = vsel %vm1430, %v463, 0
    %v1441 = vsel %vm1430, %v465, 0
    %1443 = vmatprep.subr.bf16.mxu0 %v1047
    %1444 = vmatpush1.bf16.msra.mxu0 %v1046
    %1445 = vmatprep.subr.bf16.mxu0 %v1063
    %1446 = vmatpush1.bf16.msra.mxu0 %v1062
    %1447 = vmatprep.subr.bf16.mxu0 %v1079
    %1448 = vmatpush1.bf16.msra.mxu0 %v1078
    %1449 = vmatprep.subr.bf16.mxu0 %v1095
    %1450 = vmatpush1.bf16.msra.mxu0 %v1094
    %1451 = vmatprep.subr.bf16.mxu0 %v1111
    %1452 = vmatpush1.bf16.msra.mxu0 %v1110
    %1453 = vmatprep.subr.bf16.mxu0 %v1127
    %1454 = vmatpush1.bf16.msra.mxu0 %v1126
    %1455 = vmatprep.subr.bf16.mxu0 %v1143
    %1456 = vmatpush1.bf16.msra.mxu0 %v1142
    %1457 = vmatprep.subr.bf16.mxu0 %v1159
    %1458 = vmatpush1.bf16.msra.mxu0 %v1158
    %1459 = vmatprep.subr.bf16.mxu0 %v1175
    %1460 = vmatpush1.bf16.msra.mxu0 %v1174
    %1461 = vmatprep.subr.bf16.mxu0 %v1191
    %1462 = vmatpush1.bf16.msra.mxu0 %v1190
    %1463 = vmatprep.subr.bf16.mxu0 %v1207
    %1464 = vmatpush1.bf16.msra.mxu0 %v1206
    %1465 = vmatprep.subr.bf16.mxu0 %v1223
    %1466 = vmatpush1.bf16.msra.mxu0 %v1222
    %1467 = vmatprep.subr.bf16.mxu0 0
    %1468 = vmatpush1.bf16.msra.mxu0 0
    %1469 = vmatprep.subr.bf16.mxu0 0
    %1470 = vmatpush1.bf16.msra.mxu0 0
    %1471 = vmatprep.subr.bf16.mxu0 0
    %1472 = vmatpush1.bf16.msra.mxu0 0
    %1473 = vmatprep.subr.bf16.mxu0 0
    %1474 = vmatpush1.bf16.msra.mxu0 0
    %1475 = vmatprep.mubr.bf16.mxu0 %v1432
    %1476 = vmatmul.mubr.bf16.gmra.mrb[0].mxu0 %v458
    %v1477 = vpop.f32.mrb[0].mxu0
    %v1478 = vadd.f32 %v357, %v1477
    %v1479 = vpop.f32.mrb[0].mxu0
    %v1480 = vadd.f32 %v361, %v1479
    %v1481 = vpop.f32.mrb[0].mxu0
    %v1482 = vadd.f32 %v357, %v1481
    %v1483 = vpop.f32.mrb[0].mxu0
    %v1484 = vadd.f32 %v361, %v1483
    %1485 = vmatprep.mubr.bf16.mxu0 %v1435
    %1486 = vmatmul.mubr.bf16.gmra.mrb[0].mxu0 %v460
    %v1487 = vpop.f32.mrb[0].mxu0
    %v1488 = vadd.f32 %v357, %v1487
    %v1489 = vpop.f32.mrb[0].mxu0
    %v1490 = vadd.f32 %v361, %v1489
    %v1491 = vpop.f32.mrb[0].mxu0
    %v1492 = vadd.f32 %v357, %v1491
    %v1493 = vpop.f32.mrb[0].mxu0
    %v1494 = vadd.f32 %v361, %v1493
    %1495 = vmatprep.mubr.bf16.mxu0 %v1438
    %1496 = vmatmul.mubr.bf16.gmra.mrb[0].mxu0 %v462
    %v1497 = vpop.f32.mrb[0].mxu0
    %v1498 = vadd.f32 %v357, %v1497
    %v1499 = vpop.f32.mrb[0].mxu0
    %v1500 = vadd.f32 %v361, %v1499
    %v1501 = vpop.f32.mrb[0].mxu0
    %v1502 = vadd.f32 %v357, %v1501
    %v1503 = vpop.f32.mrb[0].mxu0
    %v1504 = vadd.f32 %v361, %v1503
    %1505 = vmatprep.mubr.bf16.mxu0 %v1441
    %1506 = vmatmul.mubr.bf16.gmra.mrb[0].mxu0 %v464
    %v1507 = vpop.f32.mrb[0].mxu0
    %v1508 = vadd.f32 %v357, %v1507
    %v1509 = vpop.f32.mrb[0].mxu0
    %v1510 = vadd.f32 %v361, %v1509
    %v1511 = vpop.f32.mrb[0].mxu0
    %v1512 = vadd.f32 %v357, %v1511
    %v1513 = vpop.f32.mrb[0].mxu0
    %v1514 = vadd.f32 %v361, %v1513
    %1515 = vdwg.mxu0
    %1516 = vmatprep.subr.bf16.mxu0 %v1049
    %1517 = vmatpush1.bf16.msra.mxu0 %v1048
    %1518 = vmatprep.subr.bf16.mxu0 %v1065
    %1519 = vmatpush1.bf16.msra.mxu0 %v1064
    %1520 = vmatprep.subr.bf16.mxu0 %v1081
    %1521 = vmatpush1.bf16.msra.mxu0 %v1080
    %1522 = vmatprep.subr.bf16.mxu0 %v1097
    %1523 = vmatpush1.bf16.msra.mxu0 %v1096
    %1524 = vmatprep.subr.bf16.mxu0 %v1113
    %1525 = vmatpush1.bf16.msra.mxu0 %v1112
    %1526 = vmatprep.subr.bf16.mxu0 %v1129
    %1527 = vmatpush1.bf16.msra.mxu0 %v1128
    %1528 = vmatprep.subr.bf16.mxu0 %v1145
    %1529 = vmatpush1.bf16.msra.mxu0 %v1144
    %1530 = vmatprep.subr.bf16.mxu0 %v1161
    %1531 = vmatpush1.bf16.msra.mxu0 %v1160
    %1532 = vmatprep.subr.bf16.mxu0 %v1177
    %1533 = vmatpush1.bf16.msra.mxu0 %v1176
    %1534 = vmatprep.subr.bf16.mxu0 %v1193
    %1535 = vmatpush1.bf16.msra.mxu0 %v1192
    %1536 = vmatprep.subr.bf16.mxu0 %v1209
    %1537 = vmatpush1.bf16.msra.mxu0 %v1208
    %1538 = vmatprep.subr.bf16.mxu0 %v1225
    %1539 = vmatpush1.bf16.msra.mxu0 %v1224
    %1540 = vmatprep.subr.bf16.mxu0 0
    %1541 = vmatpush1.bf16.msra.mxu0 0
    %1542 = vmatprep.subr.bf16.mxu0 0
    %1543 = vmatpush1.bf16.msra.mxu0 0
    %1544 = vmatprep.subr.bf16.mxu0 0
    %1545 = vmatpush1.bf16.msra.mxu0 0
    %1546 = vmatprep.subr.bf16.mxu0 0
    %1547 = vmatpush1.bf16.msra.mxu0 0
    %1548 = vmatprep.mubr.bf16.mxu0 %v1432
    %1549 = vmatmul.mubr.bf16.gmra.mrb[0].mxu0 %v458
    %v1550 = vpop.f32.mrb[0].mxu0
    %v1551 = vadd.f32 %v365, %v1550
    %v1552 = vpop.f32.mrb[0].mxu0
    %v1553 = vadd.f32 %v369, %v1552
    %v1554 = vpop.f32.mrb[0].mxu0
    %v1555 = vadd.f32 %v365, %v1554
    %v1556 = vpop.f32.mrb[0].mxu0
    %v1557 = vadd.f32 %v369, %v1556
    %1558 = vmatprep.mubr.bf16.mxu0 %v1435
    %1559 = vmatmul.mubr.bf16.gmra.mrb[0].mxu0 %v460
    %v1560 = vpop.f32.mrb[0].mxu0
    %v1561 = vadd.f32 %v365, %v1560
    %v1562 = vpop.f32.mrb[0].mxu0
    %v1563 = vadd.f32 %v369, %v1562
    %v1564 = vpop.f32.mrb[0].mxu0
    %v1565 = vadd.f32 %v365, %v1564
    %v1566 = vpop.f32.mrb[0].mxu0
    %v1567 = vadd.f32 %v369, %v1566
    %1568 = vmatprep.mubr.bf16.mxu0 %v1438
    %1569 = vmatmul.mubr.bf16.gmra.mrb[0].mxu0 %v462
    %v1570 = vpop.f32.mrb[0].mxu0
    %v1571 = vadd.f32 %v365, %v1570
    %v1572 = vpop.f32.mrb[0].mxu0
    %v1573 = vadd.f32 %v369, %v1572
    %v1574 = vpop.f32.mrb[0].mxu0
    %v1575 = vadd.f32 %v365, %v1574
    %v1576 = vpop.f32.mrb[0].mxu0
    %v1577 = vadd.f32 %v369, %v1576
    %1578 = vmatprep.mubr.bf16.mxu0 %v1441
    %1579 = vmatmul.mubr.bf16.gmra.mrb[0].mxu0 %v464
    %v1580 = vpop.f32.mrb[0].mxu0
    %v1581 = vadd.f32 %v365, %v1580
    %v1582 = vpop.f32.mrb[0].mxu0
    %v1583 = vadd.f32 %v369, %v1582
    %v1584 = vpop.f32.mrb[0].mxu0
    %v1585 = vadd.f32 %v365, %v1584
    %v1586 = vpop.f32.mrb[0].mxu0
    %v1587 = vadd.f32 %v369, %v1586
    %1588 = vdwg.mxu0
    %1589 = vmatprep.subr.bf16.mxu0 %v1051
    %1590 = vmatpush1.bf16.msra.mxu0 %v1050
    %1591 = vmatprep.subr.bf16.mxu0 %v1067
    %1592 = vmatpush1.bf16.msra.mxu0 %v1066
    %1593 = vmatprep.subr.bf16.mxu0 %v1083
    %1594 = vmatpush1.bf16.msra.mxu0 %v1082
    %1595 = vmatprep.subr.bf16.mxu0 %v1099
    %1596 = vmatpush1.bf16.msra.mxu0 %v1098
    %1597 = vmatprep.subr.bf16.mxu0 %v1115
    %1598 = vmatpush1.bf16.msra.mxu0 %v1114
    %1599 = vmatprep.subr.bf16.mxu0 %v1131
    %1600 = vmatpush1.bf16.msra.mxu0 %v1130
    %1601 = vmatprep.subr.bf16.mxu0 %v1147
    %1602 = vmatpush1.bf16.msra.mxu0 %v1146
    %1603 = vmatprep.subr.bf16.mxu0 %v1163
    %1604 = vmatpush1.bf16.msra.mxu0 %v1162
    %1605 = vmatprep.subr.bf16.mxu0 %v1179
    %1606 = vmatpush1.bf16.msra.mxu0 %v1178
    %1607 = vmatprep.subr.bf16.mxu0 %v1195
    %1608 = vmatpush1.bf16.msra.mxu0 %v1194
    %1609 = vmatprep.subr.bf16.mxu0 %v1211
    %1610 = vmatpush1.bf16.msra.mxu0 %v1210
    %1611 = vmatprep.subr.bf16.mxu0 %v1227
    %1612 = vmatpush1.bf16.msra.mxu0 %v1226
    %1613 = vmatprep.subr.bf16.mxu0 0
    %1614 = vmatpush1.bf16.msra.mxu0 0
    %1615 = vmatprep.subr.bf16.mxu0 0
    %1616 = vmatpush1.bf16.msra.mxu0 0
    %1617 = vmatprep.subr.bf16.mxu0 0
    %1618 = vmatpush1.bf16.msra.mxu0 0
    %1619 = vmatprep.subr.bf16.mxu0 0
    %1620 = vmatpush1.bf16.msra.mxu0 0
    %1621 = vmatprep.mubr.bf16.mxu0 %v1432
    %1622 = vmatmul.mubr.bf16.gmra.mrb[0].mxu0 %v458
    %v1623 = vpop.f32.mrb[0].mxu0
    %v1624 = vadd.f32 %v373, %v1623
    %v1625 = vpop.f32.mrb[0].mxu0
    %v1626 = vadd.f32 %v377, %v1625
    %v1627 = vpop.f32.mrb[0].mxu0
    %v1628 = vadd.f32 %v373, %v1627
    %v1629 = vpop.f32.mrb[0].mxu0
    %v1630 = vadd.f32 %v377, %v1629
    %1631 = vmatprep.mubr.bf16.mxu0 %v1435
    %1632 = vmatmul.mubr.bf16.gmra.mrb[0].mxu0 %v460
    %v1633 = vpop.f32.mrb[0].mxu0
    %v1634 = vadd.f32 %v373, %v1633
    %v1635 = vpop.f32.mrb[0].mxu0
    %v1636 = vadd.f32 %v377, %v1635
    %v1637 = vpop.f32.mrb[0].mxu0
    %v1638 = vadd.f32 %v373, %v1637
    %v1639 = vpop.f32.mrb[0].mxu0
    %v1640 = vadd.f32 %v377, %v1639
    %1641 = vmatprep.mubr.bf16.mxu0 %v1438
    %1642 = vmatmul.mubr.bf16.gmra.mrb[0].mxu0 %v462
    %v1643 = vpop.f32.mrb[0].mxu0
    %v1644 = vadd.f32 %v373, %v1643
    %v1645 = vpop.f32.mrb[0].mxu0
    %v1646 = vadd.f32 %v377, %v1645
    %v1647 = vpop.f32.mrb[0].mxu0
    %v1648 = vadd.f32 %v373, %v1647
    %v1649 = vpop.f32.mrb[0].mxu0
    %v1650 = vadd.f32 %v377, %v1649
    %1651 = vmatprep.mubr.bf16.mxu0 %v1441
    %1652 = vmatmul.mubr.bf16.gmra.mrb[0].mxu0 %v464
    %v1653 = vpop.f32.mrb[0].mxu0
    %v1654 = vadd.f32 %v373, %v1653
    %v1655 = vpop.f32.mrb[0].mxu0
    %v1656 = vadd.f32 %v377, %v1655
    %v1657 = vpop.f32.mrb[0].mxu0
    %v1658 = vadd.f32 %v373, %v1657
    %v1659 = vpop.f32.mrb[0].mxu0
    %v1660 = vadd.f32 %v377, %v1659
    %1661 = vdwg.mxu0
    %1662 = vmatprep.subr.bf16.mxu0 %v1053
    %1663 = vmatpush1.bf16.msra.mxu0 %v1052
    %1664 = vmatprep.subr.bf16.mxu0 %v1069
    %1665 = vmatpush1.bf16.msra.mxu0 %v1068
    %1666 = vmatprep.subr.bf16.mxu0 %v1085
    %1667 = vmatpush1.bf16.msra.mxu0 %v1084
    %1668 = vmatprep.subr.bf16.mxu0 %v1101
    %1669 = vmatpush1.bf16.msra.mxu0 %v1100
    %1670 = vmatprep.subr.bf16.mxu0 %v1117
    %1671 = vmatpush1.bf16.msra.mxu0 %v1116
    %1672 = vmatprep.subr.bf16.mxu0 %v1133
    %1673 = vmatpush1.bf16.msra.mxu0 %v1132
    %1674 = vmatprep.subr.bf16.mxu0 %v1149
    %1675 = vmatpush1.bf16.msra.mxu0 %v1148
    %1676 = vmatprep.subr.bf16.mxu0 %v1165
    %1677 = vmatpush1.bf16.msra.mxu0 %v1164
    %1678 = vmatprep.subr.bf16.mxu0 %v1181
    %1679 = vmatpush1.bf16.msra.mxu0 %v1180
    %1680 = vmatprep.subr.bf16.mxu0 %v1197
    %1681 = vmatpush1.bf16.msra.mxu0 %v1196
    %1682 = vmatprep.subr.bf16.mxu0 %v1213
    %1683 = vmatpush1.bf16.msra.mxu0 %v1212
    %1684 = vmatprep.subr.bf16.mxu0 %v1229
    %1685 = vmatpush1.bf16.msra.mxu0 %v1228
    %1686 = vmatprep.subr.bf16.mxu0 0
    %1687 = vmatpush1.bf16.msra.mxu0 0
    %1688 = vmatprep.subr.bf16.mxu0 0
    %1689 = vmatpush1.bf16.msra.mxu0 0
    %1690 = vmatprep.subr.bf16.mxu0 0
    %1691 = vmatpush1.bf16.msra.mxu0 0
    %1692 = vmatprep.subr.bf16.mxu0 0
    %1693 = vmatpush1.bf16.msra.mxu0 0
    %1694 = vmatprep.mubr.bf16.mxu0 %v1432
    %1695 = vmatmul.mubr.bf16.gmra.mrb[0].mxu0 %v458
    %v1696 = vpop.f32.mrb[0].mxu0
    %v1697 = vadd.f32 %v381, %v1696
    %v1698 = vpop.f32.mrb[0].mxu0
    %v1699 = vadd.f32 %v385, %v1698
    %v1700 = vpop.f32.mrb[0].mxu0
    %v1701 = vadd.f32 %v381, %v1700
    %v1702 = vpop.f32.mrb[0].mxu0
    %v1703 = vadd.f32 %v385, %v1702
    %1704 = vmatprep.mubr.bf16.mxu0 %v1435
    %1705 = vmatmul.mubr.bf16.gmra.mrb[0].mxu0 %v460
    %v1706 = vpop.f32.mrb[0].mxu0
    %v1707 = vadd.f32 %v381, %v1706
    %v1708 = vpop.f32.mrb[0].mxu0
    %v1709 = vadd.f32 %v385, %v1708
    %v1710 = vpop.f32.mrb[0].mxu0
    %v1711 = vadd.f32 %v381, %v1710
    %v1712 = vpop.f32.mrb[0].mxu0
    %v1713 = vadd.f32 %v385, %v1712
    %1714 = vmatprep.mubr.bf16.mxu0 %v1438
    %1715 = vmatmul.mubr.bf16.gmra.mrb[0].mxu0 %v462
    %v1716 = vpop.f32.mrb[0].mxu0
    %v1717 = vadd.f32 %v381, %v1716
    %v1718 = vpop.f32.mrb[0].mxu0
    %v1719 = vadd.f32 %v385, %v1718
    %v1720 = vpop.f32.mrb[0].mxu0
    %v1721 = vadd.f32 %v381, %v1720
    %v1722 = vpop.f32.mrb[0].mxu0
    %v1723 = vadd.f32 %v385, %v1722
    %1724 = vmatprep.mubr.bf16.mxu0 %v1441
    %1725 = vmatmul.mubr.bf16.gmra.mrb[0].mxu0 %v464
    %v1726 = vpop.f32.mrb[0].mxu0
    %v1727 = vadd.f32 %v381, %v1726
    %v1728 = vpop.f32.mrb[0].mxu0
    %v1729 = vadd.f32 %v385, %v1728
    %v1730 = vpop.f32.mrb[0].mxu0
    %v1731 = vadd.f32 %v381, %v1730
    %v1732 = vpop.f32.mrb[0].mxu0
    %v1733 = vadd.f32 %v385, %v1732
    %1734 = vdwg.mxu0
    %1735 = vmatprep.subr.bf16.mxu0 %v1055
    %1736 = vmatpush1.bf16.msra.mxu0 %v1054
    %1737 = vmatprep.subr.bf16.mxu0 %v1071
    %1738 = vmatpush1.bf16.msra.mxu0 %v1070
    %1739 = vmatprep.subr.bf16.mxu0 %v1087
    %1740 = vmatpush1.bf16.msra.mxu0 %v1086
    %1741 = vmatprep.subr.bf16.mxu0 %v1103
    %1742 = vmatpush1.bf16.msra.mxu0 %v1102
    %1743 = vmatprep.subr.bf16.mxu0 %v1119
    %1744 = vmatpush1.bf16.msra.mxu0 %v1118
    %1745 = vmatprep.subr.bf16.mxu0 %v1135
    %1746 = vmatpush1.bf16.msra.mxu0 %v1134
    %1747 = vmatprep.subr.bf16.mxu0 %v1151
    %1748 = vmatpush1.bf16.msra.mxu0 %v1150
    %1749 = vmatprep.subr.bf16.mxu0 %v1167
    %1750 = vmatpush1.bf16.msra.mxu0 %v1166
    %1751 = vmatprep.subr.bf16.mxu0 %v1183
    %1752 = vmatpush1.bf16.msra.mxu0 %v1182
    %1753 = vmatprep.subr.bf16.mxu0 %v1199
    %1754 = vmatpush1.bf16.msra.mxu0 %v1198
    %1755 = vmatprep.subr.bf16.mxu0 %v1215
    %1756 = vmatpush1.bf16.msra.mxu0 %v1214
    %1757 = vmatprep.subr.bf16.mxu0 %v1231
    %1758 = vmatpush1.bf16.msra.mxu0 %v1230
    %1759 = vmatprep.subr.bf16.mxu0 0
    %1760 = vmatpush1.bf16.msra.mxu0 0
    %1761 = vmatprep.subr.bf16.mxu0 0
    %1762 = vmatpush1.bf16.msra.mxu0 0
    %1763 = vmatprep.subr.bf16.mxu0 0
    %1764 = vmatpush1.bf16.msra.mxu0 0
    %1765 = vmatprep.subr.bf16.mxu0 0
    %1766 = vmatpush1.bf16.msra.mxu0 0
    %1767 = vmatprep.mubr.bf16.mxu0 %v1432
    %1768 = vmatmul.mubr.bf16.gmra.mrb[0].mxu0 %v458
    %v1769 = vpop.f32.mrb[0].mxu0
    %v1770 = vadd.f32 %v389, %v1769
    %v1771 = vpop.f32.mrb[0].mxu0
    %v1772 = vadd.f32 %v393, %v1771
    %v1773 = vpop.f32.mrb[0].mxu0
    %v1774 = vadd.f32 %v389, %v1773
    %v1775 = vpop.f32.mrb[0].mxu0
    %v1776 = vadd.f32 %v393, %v1775
    %1777 = vmatprep.mubr.bf16.mxu0 %v1435
    %1778 = vmatmul.mubr.bf16.gmra.mrb[0].mxu0 %v460
    %v1779 = vpop.f32.mrb[0].mxu0
    %v1780 = vadd.f32 %v389, %v1779
    %v1781 = vpop.f32.mrb[0].mxu0
    %v1782 = vadd.f32 %v393, %v1781
    %v1783 = vpop.f32.mrb[0].mxu0
    %v1784 = vadd.f32 %v389, %v1783
    %v1785 = vpop.f32.mrb[0].mxu0
    %v1786 = vadd.f32 %v393, %v1785
    %1787 = vmatprep.mubr.bf16.mxu0 %v1438
    %1788 = vmatmul.mubr.bf16.gmra.mrb[0].mxu0 %v462
    %v1789 = vpop.f32.mrb[0].mxu0
    %v1790 = vadd.f32 %v389, %v1789
    %v1791 = vpop.f32.mrb[0].mxu0
    %v1792 = vadd.f32 %v393, %v1791
    %v1793 = vpop.f32.mrb[0].mxu0
    %v1794 = vadd.f32 %v389, %v1793
    %v1795 = vpop.f32.mrb[0].mxu0
    %v1796 = vadd.f32 %v393, %v1795
    %1797 = vmatprep.mubr.bf16.mxu0 %v1441
    %1798 = vmatmul.mubr.bf16.gmra.mrb[0].mxu0 %v464
    %v1799 = vpop.f32.mrb[0].mxu0
    %v1800 = vadd.f32 %v389, %v1799
    %v1801 = vpop.f32.mrb[0].mxu0
    %v1802 = vadd.f32 %v393, %v1801
    %v1803 = vpop.f32.mrb[0].mxu0
    %v1804 = vadd.f32 %v389, %v1803
    %v1805 = vpop.f32.mrb[0].mxu0
    %v1806 = vadd.f32 %v393, %v1805
    %1807 = vdwg.mxu0
    %1808 = vmatprep.subr.bf16.mxu0 %v1057
    %1809 = vmatpush1.bf16.msra.mxu0 %v1056
    %1810 = vmatprep.subr.bf16.mxu0 %v1073
    %1811 = vmatpush1.bf16.msra.mxu0 %v1072
    %1812 = vmatprep.subr.bf16.mxu0 %v1089
    %1813 = vmatpush1.bf16.msra.mxu0 %v1088
    %1814 = vmatprep.subr.bf16.mxu0 %v1105
    %1815 = vmatpush1.bf16.msra.mxu0 %v1104
    %1816 = vmatprep.subr.bf16.mxu0 %v1121
    %1817 = vmatpush1.bf16.msra.mxu0 %v1120
    %1818 = vmatprep.subr.bf16.mxu0 %v1137
    %1819 = vmatpush1.bf16.msra.mxu0 %v1136
    %1820 = vmatprep.subr.bf16.mxu0 %v1153
    %1821 = vmatpush1.bf16.msra.mxu0 %v1152
    %1822 = vmatprep.subr.bf16.mxu0 %v1169
    %1823 = vmatpush1.bf16.msra.mxu0 %v1168
    %1824 = vmatprep.subr.bf16.mxu0 %v1185
    %1825 = vmatpush1.bf16.msra.mxu0 %v1184
    %1826 = vmatprep.subr.bf16.mxu0 %v1201
    %1827 = vmatpush1.bf16.msra.mxu0 %v1200
    %1828 = vmatprep.subr.bf16.mxu0 %v1217
    %1829 = vmatpush1.bf16.msra.mxu0 %v1216
    %1830 = vmatprep.subr.bf16.mxu0 %v1233
    %1831 = vmatpush1.bf16.msra.mxu0 %v1232
    %1832 = vmatprep.subr.bf16.mxu0 0
    %1833 = vmatpush1.bf16.msra.mxu0 0
    %1834 = vmatprep.subr.bf16.mxu0 0
    %1835 = vmatpush1.bf16.msra.mxu0 0
    %1836 = vmatprep.subr.bf16.mxu0 0
    %1837 = vmatpush1.bf16.msra.mxu0 0
    %1838 = vmatprep.subr.bf16.mxu0 0
    %1839 = vmatpush1.bf16.msra.mxu0 0
    %1840 = vmatprep.mubr.bf16.mxu0 %v1432
    %1841 = vmatmul.mubr.bf16.gmra.mrb[0].mxu0 %v458
    %v1842 = vpop.f32.mrb[0].mxu0
    %v1843 = vadd.f32 %v397, %v1842
    %v1844 = vpop.f32.mrb[0].mxu0
    %v1845 = vadd.f32 %v401, %v1844
    %v1846 = vpop.f32.mrb[0].mxu0
    %v1847 = vadd.f32 %v397, %v1846
    %v1848 = vpop.f32.mrb[0].mxu0
    %v1849 = vadd.f32 %v401, %v1848
    %1850 = vmatprep.mubr.bf16.mxu0 %v1435
    %1851 = vmatmul.mubr.bf16.gmra.mrb[0].mxu0 %v460
    %v1852 = vpop.f32.mrb[0].mxu0
    %v1853 = vadd.f32 %v397, %v1852
    %v1854 = vpop.f32.mrb[0].mxu0
    %v1855 = vadd.f32 %v401, %v1854
    %v1856 = vpop.f32.mrb[0].mxu0
    %v1857 = vadd.f32 %v397, %v1856
    %v1858 = vpop.f32.mrb[0].mxu0
    %v1859 = vadd.f32 %v401, %v1858
    %1860 = vmatprep.mubr.bf16.mxu0 %v1438
    %1861 = vmatmul.mubr.bf16.gmra.mrb[0].mxu0 %v462
    %v1862 = vpop.f32.mrb[0].mxu0
    %v1863 = vadd.f32 %v397, %v1862
    %v1864 = vpop.f32.mrb[0].mxu0
    %v1865 = vadd.f32 %v401, %v1864
    %v1866 = vpop.f32.mrb[0].mxu0
    %v1867 = vadd.f32 %v397, %v1866
    %v1868 = vpop.f32.mrb[0].mxu0
    %v1869 = vadd.f32 %v401, %v1868
    %1870 = vmatprep.mubr.bf16.mxu0 %v1441
    %1871 = vmatmul.mubr.bf16.gmra.mrb[0].mxu0 %v464
    %v1872 = vpop.f32.mrb[0].mxu0
    %v1873 = vadd.f32 %v397, %v1872
    %v1874 = vpop.f32.mrb[0].mxu0
    %v1875 = vadd.f32 %v401, %v1874
    %v1876 = vpop.f32.mrb[0].mxu0
    %v1877 = vadd.f32 %v397, %v1876
    %v1878 = vpop.f32.mrb[0].mxu0
    %v1879 = vadd.f32 %v401, %v1878
    %1880 = vdwg.mxu0
    %1881 = vmatprep.subr.bf16.mxu0 %v1059
    %1882 = vmatpush1.bf16.msra.mxu0 %v1058
    %1883 = vmatprep.subr.bf16.mxu0 %v1075
    %1884 = vmatpush1.bf16.msra.mxu0 %v1074
    %1885 = vmatprep.subr.bf16.mxu0 %v1091
    %1886 = vmatpush1.bf16.msra.mxu0 %v1090
    %1887 = vmatprep.subr.bf16.mxu0 %v1107
    %1888 = vmatpush1.bf16.msra.mxu0 %v1106
    %1889 = vmatprep.subr.bf16.mxu0 %v1123
    %1890 = vmatpush1.bf16.msra.mxu0 %v1122
    %1891 = vmatprep.subr.bf16.mxu0 %v1139
    %1892 = vmatpush1.bf16.msra.mxu0 %v1138
    %1893 = vmatprep.subr.bf16.mxu0 %v1155
    %1894 = vmatpush1.bf16.msra.mxu0 %v1154
    %1895 = vmatprep.subr.bf16.mxu0 %v1171
    %1896 = vmatpush1.bf16.msra.mxu0 %v1170
    %1897 = vmatprep.subr.bf16.mxu0 %v1187
    %1898 = vmatpush1.bf16.msra.mxu0 %v1186
    %1899 = vmatprep.subr.bf16.mxu0 %v1203
    %1900 = vmatpush1.bf16.msra.mxu0 %v1202
    %1901 = vmatprep.subr.bf16.mxu0 %v1219
    %1902 = vmatpush1.bf16.msra.mxu0 %v1218
    %1903 = vmatprep.subr.bf16.mxu0 %v1235
    %1904 = vmatpush1.bf16.msra.mxu0 %v1234
    %1905 = vmatprep.subr.bf16.mxu0 0
    %1906 = vmatpush1.bf16.msra.mxu0 0
    %1907 = vmatprep.subr.bf16.mxu0 0
    %1908 = vmatpush1.bf16.msra.mxu0 0
    %1909 = vmatprep.subr.bf16.mxu0 0
    %1910 = vmatpush1.bf16.msra.mxu0 0
    %1911 = vmatprep.subr.bf16.mxu0 0
    %1912 = vmatpush1.bf16.msra.mxu0 0
    %1913 = vmatprep.mubr.bf16.mxu0 %v1432
    %1914 = vmatmul.mubr.bf16.gmra.mrb[0].mxu0 %v458
    %v1915 = vpop.f32.mrb[0].mxu0
    %v1916 = vadd.f32 %v405, %v1915
    %v1917 = vpop.f32.mrb[0].mxu0
    %v1918 = vadd.f32 %v409, %v1917
    %v1919 = vpop.f32.mrb[0].mxu0
    %v1920 = vadd.f32 %v405, %v1919
    %v1921 = vpop.f32.mrb[0].mxu0
    %v1922 = vadd.f32 %v409, %v1921
    %1923 = vmatprep.mubr.bf16.mxu0 %v1435
    %1924 = vmatmul.mubr.bf16.gmra.mrb[0].mxu0 %v460
    %v1925 = vpop.f32.mrb[0].mxu0
    %v1926 = vadd.f32 %v405, %v1925
    %v1927 = vpop.f32.mrb[0].mxu0
    %v1928 = vadd.f32 %v409, %v1927
    %v1929 = vpop.f32.mrb[0].mxu0
    %v1930 = vadd.f32 %v405, %v1929
    %v1931 = vpop.f32.mrb[0].mxu0
    %v1932 = vadd.f32 %v409, %v1931
    %1933 = vmatprep.mubr.bf16.mxu0 %v1438
    %1934 = vmatmul.mubr.bf16.gmra.mrb[0].mxu0 %v462
    %v1935 = vpop.f32.mrb[0].mxu0
    %v1936 = vadd.f32 %v405, %v1935
    %v1937 = vpop.f32.mrb[0].mxu0
    %v1938 = vadd.f32 %v409, %v1937
    %v1939 = vpop.f32.mrb[0].mxu0
    %v1940 = vadd.f32 %v405, %v1939
    %v1941 = vpop.f32.mrb[0].mxu0
    %v1942 = vadd.f32 %v409, %v1941
    %1943 = vmatprep.mubr.bf16.mxu0 %v1441
    %1944 = vmatmul.mubr.bf16.gmra.mrb[0].mxu0 %v464
    %v1945 = vpop.f32.mrb[0].mxu0
    %v1946 = vadd.f32 %v405, %v1945
    %v1947 = vpop.f32.mrb[0].mxu0
    %v1948 = vadd.f32 %v409, %v1947
    %v1949 = vpop.f32.mrb[0].mxu0
    %v1950 = vadd.f32 %v405, %v1949
    %v1951 = vpop.f32.mrb[0].mxu0
    %v1952 = vadd.f32 %v409, %v1951
    %1953 = vdwg.mxu0
    %1954 = vmatprep.subr.bf16.mxu0 %v1061
    %1955 = vmatpush1.bf16.msra.mxu0 %v1060
    %1956 = vmatprep.subr.bf16.mxu0 %v1077
    %1957 = vmatpush1.bf16.msra.mxu0 %v1076
    %1958 = vmatprep.subr.bf16.mxu0 %v1093
    %1959 = vmatpush1.bf16.msra.mxu0 %v1092
    %1960 = vmatprep.subr.bf16.mxu0 %v1109
    %1961 = vmatpush1.bf16.msra.mxu0 %v1108
    %1962 = vmatprep.subr.bf16.mxu0 %v1125
    %1963 = vmatpush1.bf16.msra.mxu0 %v1124
    %1964 = vmatprep.subr.bf16.mxu0 %v1141
    %1965 = vmatpush1.bf16.msra.mxu0 %v1140
    %1966 = vmatprep.subr.bf16.mxu0 %v1157
    %1967 = vmatpush1.bf16.msra.mxu0 %v1156
    %1968 = vmatprep.subr.bf16.mxu0 %v1173
    %1969 = vmatpush1.bf16.msra.mxu0 %v1172
    %1970 = vmatprep.subr.bf16.mxu0 %v1189
    %1971 = vmatpush1.bf16.msra.mxu0 %v1188
    %1972 = vmatprep.subr.bf16.mxu0 %v1205
    %1973 = vmatpush1.bf16.msra.mxu0 %v1204
    %1974 = vmatprep.subr.bf16.mxu0 %v1221
    %1975 = vmatpush1.bf16.msra.mxu0 %v1220
    %1976 = vmatprep.subr.bf16.mxu0 %v1237
    %1977 = vmatpush1.bf16.msra.mxu0 %v1236
    %1978 = vmatprep.subr.bf16.mxu0 0
    %1979 = vmatpush1.bf16.msra.mxu0 0
    %1980 = vmatprep.subr.bf16.mxu0 0
    %1981 = vmatpush1.bf16.msra.mxu0 0
    %1982 = vmatprep.subr.bf16.mxu0 0
    %1983 = vmatpush1.bf16.msra.mxu0 0
    %1984 = vmatprep.subr.bf16.mxu0 0
    %1985 = vmatpush1.bf16.msra.mxu0 0
    %1986 = vmatprep.mubr.bf16.mxu0 %v1432
    %1987 = vmatmul.mubr.bf16.gmra.mrb[0].mxu0 %v458
    %v1988 = vpop.f32.mrb[0].mxu0
    %v1989 = vadd.f32 %v413, %v1988
    %v1990 = vpop.f32.mrb[0].mxu0
    %v1991 = vadd.f32 %v417, %v1990
    %v1992 = vpop.f32.mrb[0].mxu0
    %v1993 = vadd.f32 %v413, %v1992
    %v1994 = vpop.f32.mrb[0].mxu0
    %v1995 = vadd.f32 %v417, %v1994
    %1996 = vmatprep.mubr.bf16.mxu0 %v1435
    %1997 = vmatmul.mubr.bf16.gmra.mrb[0].mxu0 %v460
    %v1998 = vpop.f32.mrb[0].mxu0
    %v1999 = vadd.f32 %v413, %v1998
    %v2000 = vpop.f32.mrb[0].mxu0
    %v2001 = vadd.f32 %v417, %v2000
    %v2002 = vpop.f32.mrb[0].mxu0
    %v2003 = vadd.f32 %v413, %v2002
    %v2004 = vpop.f32.mrb[0].mxu0
    %v2005 = vadd.f32 %v417, %v2004
    %2006 = vmatprep.mubr.bf16.mxu0 %v1438
    %2007 = vmatmul.mubr.bf16.gmra.mrb[0].mxu0 %v462
    %v2008 = vpop.f32.mrb[0].mxu0
    %v2009 = vadd.f32 %v413, %v2008
    %v2010 = vpop.f32.mrb[0].mxu0
    %v2011 = vadd.f32 %v417, %v2010
    %v2012 = vpop.f32.mrb[0].mxu0
    %v2013 = vadd.f32 %v413, %v2012
    %v2014 = vpop.f32.mrb[0].mxu0
    %v2015 = vadd.f32 %v417, %v2014
    %2016 = vmatprep.mubr.bf16.mxu0 %v1441
    %2017 = vmatmul.mubr.bf16.gmra.mrb[0].mxu0 %v464
    %v2018 = vpop.f32.mrb[0].mxu0
    %v2019 = vadd.f32 %v413, %v2018
    %v2020 = vpop.f32.mrb[0].mxu0
    %v2021 = vadd.f32 %v417, %v2020
    %v2022 = vpop.f32.mrb[0].mxu0
    %v2023 = vadd.f32 %v413, %v2022
    %v2024 = vpop.f32.mrb[0].mxu0
    %v2025 = vadd.f32 %v417, %v2024
    %2026 = vdwg.mxu0
    %v2027 = vmax.f32 %v1478, 0.0
    %v2028 = vmax.f32 %v1480, 0.0
    %v2029 = vmax.f32 %v1551, 0.0
    %v2030 = vmax.f32 %v1553, 0.0
    %v2031 = vmax.f32 %v1624, 0.0
    %v2032 = vmax.f32 %v1626, 0.0
    %v2033 = vmax.f32 %v1697, 0.0
    %v2034 = vmax.f32 %v1699, 0.0
    %v2035 = vmax.f32 %v1770, 0.0
    %v2036 = vmax.f32 %v1772, 0.0
    %v2037 = vmax.f32 %v1843, 0.0
    %v2038 = vmax.f32 %v1845, 0.0
    %v2039 = vmax.f32 %v1916, 0.0
    %v2040 = vmax.f32 %v1918, 0.0
    %v2041 = vmax.f32 %v1989, 0.0
    %v2042 = vmax.f32 %v1991, 0.0
    %v2043 = vmax.f32 %v1482, 0.0
    %v2044 = vmax.f32 %v1484, 0.0
    %v2045 = vmax.f32 %v1555, 0.0
    %v2046 = vmax.f32 %v1557, 0.0
    %v2047 = vmax.f32 %v1628, 0.0
    %v2048 = vmax.f32 %v1630, 0.0
    %v2049 = vmax.f32 %v1701, 0.0
    %v2050 = vmax.f32 %v1703, 0.0
    %v2051 = vmax.f32 %v1774, 0.0
    %v2052 = vmax.f32 %v1776, 0.0
    %v2053 = vmax.f32 %v1847, 0.0
    %v2054 = vmax.f32 %v1849, 0.0
    %v2055 = vmax.f32 %v1920, 0.0
    %v2056 = vmax.f32 %v1922, 0.0
    %v2057 = vmax.f32 %v1993, 0.0
    %v2058 = vmax.f32 %v1995, 0.0
    %v2059 = vmax.f32 %v1488, 0.0
    %v2060 = vmax.f32 %v1490, 0.0
    %v2061 = vmax.f32 %v1561, 0.0
    %v2062 = vmax.f32 %v1563, 0.0
    %v2063 = vmax.f32 %v1634, 0.0
    %v2064 = vmax.f32 %v1636, 0.0
    %v2065 = vmax.f32 %v1707, 0.0
    %v2066 = vmax.f32 %v1709, 0.0
    %v2067 = vmax.f32 %v1780, 0.0
    %v2068 = vmax.f32 %v1782, 0.0
    %v2069 = vmax.f32 %v1853, 0.0
    %v2070 = vmax.f32 %v1855, 0.0
    %v2071 = vmax.f32 %v1926, 0.0
    %v2072 = vmax.f32 %v1928, 0.0
    %v2073 = vmax.f32 %v1999, 0.0
    %v2074 = vmax.f32 %v2001, 0.0
    %v2075 = vmax.f32 %v1492, 0.0
    %v2076 = vmax.f32 %v1494, 0.0
    %v2077 = vmax.f32 %v1565, 0.0
    %v2078 = vmax.f32 %v1567, 0.0
    %v2079 = vmax.f32 %v1638, 0.0
    %v2080 = vmax.f32 %v1640, 0.0
    %v2081 = vmax.f32 %v1711, 0.0
    %v2082 = vmax.f32 %v1713, 0.0
    %v2083 = vmax.f32 %v1784, 0.0
    %v2084 = vmax.f32 %v1786, 0.0
    %v2085 = vmax.f32 %v1857, 0.0
    %v2086 = vmax.f32 %v1859, 0.0
    %v2087 = vmax.f32 %v1930, 0.0
    %v2088 = vmax.f32 %v1932, 0.0
    %v2089 = vmax.f32 %v2003, 0.0
    %v2090 = vmax.f32 %v2005, 0.0
    %v2091 = vmax.f32 %v1498, 0.0
    %v2092 = vmax.f32 %v1500, 0.0
    %v2093 = vmax.f32 %v1571, 0.0
    %v2094 = vmax.f32 %v1573, 0.0
    %v2095 = vmax.f32 %v1644, 0.0
    %v2096 = vmax.f32 %v1646, 0.0
    %v2097 = vmax.f32 %v1717, 0.0
    %v2098 = vmax.f32 %v1719, 0.0
    %v2099 = vmax.f32 %v1790, 0.0
    %v2100 = vmax.f32 %v1792, 0.0
    %v2101 = vmax.f32 %v1863, 0.0
    %v2102 = vmax.f32 %v1865, 0.0
    %v2103 = vmax.f32 %v1936, 0.0
    %v2104 = vmax.f32 %v1938, 0.0
    %v2105 = vmax.f32 %v2009, 0.0
    %v2106 = vmax.f32 %v2011, 0.0
    %v2107 = vmax.f32 %v1502, 0.0
    %v2108 = vmax.f32 %v1504, 0.0
    %v2109 = vmax.f32 %v1575, 0.0
    %v2110 = vmax.f32 %v1577, 0.0
    %v2111 = vmax.f32 %v1648, 0.0
    %v2112 = vmax.f32 %v1650, 0.0
    %v2113 = vmax.f32 %v1721, 0.0
    %v2114 = vmax.f32 %v1723, 0.0
    %v2115 = vmax.f32 %v1794, 0.0
    %v2116 = vmax.f32 %v1796, 0.0
    %v2117 = vmax.f32 %v1867, 0.0
    %v2118 = vmax.f32 %v1869, 0.0
    %v2119 = vmax.f32 %v1940, 0.0
    %v2120 = vmax.f32 %v1942, 0.0
    %v2121 = vmax.f32 %v2013, 0.0
    %v2122 = vmax.f32 %v2015, 0.0
    %v2123 = vmax.f32 %v1508, 0.0
    %v2124 = vmax.f32 %v1510, 0.0
    %v2125 = vmax.f32 %v1581, 0.0
    %v2126 = vmax.f32 %v1583, 0.0
    %v2127 = vmax.f32 %v1654, 0.0
    %v2128 = vmax.f32 %v1656, 0.0
    %v2129 = vmax.f32 %v1727, 0.0
    %v2130 = vmax.f32 %v1729, 0.0
    %v2131 = vmax.f32 %v1800, 0.0
    %v2132 = vmax.f32 %v1802, 0.0
    %v2133 = vmax.f32 %v1873, 0.0
    %v2134 = vmax.f32 %v1875, 0.0
    %v2135 = vmax.f32 %v1946, 0.0
    %v2136 = vmax.f32 %v1948, 0.0
    %v2137 = vmax.f32 %v2019, 0.0
    %v2138 = vmax.f32 %v2021, 0.0
    %v2139 = vmax.f32 %v1512, 0.0
    %v2140 = vmax.f32 %v1514, 0.0
    %v2141 = vmax.f32 %v1585, 0.0
    %v2142 = vmax.f32 %v1587, 0.0
    %v2143 = vmax.f32 %v1658, 0.0
    %v2144 = vmax.f32 %v1660, 0.0
    %v2145 = vmax.f32 %v1731, 0.0
    %v2146 = vmax.f32 %v1733, 0.0
    %v2147 = vmax.f32 %v1804, 0.0
    %v2148 = vmax.f32 %v1806, 0.0
    %v2149 = vmax.f32 %v1877, 0.0
    %v2150 = vmax.f32 %v1879, 0.0
    %v2151 = vmax.f32 %v1950, 0.0
    %v2152 = vmax.f32 %v1952, 0.0
    %v2153 = vmax.f32 %v2023, 0.0
    %v2154 = vmax.f32 %v2025, 0.0
    %v2155 = vld [vmem:[%s1] sm:$0xf]
    %v2157 = vsel %vm1430, %v2155, 0
    %2159 = vmatprep.subr.mxu0 %v2028
    %2160 = vmatpush1.msra.mxu0 %v2027
    %2161 = vmatprep.subr.mxu0 %v2044
    %2162 = vmatpush1.msra.mxu0 %v2043
    %2163 = vmatprep.subr.mxu0 %v2060
    %2164 = vmatpush1.msra.mxu0 %v2059
    %2165 = vmatprep.subr.mxu0 %v2076
    %2166 = vmatpush1.msra.mxu0 %v2075
    %2167 = vmatprep.subr.mxu0 %v2092
    %2168 = vmatpush1.msra.mxu0 %v2091
    %2169 = vmatprep.subr.mxu0 %v2108
    %2170 = vmatpush1.msra.mxu0 %v2107
    %2171 = vmatprep.subr.mxu0 %v2124
    %2172 = vmatpush1.msra.mxu0 %v2123
    %2173 = vmatprep.subr.mxu0 %v2140
    %2174 = vmatpush1.msra.mxu0 %v2139
    %2175 = vmatprep.subr.mxu0 0.0
    %2176 = vmatpush1.msra.mxu0 0.0
    %2177 = vmatprep.subr.mxu0 0.0
    %2178 = vmatpush1.msra.mxu0 0.0
    %2179 = vmatprep.subr.mxu0 0.0
    %2180 = vmatpush1.msra.mxu0 0.0
    %2181 = vmatprep.subr.mxu0 0.0
    %2182 = vmatpush1.msra.mxu0 0.0
    %2183 = vmatprep.subr.mxu0 0.0
    %2184 = vmatpush1.msra.mxu0 0.0
    %2185 = vmatprep.subr.mxu0 0.0
    %2186 = vmatpush1.msra.mxu0 0.0
    %2187 = vmatprep.subr.mxu0 0.0
    %2188 = vmatpush1.msra.mxu0 0.0
    %2189 = vmatprep.subr.mxu0 0.0
    %2190 = vmatpush1.msra.mxu0 0.0
    %2191 = vmatprep.subr.mxu0 0.0
    %2192 = vmatpush1.msra.mxu0 0.0
    %2193 = vmatprep.subr.mxu0 0.0
    %2194 = vmatpush1.msra.mxu0 0.0
    %2195 = vmatprep.subr.mxu0 0.0
    %2196 = vmatpush1.msra.mxu0 0.0
    %2197 = vmatprep.subr.mxu0 0.0
    %2198 = vmatpush1.msra.mxu0 0.0
    %2199 = vmatprep.subr.mxu0 0.0
    %2200 = vmatpush1.msra.mxu0 0.0
    %2201 = vmatprep.subr.mxu0 0.0
    %2202 = vmatpush1.msra.mxu0 0.0
    %2203 = vmatprep.subr.mxu0 0.0
    %2204 = vmatpush1.msra.mxu0 0.0
    %2205 = vmatprep.subr.mxu0 0.0
    %2206 = vmatpush1.msra.mxu0 0.0
    %2207 = vmatprep.subr.mxu0 0.0
    %2208 = vmatpush1.msra.mxu0 0.0
    %2209 = vmatprep.subr.mxu0 0.0
    %2210 = vmatpush1.msra.mxu0 0.0
    %2211 = vmatprep.subr.mxu0 0.0
    %2212 = vmatpush1.msra.mxu0 0.0
    %2213 = vmatprep.subr.mxu0 0.0
    %2214 = vmatpush1.msra.mxu0 0.0
    %2215 = vmatprep.subr.mxu0 0.0
    %2216 = vmatpush1.msra.mxu0 0.0
    %2217 = vmatprep.subr.mxu0 0.0
    %2218 = vmatpush1.msra.mxu0 0.0
    %2219 = vmatprep.subr.mxu0 0.0
    %2220 = vmatpush1.msra.mxu0 0.0
    %2221 = vmatprep.subr.mxu0 0.0
    %2222 = vmatpush1.msra.mxu0 0.0
    %2223 = vmatprep.mubr.f32.mxu0 0.0
    %2224 = vmatmul.mubr.f32.gmra.mrb[0].mxu0 %v2157
    %v2225 = vpop.f32.mrb[0].mxu0
    %v2226 = vadd.f32 0.0, %v2225
    %v2227 = vpop.f32.mrb[0].mxu0
    %v2228 = vadd.f32 0.0, %v2227
    %2229 = vdwg.mxu0
    %2230 = vmatprep.subr.mxu0 %v2030
    %2231 = vmatpush1.msra.mxu0 %v2029
    %2232 = vmatprep.subr.mxu0 %v2046
    %2233 = vmatpush1.msra.mxu0 %v2045
    %2234 = vmatprep.subr.mxu0 %v2062
    %2235 = vmatpush1.msra.mxu0 %v2061
    %2236 = vmatprep.subr.mxu0 %v2078
    %2237 = vmatpush1.msra.mxu0 %v2077
    %2238 = vmatprep.subr.mxu0 %v2094
    %2239 = vmatpush1.msra.mxu0 %v2093
    %2240 = vmatprep.subr.mxu0 %v2110
    %2241 = vmatpush1.msra.mxu0 %v2109
    %2242 = vmatprep.subr.mxu0 %v2126
    %2243 = vmatpush1.msra.mxu0 %v2125
    %2244 = vmatprep.subr.mxu0 %v2142
    %2245 = vmatpush1.msra.mxu0 %v2141
    %2246 = vmatprep.subr.mxu0 0.0
    %2247 = vmatpush1.msra.mxu0 0.0
    %2248 = vmatprep.subr.mxu0 0.0
    %2249 = vmatpush1.msra.mxu0 0.0
    %2250 = vmatprep.subr.mxu0 0.0
    %2251 = vmatpush1.msra.mxu0 0.0
    %2252 = vmatprep.subr.mxu0 0.0
    %2253 = vmatpush1.msra.mxu0 0.0
    %2254 = vmatprep.subr.mxu0 0.0
    %2255 = vmatpush1.msra.mxu0 0.0
    %2256 = vmatprep.subr.mxu0 0.0
    %2257 = vmatpush1.msra.mxu0 0.0
    %2258 = vmatprep.subr.mxu0 0.0
    %2259 = vmatpush1.msra.mxu0 0.0
    %2260 = vmatprep.subr.mxu0 0.0
    %2261 = vmatpush1.msra.mxu0 0.0
    %2262 = vmatprep.subr.mxu0 0.0
    %2263 = vmatpush1.msra.mxu0 0.0
    %2264 = vmatprep.subr.mxu0 0.0
    %2265 = vmatpush1.msra.mxu0 0.0
    %2266 = vmatprep.subr.mxu0 0.0
    %2267 = vmatpush1.msra.mxu0 0.0
    %2268 = vmatprep.subr.mxu0 0.0
    %2269 = vmatpush1.msra.mxu0 0.0
    %2270 = vmatprep.subr.mxu0 0.0
    %2271 = vmatpush1.msra.mxu0 0.0
    %2272 = vmatprep.subr.mxu0 0.0
    %2273 = vmatpush1.msra.mxu0 0.0
    %2274 = vmatprep.subr.mxu0 0.0
    %2275 = vmatpush1.msra.mxu0 0.0
    %2276 = vmatprep.subr.mxu0 0.0
    %2277 = vmatpush1.msra.mxu0 0.0
    %2278 = vmatprep.subr.mxu0 0.0
    %2279 = vmatpush1.msra.mxu0 0.0
    %2280 = vmatprep.subr.mxu0 0.0
    %2281 = vmatpush1.msra.mxu0 0.0
    %2282 = vmatprep.subr.mxu0 0.0
    %2283 = vmatpush1.msra.mxu0 0.0
    %2284 = vmatprep.subr.mxu0 0.0
    %2285 = vmatpush1.msra.mxu0 0.0
    %2286 = vmatprep.subr.mxu0 0.0
    %2287 = vmatpush1.msra.mxu0 0.0
    %2288 = vmatprep.subr.mxu0 0.0
    %2289 = vmatpush1.msra.mxu0 0.0
    %2290 = vmatprep.subr.mxu0 0.0
    %2291 = vmatpush1.msra.mxu0 0.0
    %2292 = vmatprep.subr.mxu0 0.0
    %2293 = vmatpush1.msra.mxu0 0.0
    %2294 = vmatprep.mubr.f32.mxu0 0.0
    %2295 = vmatmul.mubr.f32.gmra.mrb[0].mxu0 %v2157
    %v2296 = vpop.f32.mrb[0].mxu0
    %v2297 = vadd.f32 0.0, %v2296
    %v2298 = vpop.f32.mrb[0].mxu0
    %v2299 = vadd.f32 0.0, %v2298
    %2300 = vdwg.mxu0
    %2301 = vmatprep.subr.mxu0 %v2032
    %2302 = vmatpush1.msra.mxu0 %v2031
    %2303 = vmatprep.subr.mxu0 %v2048
    %2304 = vmatpush1.msra.mxu0 %v2047
    %2305 = vmatprep.subr.mxu0 %v2064
    %2306 = vmatpush1.msra.mxu0 %v2063
    %2307 = vmatprep.subr.mxu0 %v2080
    %2308 = vmatpush1.msra.mxu0 %v2079
    %2309 = vmatprep.subr.mxu0 %v2096
    %2310 = vmatpush1.msra.mxu0 %v2095
    %2311 = vmatprep.subr.mxu0 %v2112
    %2312 = vmatpush1.msra.mxu0 %v2111
    %2313 = vmatprep.subr.mxu0 %v2128
    %2314 = vmatpush1.msra.mxu0 %v2127
    %2315 = vmatprep.subr.mxu0 %v2144
    %2316 = vmatpush1.msra.mxu0 %v2143
    %2317 = vmatprep.subr.mxu0 0.0
    %2318 = vmatpush1.msra.mxu0 0.0
    %2319 = vmatprep.subr.mxu0 0.0
    %2320 = vmatpush1.msra.mxu0 0.0
    %2321 = vmatprep.subr.mxu0 0.0
    %2322 = vmatpush1.msra.mxu0 0.0
    %2323 = vmatprep.subr.mxu0 0.0
    %2324 = vmatpush1.msra.mxu0 0.0
    %2325 = vmatprep.subr.mxu0 0.0
    %2326 = vmatpush1.msra.mxu0 0.0
    %2327 = vmatprep.subr.mxu0 0.0
    %2328 = vmatpush1.msra.mxu0 0.0
    %2329 = vmatprep.subr.mxu0 0.0
    %2330 = vmatpush1.msra.mxu0 0.0
    %2331 = vmatprep.subr.mxu0 0.0
    %2332 = vmatpush1.msra.mxu0 0.0
    %2333 = vmatprep.subr.mxu0 0.0
    %2334 = vmatpush1.msra.mxu0 0.0
    %2335 = vmatprep.subr.mxu0 0.0
    %2336 = vmatpush1.msra.mxu0 0.0
    %2337 = vmatprep.subr.mxu0 0.0
    %2338 = vmatpush1.msra.mxu0 0.0
    %2339 = vmatprep.subr.mxu0 0.0
    %2340 = vmatpush1.msra.mxu0 0.0
    %2341 = vmatprep.subr.mxu0 0.0
    %2342 = vmatpush1.msra.mxu0 0.0
    %2343 = vmatprep.subr.mxu0 0.0
    %2344 = vmatpush1.msra.mxu0 0.0
    %2345 = vmatprep.subr.mxu0 0.0
    %2346 = vmatpush1.msra.mxu0 0.0
    %2347 = vmatprep.subr.mxu0 0.0
    %2348 = vmatpush1.msra.mxu0 0.0
    %2349 = vmatprep.subr.mxu0 0.0
    %2350 = vmatpush1.msra.mxu0 0.0
    %2351 = vmatprep.subr.mxu0 0.0
    %2352 = vmatpush1.msra.mxu0 0.0
    %2353 = vmatprep.subr.mxu0 0.0
    %2354 = vmatpush1.msra.mxu0 0.0
    %2355 = vmatprep.subr.mxu0 0.0
    %2356 = vmatpush1.msra.mxu0 0.0
    %2357 = vmatprep.subr.mxu0 0.0
    %2358 = vmatpush1.msra.mxu0 0.0
    %2359 = vmatprep.subr.mxu0 0.0
    %2360 = vmatpush1.msra.mxu0 0.0
    %2361 = vmatprep.subr.mxu0 0.0
    %2362 = vmatpush1.msra.mxu0 0.0
    %2363 = vmatprep.subr.mxu0 0.0
    %2364 = vmatpush1.msra.mxu0 0.0
    %2365 = vmatprep.mubr.f32.mxu0 0.0
    %2366 = vmatmul.mubr.f32.gmra.mrb[0].mxu0 %v2157
    %v2367 = vpop.f32.mrb[0].mxu0
    %v2368 = vadd.f32 0.0, %v2367
    %v2369 = vpop.f32.mrb[0].mxu0
    %v2370 = vadd.f32 0.0, %v2369
    %2371 = vdwg.mxu0
    %2372 = vmatprep.subr.mxu0 %v2034
    %2373 = vmatpush1.msra.mxu0 %v2033
    %2374 = vmatprep.subr.mxu0 %v2050
    %2375 = vmatpush1.msra.mxu0 %v2049
    %2376 = vmatprep.subr.mxu0 %v2066
    %2377 = vmatpush1.msra.mxu0 %v2065
    %2378 = vmatprep.subr.mxu0 %v2082
    %2379 = vmatpush1.msra.mxu0 %v2081
    %2380 = vmatprep.subr.mxu0 %v2098
    %2381 = vmatpush1.msra.mxu0 %v2097
    %2382 = vmatprep.subr.mxu0 %v2114
    %2383 = vmatpush1.msra.mxu0 %v2113
    %2384 = vmatprep.subr.mxu0 %v2130
    %2385 = vmatpush1.msra.mxu0 %v2129
    %2386 = vmatprep.subr.mxu0 %v2146
    %2387 = vmatpush1.msra.mxu0 %v2145
    %2388 = vmatprep.subr.mxu0 0.0
    %2389 = vmatpush1.msra.mxu0 0.0
    %2390 = vmatprep.subr.mxu0 0.0
    %2391 = vmatpush1.msra.mxu0 0.0
    %2392 = vmatprep.subr.mxu0 0.0
    %2393 = vmatpush1.msra.mxu0 0.0
    %2394 = vmatprep.subr.mxu0 0.0
    %2395 = vmatpush1.msra.mxu0 0.0
    %2396 = vmatprep.subr.mxu0 0.0
    %2397 = vmatpush1.msra.mxu0 0.0
    %2398 = vmatprep.subr.mxu0 0.0
    %2399 = vmatpush1.msra.mxu0 0.0
    %2400 = vmatprep.subr.mxu0 0.0
    %2401 = vmatpush1.msra.mxu0 0.0
    %2402 = vmatprep.subr.mxu0 0.0
    %2403 = vmatpush1.msra.mxu0 0.0
    %2404 = vmatprep.subr.mxu0 0.0
    %2405 = vmatpush1.msra.mxu0 0.0
    %2406 = vmatprep.subr.mxu0 0.0
    %2407 = vmatpush1.msra.mxu0 0.0
    %2408 = vmatprep.subr.mxu0 0.0
    %2409 = vmatpush1.msra.mxu0 0.0
    %2410 = vmatprep.subr.mxu0 0.0
    %2411 = vmatpush1.msra.mxu0 0.0
    %2412 = vmatprep.subr.mxu0 0.0
    %2413 = vmatpush1.msra.mxu0 0.0
    %2414 = vmatprep.subr.mxu0 0.0
    %2415 = vmatpush1.msra.mxu0 0.0
    %2416 = vmatprep.subr.mxu0 0.0
    %2417 = vmatpush1.msra.mxu0 0.0
    %2418 = vmatprep.subr.mxu0 0.0
    %2419 = vmatpush1.msra.mxu0 0.0
    %2420 = vmatprep.subr.mxu0 0.0
    %2421 = vmatpush1.msra.mxu0 0.0
    %2422 = vmatprep.subr.mxu0 0.0
    %2423 = vmatpush1.msra.mxu0 0.0
    %2424 = vmatprep.subr.mxu0 0.0
    %2425 = vmatpush1.msra.mxu0 0.0
    %2426 = vmatprep.subr.mxu0 0.0
    %2427 = vmatpush1.msra.mxu0 0.0
    %2428 = vmatprep.subr.mxu0 0.0
    %2429 = vmatpush1.msra.mxu0 0.0
    %2430 = vmatprep.subr.mxu0 0.0
    %2431 = vmatpush1.msra.mxu0 0.0
    %2432 = vmatprep.subr.mxu0 0.0
    %2433 = vmatpush1.msra.mxu0 0.0
    %2434 = vmatprep.subr.mxu0 0.0
    %2435 = vmatpush1.msra.mxu0 0.0
    %2436 = vmatprep.mubr.f32.mxu0 0.0
    %2437 = vmatmul.mubr.f32.gmra.mrb[0].mxu0 %v2157
    %v2438 = vpop.f32.mrb[0].mxu0
    %v2439 = vadd.f32 0.0, %v2438
    %v2440 = vpop.f32.mrb[0].mxu0
    %v2441 = vadd.f32 0.0, %v2440
    %2442 = vdwg.mxu0
    %2443 = vmatprep.subr.mxu0 %v2036
    %2444 = vmatpush1.msra.mxu0 %v2035
    %2445 = vmatprep.subr.mxu0 %v2052
    %2446 = vmatpush1.msra.mxu0 %v2051
    %2447 = vmatprep.subr.mxu0 %v2068
    %2448 = vmatpush1.msra.mxu0 %v2067
    %2449 = vmatprep.subr.mxu0 %v2084
    %2450 = vmatpush1.msra.mxu0 %v2083
    %2451 = vmatprep.subr.mxu0 %v2100
    %2452 = vmatpush1.msra.mxu0 %v2099
    %2453 = vmatprep.subr.mxu0 %v2116
    %2454 = vmatpush1.msra.mxu0 %v2115
    %2455 = vmatprep.subr.mxu0 %v2132
    %2456 = vmatpush1.msra.mxu0 %v2131
    %2457 = vmatprep.subr.mxu0 %v2148
    %2458 = vmatpush1.msra.mxu0 %v2147
    %2459 = vmatprep.subr.mxu0 0.0
    %2460 = vmatpush1.msra.mxu0 0.0
    %2461 = vmatprep.subr.mxu0 0.0
    %2462 = vmatpush1.msra.mxu0 0.0
    %2463 = vmatprep.subr.mxu0 0.0
    %2464 = vmatpush1.msra.mxu0 0.0
    %2465 = vmatprep.subr.mxu0 0.0
    %2466 = vmatpush1.msra.mxu0 0.0
    %2467 = vmatprep.subr.mxu0 0.0
    %2468 = vmatpush1.msra.mxu0 0.0
    %2469 = vmatprep.subr.mxu0 0.0
    %2470 = vmatpush1.msra.mxu0 0.0
    %2471 = vmatprep.subr.mxu0 0.0
    %2472 = vmatpush1.msra.mxu0 0.0
    %2473 = vmatprep.subr.mxu0 0.0
    %2474 = vmatpush1.msra.mxu0 0.0
    %2475 = vmatprep.subr.mxu0 0.0
    %2476 = vmatpush1.msra.mxu0 0.0
    %2477 = vmatprep.subr.mxu0 0.0
    %2478 = vmatpush1.msra.mxu0 0.0
    %2479 = vmatprep.subr.mxu0 0.0
    %2480 = vmatpush1.msra.mxu0 0.0
    %2481 = vmatprep.subr.mxu0 0.0
    %2482 = vmatpush1.msra.mxu0 0.0
    %2483 = vmatprep.subr.mxu0 0.0
    %2484 = vmatpush1.msra.mxu0 0.0
    %2485 = vmatprep.subr.mxu0 0.0
    %2486 = vmatpush1.msra.mxu0 0.0
    %2487 = vmatprep.subr.mxu0 0.0
    %2488 = vmatpush1.msra.mxu0 0.0
    %2489 = vmatprep.subr.mxu0 0.0
    %2490 = vmatpush1.msra.mxu0 0.0
    %2491 = vmatprep.subr.mxu0 0.0
    %2492 = vmatpush1.msra.mxu0 0.0
    %2493 = vmatprep.subr.mxu0 0.0
    %2494 = vmatpush1.msra.mxu0 0.0
    %2495 = vmatprep.subr.mxu0 0.0
    %2496 = vmatpush1.msra.mxu0 0.0
    %2497 = vmatprep.subr.mxu0 0.0
    %2498 = vmatpush1.msra.mxu0 0.0
    %2499 = vmatprep.subr.mxu0 0.0
    %2500 = vmatpush1.msra.mxu0 0.0
    %2501 = vmatprep.subr.mxu0 0.0
    %2502 = vmatpush1.msra.mxu0 0.0
    %2503 = vmatprep.subr.mxu0 0.0
    %2504 = vmatpush1.msra.mxu0 0.0
    %2505 = vmatprep.subr.mxu0 0.0
    %2506 = vmatpush1.msra.mxu0 0.0
    %2507 = vmatprep.mubr.f32.mxu0 0.0
    %2508 = vmatmul.mubr.f32.gmra.mrb[0].mxu0 %v2157
    %v2509 = vpop.f32.mrb[0].mxu0
    %v2510 = vadd.f32 0.0, %v2509
    %v2511 = vpop.f32.mrb[0].mxu0
    %v2512 = vadd.f32 0.0, %v2511
    %2513 = vdwg.mxu0
    %2514 = vmatprep.subr.mxu0 %v2038
    %2515 = vmatpush1.msra.mxu0 %v2037
    %2516 = vmatprep.subr.mxu0 %v2054
    %2517 = vmatpush1.msra.mxu0 %v2053
    %2518 = vmatprep.subr.mxu0 %v2070
    %2519 = vmatpush1.msra.mxu0 %v2069
    %2520 = vmatprep.subr.mxu0 %v2086
    %2521 = vmatpush1.msra.mxu0 %v2085
    %2522 = vmatprep.subr.mxu0 %v2102
    %2523 = vmatpush1.msra.mxu0 %v2101
    %2524 = vmatprep.subr.mxu0 %v2118
    %2525 = vmatpush1.msra.mxu0 %v2117
    %2526 = vmatprep.subr.mxu0 %v2134
    %2527 = vmatpush1.msra.mxu0 %v2133
    %2528 = vmatprep.subr.mxu0 %v2150
    %2529 = vmatpush1.msra.mxu0 %v2149
    %2530 = vmatprep.subr.mxu0 0.0
    %2531 = vmatpush1.msra.mxu0 0.0
    %2532 = vmatprep.subr.mxu0 0.0
    %2533 = vmatpush1.msra.mxu0 0.0
    %2534 = vmatprep.subr.mxu0 0.0
    %2535 = vmatpush1.msra.mxu0 0.0
    %2536 = vmatprep.subr.mxu0 0.0
    %2537 = vmatpush1.msra.mxu0 0.0
    %2538 = vmatprep.subr.mxu0 0.0
    %2539 = vmatpush1.msra.mxu0 0.0
    %2540 = vmatprep.subr.mxu0 0.0
    %2541 = vmatpush1.msra.mxu0 0.0
    %2542 = vmatprep.subr.mxu0 0.0
    %2543 = vmatpush1.msra.mxu0 0.0
    %2544 = vmatprep.subr.mxu0 0.0
    %2545 = vmatpush1.msra.mxu0 0.0
    %2546 = vmatprep.subr.mxu0 0.0
    %2547 = vmatpush1.msra.mxu0 0.0
    %2548 = vmatprep.subr.mxu0 0.0
    %2549 = vmatpush1.msra.mxu0 0.0
    %2550 = vmatprep.subr.mxu0 0.0
    %2551 = vmatpush1.msra.mxu0 0.0
    %2552 = vmatprep.subr.mxu0 0.0
    %2553 = vmatpush1.msra.mxu0 0.0
    %2554 = vmatprep.subr.mxu0 0.0
    %2555 = vmatpush1.msra.mxu0 0.0
    %2556 = vmatprep.subr.mxu0 0.0
    %2557 = vmatpush1.msra.mxu0 0.0
    %2558 = vmatprep.subr.mxu0 0.0
    %2559 = vmatpush1.msra.mxu0 0.0
    %2560 = vmatprep.subr.mxu0 0.0
    %2561 = vmatpush1.msra.mxu0 0.0
    %2562 = vmatprep.subr.mxu0 0.0
    %2563 = vmatpush1.msra.mxu0 0.0
    %2564 = vmatprep.subr.mxu0 0.0
    %2565 = vmatpush1.msra.mxu0 0.0
    %2566 = vmatprep.subr.mxu0 0.0
    %2567 = vmatpush1.msra.mxu0 0.0
    %2568 = vmatprep.subr.mxu0 0.0
    %2569 = vmatpush1.msra.mxu0 0.0
    %2570 = vmatprep.subr.mxu0 0.0
    %2571 = vmatpush1.msra.mxu0 0.0
    %2572 = vmatprep.subr.mxu0 0.0
    %2573 = vmatpush1.msra.mxu0 0.0
    %2574 = vmatprep.subr.mxu0 0.0
    %2575 = vmatpush1.msra.mxu0 0.0
    %2576 = vmatprep.subr.mxu0 0.0
    %2577 = vmatpush1.msra.mxu0 0.0
    %2578 = vmatprep.mubr.f32.mxu0 0.0
    %2579 = vmatmul.mubr.f32.gmra.mrb[0].mxu0 %v2157
    %v2580 = vpop.f32.mrb[0].mxu0
    %v2581 = vadd.f32 0.0, %v2580
    %v2582 = vpop.f32.mrb[0].mxu0
    %v2583 = vadd.f32 0.0, %v2582
    %2584 = vdwg.mxu0
    %2585 = vmatprep.subr.mxu0 %v2040
    %2586 = vmatpush1.msra.mxu0 %v2039
    %2587 = vmatprep.subr.mxu0 %v2056
    %2588 = vmatpush1.msra.mxu0 %v2055
    %2589 = vmatprep.subr.mxu0 %v2072
    %2590 = vmatpush1.msra.mxu0 %v2071
    %2591 = vmatprep.subr.mxu0 %v2088
    %2592 = vmatpush1.msra.mxu0 %v2087
    %2593 = vmatprep.subr.mxu0 %v2104
    %2594 = vmatpush1.msra.mxu0 %v2103
    %2595 = vmatprep.subr.mxu0 %v2120
    %2596 = vmatpush1.msra.mxu0 %v2119
    %2597 = vmatprep.subr.mxu0 %v2136
    %2598 = vmatpush1.msra.mxu0 %v2135
    %2599 = vmatprep.subr.mxu0 %v2152
    %2600 = vmatpush1.msra.mxu0 %v2151
    %2601 = vmatprep.subr.mxu0 0.0
    %2602 = vmatpush1.msra.mxu0 0.0
    %2603 = vmatprep.subr.mxu0 0.0
    %2604 = vmatpush1.msra.mxu0 0.0
    %2605 = vmatprep.subr.mxu0 0.0
    %2606 = vmatpush1.msra.mxu0 0.0
    %2607 = vmatprep.subr.mxu0 0.0
    %2608 = vmatpush1.msra.mxu0 0.0
    %2609 = vmatprep.subr.mxu0 0.0
    %2610 = vmatpush1.msra.mxu0 0.0
    %2611 = vmatprep.subr.mxu0 0.0
    %2612 = vmatpush1.msra.mxu0 0.0
    %2613 = vmatprep.subr.mxu0 0.0
    %2614 = vmatpush1.msra.mxu0 0.0
    %2615 = vmatprep.subr.mxu0 0.0
    %2616 = vmatpush1.msra.mxu0 0.0
    %2617 = vmatprep.subr.mxu0 0.0
    %2618 = vmatpush1.msra.mxu0 0.0
    %2619 = vmatprep.subr.mxu0 0.0
    %2620 = vmatpush1.msra.mxu0 0.0
    %2621 = vmatprep.subr.mxu0 0.0
    %2622 = vmatpush1.msra.mxu0 0.0
    %2623 = vmatprep.subr.mxu0 0.0
    %2624 = vmatpush1.msra.mxu0 0.0
    %2625 = vmatprep.subr.mxu0 0.0
    %2626 = vmatpush1.msra.mxu0 0.0
    %2627 = vmatprep.subr.mxu0 0.0
    %2628 = vmatpush1.msra.mxu0 0.0
    %2629 = vmatprep.subr.mxu0 0.0
    %2630 = vmatpush1.msra.mxu0 0.0
    %2631 = vmatprep.subr.mxu0 0.0
    %2632 = vmatpush1.msra.mxu0 0.0
    %2633 = vmatprep.subr.mxu0 0.0
    %2634 = vmatpush1.msra.mxu0 0.0
    %2635 = vmatprep.subr.mxu0 0.0
    %2636 = vmatpush1.msra.mxu0 0.0
    %2637 = vmatprep.subr.mxu0 0.0
    %2638 = vmatpush1.msra.mxu0 0.0
    %2639 = vmatprep.subr.mxu0 0.0
    %2640 = vmatpush1.msra.mxu0 0.0
    %2641 = vmatprep.subr.mxu0 0.0
    %2642 = vmatpush1.msra.mxu0 0.0
    %2643 = vmatprep.subr.mxu0 0.0
    %2644 = vmatpush1.msra.mxu0 0.0
    %2645 = vmatprep.subr.mxu0 0.0
    %2646 = vmatpush1.msra.mxu0 0.0
    %2647 = vmatprep.subr.mxu0 0.0
    %2648 = vmatpush1.msra.mxu0 0.0
    %2649 = vmatprep.mubr.f32.mxu0 0.0
    %2650 = vmatmul.mubr.f32.gmra.mrb[0].mxu0 %v2157
    %v2651 = vpop.f32.mrb[0].mxu0
    %v2652 = vadd.f32 0.0, %v2651
    %v2653 = vpop.f32.mrb[0].mxu0
    %v2654 = vadd.f32 0.0, %v2653
    %2655 = vdwg.mxu0
    %2656 = vmatprep.subr.mxu0 %v2042
    %2657 = vmatpush1.msra.mxu0 %v2041
    %2658 = vmatprep.subr.mxu0 %v2058
    %2659 = vmatpush1.msra.mxu0 %v2057
    %2660 = vmatprep.subr.mxu0 %v2074
    %2661 = vmatpush1.msra.mxu0 %v2073
    %2662 = vmatprep.subr.mxu0 %v2090
    %2663 = vmatpush1.msra.mxu0 %v2089
    %2664 = vmatprep.subr.mxu0 %v2106
    %2665 = vmatpush1.msra.mxu0 %v2105
    %2666 = vmatprep.subr.mxu0 %v2122
    %2667 = vmatpush1.msra.mxu0 %v2121
    %2668 = vmatprep.subr.mxu0 %v2138
    %2669 = vmatpush1.msra.mxu0 %v2137
    %2670 = vmatprep.subr.mxu0 %v2154
    %2671 = vmatpush1.msra.mxu0 %v2153
    %2672 = vmatprep.subr.mxu0 0.0
    %2673 = vmatpush1.msra.mxu0 0.0
    %2674 = vmatprep.subr.mxu0 0.0
    %2675 = vmatpush1.msra.mxu0 0.0
    %2676 = vmatprep.subr.mxu0 0.0
    %2677 = vmatpush1.msra.mxu0 0.0
    %2678 = vmatprep.subr.mxu0 0.0
    %2679 = vmatpush1.msra.mxu0 0.0
    %2680 = vmatprep.subr.mxu0 0.0
    %2681 = vmatpush1.msra.mxu0 0.0
    %2682 = vmatprep.subr.mxu0 0.0
    %2683 = vmatpush1.msra.mxu0 0.0
    %2684 = vmatprep.subr.mxu0 0.0
    %2685 = vmatpush1.msra.mxu0 0.0
    %2686 = vmatprep.subr.mxu0 0.0
    %2687 = vmatpush1.msra.mxu0 0.0
    %2688 = vmatprep.subr.mxu0 0.0
    %2689 = vmatpush1.msra.mxu0 0.0
    %2690 = vmatprep.subr.mxu0 0.0
    %2691 = vmatpush1.msra.mxu0 0.0
    %2692 = vmatprep.subr.mxu0 0.0
    %2693 = vmatpush1.msra.mxu0 0.0
    %2694 = vmatprep.subr.mxu0 0.0
    %2695 = vmatpush1.msra.mxu0 0.0
    %2696 = vmatprep.subr.mxu0 0.0
    %2697 = vmatpush1.msra.mxu0 0.0
    %2698 = vmatprep.subr.mxu0 0.0
    %2699 = vmatpush1.msra.mxu0 0.0
    %2700 = vmatprep.subr.mxu0 0.0
    %2701 = vmatpush1.msra.mxu0 0.0
    %2702 = vmatprep.subr.mxu0 0.0
    %2703 = vmatpush1.msra.mxu0 0.0
    %2704 = vmatprep.subr.mxu0 0.0
    %2705 = vmatpush1.msra.mxu0 0.0
    %2706 = vmatprep.subr.mxu0 0.0
    %2707 = vmatpush1.msra.mxu0 0.0
    %2708 = vmatprep.subr.mxu0 0.0
    %2709 = vmatpush1.msra.mxu0 0.0
    %2710 = vmatprep.subr.mxu0 0.0
    %2711 = vmatpush1.msra.mxu0 0.0
    %2712 = vmatprep.subr.mxu0 0.0
    %2713 = vmatpush1.msra.mxu0 0.0
    %2714 = vmatprep.subr.mxu0 0.0
    %2715 = vmatpush1.msra.mxu0 0.0
    %2716 = vmatprep.subr.mxu0 0.0
    %2717 = vmatpush1.msra.mxu0 0.0
    %2718 = vmatprep.subr.mxu0 0.0
    %2719 = vmatpush1.msra.mxu0 0.0
    %2720 = vmatprep.mubr.f32.mxu0 0.0
    %2721 = vmatmul.mubr.f32.gmra.mrb[0].mxu0 %v2157
    %v2722 = vpop.f32.mrb[0].mxu0
    %v2723 = vadd.f32 0.0, %v2722
    %v2724 = vpop.f32.mrb[0].mxu0
    %v2725 = vadd.f32 0.0, %v2724
    %2726 = vdwg.mxu0
    %v2727 = vpack.c.bf16 %v2226, %v2226
    %v2728 = vpack.c.bf16 %v2228, %v2228
    %v2729 = vpack.c.bf16 %v2297, %v2297
    %v2730 = vpack.c.bf16 %v2299, %v2299
    %v2731 = vpack.c.bf16 %v2368, %v2368
    %v2732 = vpack.c.bf16 %v2370, %v2370
    %v2733 = vpack.c.bf16 %v2439, %v2439
    %v2734 = vpack.c.bf16 %v2441, %v2441
    %v2735 = vpack.c.bf16 %v2510, %v2510
    %v2736 = vpack.c.bf16 %v2512, %v2512
    %v2737 = vpack.c.bf16 %v2581, %v2581
    %v2738 = vpack.c.bf16 %v2583, %v2583
    %v2739 = vpack.c.bf16 %v2652, %v2652
    %v2740 = vpack.c.bf16 %v2654, %v2654
    %v2741 = vpack.c.bf16 %v2723, %v2723
    %v2742 = vpack.c.bf16 %v2725, %v2725
    %v2743 = vld [vmem:[%s2] sm:$0x3]
    %v2744 = vld [vmem:[#allocation7] sm:$0xf]
    %v2745 = vld [vmem:[#allocation7 + $0x4] sm:$0xf]
    %v2746 = vld [vmem:[#allocation7 + $0x8] sm:$0xf]
    %v2747 = vld [vmem:[#allocation7 + $0xc] sm:$0xf]
    %v2748 = vld [vmem:[#allocation7 + $0x10] sm:$0xf]
    %v2749 = vld [vmem:[#allocation7 + $0x14] sm:$0xf]
    %v2750 = vld [vmem:[#allocation7 + $0x18] sm:$0xf]
    %v2751 = vld [vmem:[#allocation7 + $0x1c] sm:$0xf]
    %v2752 = vld [vmem:[#allocation7 + $0x20] sm:$0xf]
    %v2753 = vld [vmem:[#allocation7 + $0x24] sm:$0xf]
    %v2754 = vld [vmem:[#allocation7 + $0x28] sm:$0xf]
    %v2755 = vld [vmem:[#allocation7 + $0x2c] sm:$0xf]
    %v2756 = vld [vmem:[#allocation7 + $0x30] sm:$0xf]
    %v2757 = vld [vmem:[#allocation7 + $0x34] sm:$0xf]
    %v2758 = vld [vmem:[#allocation7 + $0x38] sm:$0xf]
    %v2759 = vld [vmem:[#allocation7 + $0x3c] sm:$0xf]
    %v2760 = vld [vmem:[#allocation7 + $0x40] sm:$0xf]
    %v2761 = vld [vmem:[#allocation7 + $0x44] sm:$0xf]
    %v2762 = vld [vmem:[#allocation7 + $0x48] sm:$0xf]
    %v2763 = vld [vmem:[#allocation7 + $0x4c] sm:$0xf]
    %v2764 = vld [vmem:[#allocation7 + $0x50] sm:$0xf]
    %v2765 = vld [vmem:[#allocation7 + $0x54] sm:$0xf]
    %v2766 = vld [vmem:[#allocation7 + $0x58] sm:$0xf]
    %v2767 = vld [vmem:[#allocation7 + $0x5c] sm:$0xf]
    %v2768 = vld [vmem:[#allocation7 + $0x60] sm:$0xf]
    %v2769 = vld [vmem:[#allocation7 + $0x64] sm:$0xf]
    %v2770 = vld [vmem:[#allocation7 + $0x68] sm:$0xf]
    %v2771 = vld [vmem:[#allocation7 + $0x6c] sm:$0xf]
    %v2772 = vld [vmem:[#allocation7 + $0x70] sm:$0xf]
    %v2773 = vld [vmem:[#allocation7 + $0x74] sm:$0xf]
    %v2774 = vld [vmem:[#allocation7 + $0x78] sm:$0xf]
    %v2775 = vld [vmem:[#allocation7 + $0x7c] sm:$0xf]
    %v2776 = vld [vmem:[#allocation7 + $0x80] sm:$0xf]
    %v2777 = vld [vmem:[#allocation7 + $0x84] sm:$0xf]
    %v2778 = vld [vmem:[#allocation7 + $0x88] sm:$0xf]
    %v2779 = vld [vmem:[#allocation7 + $0x8c] sm:$0xf]
    %v2780 = vld [vmem:[#allocation7 + $0x90] sm:$0xf]
    %v2781 = vld [vmem:[#allocation7 + $0x94] sm:$0xf]
    %v2782 = vld [vmem:[#allocation7 + $0x98] sm:$0xf]
    %v2783 = vld [vmem:[#allocation7 + $0x9c] sm:$0xf]
    %v2784 = vld [vmem:[#allocation7 + $0xa0] sm:$0xf]
    %v2785 = vld [vmem:[#allocation7 + $0xa4] sm:$0xf]
    %v2786 = vld [vmem:[#allocation7 + $0xa8] sm:$0xf]
    %v2787 = vld [vmem:[#allocation7 + $0xac] sm:$0xf]
    %v2788 = vld [vmem:[#allocation7 + $0xb0] sm:$0xf]
    %v2789 = vld [vmem:[#allocation7 + $0xb4] sm:$0xf]
    %v2790 = vld [vmem:[#allocation7 + $0xb8] sm:$0xf]
    %v2791 = vld [vmem:[#allocation7 + $0xbc] sm:$0xf]
    %v2792 = vld [vmem:[#allocation7 + $0xc0] sm:$0xf]
    %v2793 = vld [vmem:[#allocation7 + $0xc4] sm:$0xf]
    %v2794 = vld [vmem:[#allocation7 + $0xc8] sm:$0xf]
    %v2795 = vld [vmem:[#allocation7 + $0xcc] sm:$0xf]
    %v2796 = vld [vmem:[#allocation7 + $0xd0] sm:$0xf]
    %v2797 = vld [vmem:[#allocation7 + $0xd4] sm:$0xf]
    %v2798 = vld [vmem:[#allocation7 + $0xd8] sm:$0xf]
    %v2799 = vld [vmem:[#allocation7 + $0xdc] sm:$0xf]
    %v2800 = vld [vmem:[#allocation7 + $0xe0] sm:$0xf]
    %v2801 = vld [vmem:[#allocation7 + $0xe4] sm:$0xf]
    %v2802 = vld [vmem:[#allocation7 + $0xe8] sm:$0xf]
    %v2803 = vld [vmem:[#allocation7 + $0xec] sm:$0xf]
    %v2804 = vld [vmem:[#allocation7 + $0xf0] sm:$0xf]
    %v2805 = vld [vmem:[#allocation7 + $0xf4] sm:$0xf]
    %v2806 = vld [vmem:[#allocation7 + $0xf8] sm:$0xf]
    %v2807 = vld [vmem:[#allocation7 + $0xfc] sm:$0xf]
    %v2808 = vld [vmem:[#allocation7 + $0x100] sm:$0xf]
    %v2809 = vld [vmem:[#allocation7 + $0x104] sm:$0xf]
    %v2810 = vld [vmem:[#allocation7 + $0x108] sm:$0xf]
    %v2811 = vld [vmem:[#allocation7 + $0x10c] sm:$0xf]
    %v2812 = vld [vmem:[#allocation7 + $0x110] sm:$0xf]
    %v2813 = vld [vmem:[#allocation7 + $0x114] sm:$0xf]
    %v2814 = vld [vmem:[#allocation7 + $0x118] sm:$0xf]
    %v2815 = vld [vmem:[#allocation7 + $0x11c] sm:$0xf]
    %v2816 = vld [vmem:[#allocation7 + $0x120] sm:$0xf]
    %v2817 = vld [vmem:[#allocation7 + $0x124] sm:$0xf]
    %v2818 = vld [vmem:[#allocation7 + $0x128] sm:$0xf]
    %v2819 = vld [vmem:[#allocation7 + $0x12c] sm:$0xf]
    %v2820 = vld [vmem:[#allocation7 + $0x130] sm:$0xf]
    %v2821 = vld [vmem:[#allocation7 + $0x134] sm:$0xf]
    %v2822 = vld [vmem:[#allocation7 + $0x138] sm:$0xf]
    %v2823 = vld [vmem:[#allocation7 + $0x13c] sm:$0xf]
    %v2824 = vld [vmem:[#allocation7 + $0x140] sm:$0xf]
    %v2825 = vld [vmem:[#allocation7 + $0x144] sm:$0xf]
    %v2826 = vld [vmem:[#allocation7 + $0x148] sm:$0xf]
    %v2827 = vld [vmem:[#allocation7 + $0x14c] sm:$0xf]
    %v2828 = vld [vmem:[#allocation7 + $0x150] sm:$0xf]
    %v2829 = vld [vmem:[#allocation7 + $0x154] sm:$0xf]
    %v2830 = vld [vmem:[#allocation7 + $0x158] sm:$0xf]
    %v2831 = vld [vmem:[#allocation7 + $0x15c] sm:$0xf]
    %v2832 = vld [vmem:[#allocation7 + $0x160] sm:$0xf]
    %v2833 = vld [vmem:[#allocation7 + $0x164] sm:$0xf]
    %v2834 = vld [vmem:[#allocation7 + $0x168] sm:$0xf]
    %v2835 = vld [vmem:[#allocation7 + $0x16c] sm:$0xf]
    %v2836 = vld [vmem:[#allocation7 + $0x170] sm:$0xf]
    %v2837 = vld [vmem:[#allocation7 + $0x174] sm:$0xf]
    %v2838 = vld [vmem:[#allocation7 + $0x178] sm:$0xf]
    %v2839 = vld [vmem:[#allocation7 + $0x17c] sm:$0xf]
    %v2840 = vld [vmem:[#allocation7 + $0x180] sm:$0xf]
    %v2841 = vld [vmem:[#allocation7 + $0x184] sm:$0xf]
    %v2842 = vld [vmem:[#allocation7 + $0x188] sm:$0xf]
    %v2843 = vld [vmem:[#allocation7 + $0x18c] sm:$0xf]
    %v2844 = vld [vmem:[#allocation7 + $0x190] sm:$0xf]
    %v2845 = vld [vmem:[#allocation7 + $0x194] sm:$0xf]
    %v2846 = vld [vmem:[#allocation7 + $0x198] sm:$0xf]
    %v2847 = vld [vmem:[#allocation7 + $0x19c] sm:$0xf]
    %v2848 = vld [vmem:[#allocation7 + $0x1a0] sm:$0xf]
    %v2849 = vld [vmem:[#allocation7 + $0x1a4] sm:$0xf]
    %v2850 = vld [vmem:[#allocation7 + $0x1a8] sm:$0xf]
    %v2851 = vld [vmem:[#allocation7 + $0x1ac] sm:$0xf]
    %v2852 = vld [vmem:[#allocation7 + $0x1b0] sm:$0xf]
    %v2853 = vld [vmem:[#allocation7 + $0x1b4] sm:$0xf]
    %v2854 = vld [vmem:[#allocation7 + $0x1b8] sm:$0xf]
    %v2855 = vld [vmem:[#allocation7 + $0x1bc] sm:$0xf]
    %v2856 = vld [vmem:[#allocation7 + $0x1c0] sm:$0xf]
    %v2857 = vld [vmem:[#allocation7 + $0x1c4] sm:$0xf]
    %v2858 = vld [vmem:[#allocation7 + $0x1c8] sm:$0xf]
    %v2859 = vld [vmem:[#allocation7 + $0x1cc] sm:$0xf]
    %v2860 = vld [vmem:[#allocation7 + $0x1d0] sm:$0xf]
    %v2861 = vld [vmem:[#allocation7 + $0x1d4] sm:$0xf]
    %v2862 = vld [vmem:[#allocation7 + $0x1d8] sm:$0xf]
    %v2863 = vld [vmem:[#allocation7 + $0x1dc] sm:$0xf]
    %v2864 = vld [vmem:[#allocation7 + $0x1e0] sm:$0xf]
    %v2865 = vld [vmem:[#allocation7 + $0x1e4] sm:$0xf]
    %v2866 = vld [vmem:[#allocation7 + $0x1e8] sm:$0xf]
    %v2867 = vld [vmem:[#allocation7 + $0x1ec] sm:$0xf]
    %v2868 = vld [vmem:[#allocation7 + $0x1f0] sm:$0xf]
    %v2869 = vld [vmem:[#allocation7 + $0x1f4] sm:$0xf]
    %v2870 = vld [vmem:[#allocation7 + $0x1f8] sm:$0xf]
    %v2871 = vld [vmem:[#allocation7 + $0x1fc] sm:$0xf]
    %v2872 = vld [vmem:[#allocation7 + $0x200] sm:$0xf]
    %v2873 = vld [vmem:[#allocation7 + $0x204] sm:$0xf]
    %v2874 = vld [vmem:[#allocation7 + $0x208] sm:$0xf]
    %v2875 = vld [vmem:[#allocation7 + $0x20c] sm:$0xf]
    %v2876 = vld [vmem:[#allocation7 + $0x210] sm:$0xf]
    %v2877 = vld [vmem:[#allocation7 + $0x214] sm:$0xf]
    %v2878 = vld [vmem:[#allocation7 + $0x218] sm:$0xf]
    %v2879 = vld [vmem:[#allocation7 + $0x21c] sm:$0xf]
    %v2880 = vld [vmem:[#allocation7 + $0x220] sm:$0xf]
    %v2881 = vld [vmem:[#allocation7 + $0x224] sm:$0xf]
    %v2882 = vld [vmem:[#allocation7 + $0x228] sm:$0xf]
    %v2883 = vld [vmem:[#allocation7 + $0x22c] sm:$0xf]
    %v2884 = vld [vmem:[#allocation7 + $0x230] sm:$0xf]
    %v2885 = vld [vmem:[#allocation7 + $0x234] sm:$0xf]
    %v2886 = vld [vmem:[#allocation7 + $0x238] sm:$0xf]
    %v2887 = vld [vmem:[#allocation7 + $0x23c] sm:$0xf]
    %v2888 = vld [vmem:[#allocation7 + $0x240] sm:$0xf]
    %v2889 = vld [vmem:[#allocation7 + $0x244] sm:$0xf]
    %v2890 = vld [vmem:[#allocation7 + $0x248] sm:$0xf]
    %v2891 = vld [vmem:[#allocation7 + $0x24c] sm:$0xf]
    %v2892 = vld [vmem:[#allocation7 + $0x250] sm:$0xf]
    %v2893 = vld [vmem:[#allocation7 + $0x254] sm:$0xf]
    %v2894 = vld [vmem:[#allocation7 + $0x258] sm:$0xf]
    %v2895 = vld [vmem:[#allocation7 + $0x25c] sm:$0xf]
    %v2896 = vld [vmem:[#allocation7 + $0x260] sm:$0xf]
    %v2897 = vld [vmem:[#allocation7 + $0x264] sm:$0xf]
    %v2898 = vld [vmem:[#allocation7 + $0x268] sm:$0xf]
    %v2899 = vld [vmem:[#allocation7 + $0x26c] sm:$0xf]
    %v2900 = vld [vmem:[#allocation7 + $0x270] sm:$0xf]
    %v2901 = vld [vmem:[#allocation7 + $0x274] sm:$0xf]
    %v2902 = vld [vmem:[#allocation7 + $0x278] sm:$0xf]
    %v2903 = vld [vmem:[#allocation7 + $0x27c] sm:$0xf]
    %v2904 = vld [vmem:[#allocation7 + $0x280] sm:$0xf]
    %v2905 = vld [vmem:[#allocation7 + $0x284] sm:$0xf]
    %v2906 = vld [vmem:[#allocation7 + $0x288] sm:$0xf]
    %v2907 = vld [vmem:[#allocation7 + $0x28c] sm:$0xf]
    %v2908 = vld [vmem:[#allocation7 + $0x290] sm:$0xf]
    %v2909 = vld [vmem:[#allocation7 + $0x294] sm:$0xf]
    %v2910 = vld [vmem:[#allocation7 + $0x298] sm:$0xf]
    %v2911 = vld [vmem:[#allocation7 + $0x29c] sm:$0xf]
    %v2912 = vld [vmem:[#allocation7 + $0x2a0] sm:$0xf]
    %v2913 = vld [vmem:[#allocation7 + $0x2a4] sm:$0xf]
    %v2914 = vld [vmem:[#allocation7 + $0x2a8] sm:$0xf]
    %v2915 = vld [vmem:[#allocation7 + $0x2ac] sm:$0xf]
    %v2916 = vld [vmem:[#allocation7 + $0x2b0] sm:$0xf]
    %v2917 = vld [vmem:[#allocation7 + $0x2b4] sm:$0xf]
    %v2918 = vld [vmem:[#allocation7 + $0x2b8] sm:$0xf]
    %v2919 = vld [vmem:[#allocation7 + $0x2bc] sm:$0xf]
    %v2920 = vld [vmem:[#allocation7 + $0x2c0] sm:$0xf]
    %v2921 = vld [vmem:[#allocation7 + $0x2c4] sm:$0xf]
    %v2922 = vld [vmem:[#allocation7 + $0x2c8] sm:$0xf]
    %v2923 = vld [vmem:[#allocation7 + $0x2cc] sm:$0xf]
    %v2924 = vld [vmem:[#allocation7 + $0x2d0] sm:$0xf]
    %v2925 = vld [vmem:[#allocation7 + $0x2d4] sm:$0xf]
    %v2926 = vld [vmem:[#allocation7 + $0x2d8] sm:$0xf]
    %v2927 = vld [vmem:[#allocation7 + $0x2dc] sm:$0xf]
    %v2928 = vld [vmem:[#allocation7 + $0x2e0] sm:$0xf]
    %v2929 = vld [vmem:[#allocation7 + $0x2e4] sm:$0xf]
    %v2930 = vld [vmem:[#allocation7 + $0x2e8] sm:$0xf]
    %v2931 = vld [vmem:[#allocation7 + $0x2ec] sm:$0xf]
    %v2932 = vld [vmem:[#allocation7 + $0x2f0] sm:$0xf]
    %v2933 = vld [vmem:[#allocation7 + $0x2f4] sm:$0xf]
    %v2934 = vld [vmem:[#allocation7 + $0x2f8] sm:$0xf]
    %v2935 = vld [vmem:[#allocation7 + $0x2fc] sm:$0xf]
    %v2936 = vld [vmem:[#allocation7 + $0x300] sm:$0xf]
    %v2937 = vld [vmem:[#allocation7 + $0x304] sm:$0xf]
    %v2938 = vld [vmem:[#allocation7 + $0x308] sm:$0xf]
    %v2939 = vld [vmem:[#allocation7 + $0x30c] sm:$0xf]
    %v2940 = vld [vmem:[#allocation7 + $0x310] sm:$0xf]
    %v2941 = vld [vmem:[#allocation7 + $0x314] sm:$0xf]
    %v2942 = vld [vmem:[#allocation7 + $0x318] sm:$0xf]
    %v2943 = vld [vmem:[#allocation7 + $0x31c] sm:$0xf]
    %v2944 = vld [vmem:[#allocation7 + $0x320] sm:$0xf]
    %v2945 = vld [vmem:[#allocation7 + $0x324] sm:$0xf]
    %v2946 = vld [vmem:[#allocation7 + $0x328] sm:$0xf]
    %v2947 = vld [vmem:[#allocation7 + $0x32c] sm:$0xf]
    %v2948 = vld [vmem:[#allocation7 + $0x330] sm:$0xf]
    %v2949 = vld [vmem:[#allocation7 + $0x334] sm:$0xf]
    %v2950 = vld [vmem:[#allocation7 + $0x338] sm:$0xf]
    %v2951 = vld [vmem:[#allocation7 + $0x33c] sm:$0xf]
    %v2952 = vld [vmem:[#allocation7 + $0x340] sm:$0xf]
    %v2953 = vld [vmem:[#allocation7 + $0x344] sm:$0xf]
    %v2954 = vld [vmem:[#allocation7 + $0x348] sm:$0xf]
    %v2955 = vld [vmem:[#allocation7 + $0x34c] sm:$0xf]
    %v2956 = vld [vmem:[#allocation7 + $0x350] sm:$0xf]
    %v2957 = vld [vmem:[#allocation7 + $0x354] sm:$0xf]
    %v2958 = vld [vmem:[#allocation7 + $0x358] sm:$0xf]
    %v2959 = vld [vmem:[#allocation7 + $0x35c] sm:$0xf]
    %v2960 = vld [vmem:[#allocation7 + $0x360] sm:$0xf]
    %v2961 = vld [vmem:[#allocation7 + $0x364] sm:$0xf]
    %v2962 = vld [vmem:[#allocation7 + $0x368] sm:$0xf]
    %v2963 = vld [vmem:[#allocation7 + $0x36c] sm:$0xf]
    %v2964 = vld [vmem:[#allocation7 + $0x370] sm:$0xf]
    %v2965 = vld [vmem:[#allocation7 + $0x374] sm:$0xf]
    %v2966 = vld [vmem:[#allocation7 + $0x378] sm:$0xf]
    %v2967 = vld [vmem:[#allocation7 + $0x37c] sm:$0xf]
    %v2968 = vld [vmem:[#allocation7 + $0x380] sm:$0xf]
    %v2969 = vld [vmem:[#allocation7 + $0x384] sm:$0xf]
    %v2970 = vld [vmem:[#allocation7 + $0x388] sm:$0xf]
    %v2971 = vld [vmem:[#allocation7 + $0x38c] sm:$0xf]
    %v2972 = vld [vmem:[#allocation7 + $0x390] sm:$0xf]
    %v2973 = vld [vmem:[#allocation7 + $0x394] sm:$0xf]
    %v2974 = vld [vmem:[#allocation7 + $0x398] sm:$0xf]
    %v2975 = vld [vmem:[#allocation7 + $0x39c] sm:$0xf]
    %v2976 = vld [vmem:[#allocation7 + $0x3a0] sm:$0xf]
    %v2977 = vld [vmem:[#allocation7 + $0x3a4] sm:$0xf]
    %v2978 = vld [vmem:[#allocation7 + $0x3a8] sm:$0xf]
    %v2979 = vld [vmem:[#allocation7 + $0x3ac] sm:$0xf]
    %v2980 = vld [vmem:[#allocation7 + $0x3b0] sm:$0xf]
    %v2981 = vld [vmem:[#allocation7 + $0x3b4] sm:$0xf]
    %v2982 = vld [vmem:[#allocation7 + $0x3b8] sm:$0xf]
    %v2983 = vld [vmem:[#allocation7 + $0x3bc] sm:$0xf]
    %v2984 = vld [vmem:[#allocation7 + $0x3c0] sm:$0xf]
    %v2985 = vld [vmem:[#allocation7 + $0x3c4] sm:$0xf]
    %v2986 = vld [vmem:[#allocation7 + $0x3c8] sm:$0xf]
    %v2987 = vld [vmem:[#allocation7 + $0x3cc] sm:$0xf]
    %v2988 = vld [vmem:[#allocation7 + $0x3d0] sm:$0xf]
    %v2989 = vld [vmem:[#allocation7 + $0x3d4] sm:$0xf]
    %v2990 = vld [vmem:[#allocation7 + $0x3d8] sm:$0xf]
    %v2991 = vld [vmem:[#allocation7 + $0x3dc] sm:$0xf]
    %v2992 = vld [vmem:[#allocation7 + $0x3e0] sm:$0xf]
    %v2993 = vld [vmem:[#allocation7 + $0x3e4] sm:$0xf]
    %v2994 = vld [vmem:[#allocation7 + $0x3e8] sm:$0xf]
    %v2995 = vld [vmem:[#allocation7 + $0x3ec] sm:$0xf]
    %v2996 = vld [vmem:[#allocation7 + $0x3f0] sm:$0xf]
    %v2997 = vld [vmem:[#allocation7 + $0x3f4] sm:$0xf]
    %v2998 = vld [vmem:[#allocation7 + $0x3f8] sm:$0xf]
    %v2999 = vld [vmem:[#allocation7 + $0x3fc] sm:$0xf]
    %v3000 = vld [vmem:[#allocation7 + $0x400] sm:$0xf]
    %v3001 = vld [vmem:[#allocation7 + $0x404] sm:$0xf]
    %v3002 = vld [vmem:[#allocation7 + $0x408] sm:$0xf]
    %v3003 = vld [vmem:[#allocation7 + $0x40c] sm:$0xf]
    %v3004 = vld [vmem:[#allocation7 + $0x410] sm:$0xf]
    %v3005 = vld [vmem:[#allocation7 + $0x414] sm:$0xf]
    %v3006 = vld [vmem:[#allocation7 + $0x418] sm:$0xf]
    %v3007 = vld [vmem:[#allocation7 + $0x41c] sm:$0xf]
    %v3008 = vld [vmem:[#allocation7 + $0x420] sm:$0xf]
    %v3009 = vld [vmem:[#allocation7 + $0x424] sm:$0xf]
    %v3010 = vld [vmem:[#allocation7 + $0x428] sm:$0xf]
    %v3011 = vld [vmem:[#allocation7 + $0x42c] sm:$0xf]
    %v3012 = vld [vmem:[#allocation7 + $0x430] sm:$0xf]
    %v3013 = vld [vmem:[#allocation7 + $0x434] sm:$0xf]
    %v3014 = vld [vmem:[#allocation7 + $0x438] sm:$0xf]
    %v3015 = vld [vmem:[#allocation7 + $0x43c] sm:$0xf]
    %v3016 = vld [vmem:[%s7] sm:$0x1]
    %v3018 = vlaneseq
    %v3019 = vshrl.u32 %v3018, 7
    %v3020 = vsub.s32 0, %v3019
    %v3021 = vrot.slane %v3016, %v3020
    %v3295 = vunpack.c.l.b16 %v2744
    %v3296 = vunpack.c.l.b16 %v2745
    %v3297 = vunpack.c.l.b16 %v2746
    %v3298 = vunpack.c.l.b16 %v2747
    %v3299 = vunpack.c.l.b16 %v2748
    %v3300 = vunpack.c.l.b16 %v2749
    %v3301 = vunpack.c.l.b16 %v2750
    %v3302 = vunpack.c.l.b16 %v2751
    %v3303 = vunpack.c.l.b16 %v2752
    %v3304 = vunpack.c.l.b16 %v2753
    %v3305 = vunpack.c.l.b16 %v2754
    %v3306 = vunpack.c.l.b16 %v2755
    %v3307 = vunpack.c.l.b16 %v2756
    %v3308 = vunpack.c.l.b16 %v2757
    %v3309 = vunpack.c.l.b16 %v2758
    %v3310 = vunpack.c.l.b16 %v2759
    %v3311 = vunpack.c.l.b16 %v2760
    %v3312 = vunpack.c.l.b16 %v2761
    %v3313 = vunpack.c.l.b16 %v2762
    %v3314 = vunpack.c.l.b16 %v2763
    %v3315 = vunpack.c.l.b16 %v2764
    %v3316 = vunpack.c.l.b16 %v2765
    %v3317 = vunpack.c.l.b16 %v2766
    %v3318 = vunpack.c.l.b16 %v2767
    %v3319 = vunpack.c.l.b16 %v2768
    %v3320 = vunpack.c.l.b16 %v2769
    %v3321 = vunpack.c.l.b16 %v2770
    %v3322 = vunpack.c.l.b16 %v2771
    %v3323 = vunpack.c.l.b16 %v2772
    %v3324 = vunpack.c.l.b16 %v2773
    %v3325 = vunpack.c.l.b16 %v2774
    %v3326 = vunpack.c.l.b16 %v2775
    %v3327 = vunpack.c.l.b16 %v2776
    %v3328 = vunpack.c.l.b16 %v2777
    %v3329 = vunpack.c.l.b16 %v2778
    %v3330 = vunpack.c.l.b16 %v2779
    %v3331 = vunpack.c.l.b16 %v2780
    %v3332 = vunpack.c.l.b16 %v2781
    %v3333 = vunpack.c.l.b16 %v2782
    %v3334 = vunpack.c.l.b16 %v2783
    %v3335 = vunpack.c.l.b16 %v2784
    %v3336 = vunpack.c.l.b16 %v2785
    %v3337 = vunpack.c.l.b16 %v2786
    %v3338 = vunpack.c.l.b16 %v2787
    %v3339 = vunpack.c.l.b16 %v2788
    %v3340 = vunpack.c.l.b16 %v2789
    %v3341 = vunpack.c.l.b16 %v2790
    %v3342 = vunpack.c.l.b16 %v2791
    %v3343 = vunpack.c.l.b16 %v2792
    %v3344 = vunpack.c.l.b16 %v2793
    %v3345 = vunpack.c.l.b16 %v2794
    %v3346 = vunpack.c.l.b16 %v2795
    %v3347 = vunpack.c.l.b16 %v2796
    %v3348 = vunpack.c.l.b16 %v2797
    %v3349 = vunpack.c.l.b16 %v2798
    %v3350 = vunpack.c.l.b16 %v2799
    %v3351 = vunpack.c.l.b16 %v2800
    %v3352 = vunpack.c.l.b16 %v2801
    %v3353 = vunpack.c.l.b16 %v2802
    %v3354 = vunpack.c.l.b16 %v2803
    %v3355 = vunpack.c.l.b16 %v2804
    %v3356 = vunpack.c.l.b16 %v2805
    %v3357 = vunpack.c.l.b16 %v2806
    %v3358 = vunpack.c.l.b16 %v2807
    %v3359 = vunpack.c.l.b16 %v2808
    %v3360 = vunpack.c.l.b16 %v2809
    %v3361 = vunpack.c.l.b16 %v2810
    %v3362 = vunpack.c.l.b16 %v2811
    %v3363 = vunpack.c.l.b16 %v2812
    %v3364 = vunpack.c.l.b16 %v2813
    %v3365 = vunpack.c.l.b16 %v2814
    %v3366 = vunpack.c.l.b16 %v2815
    %v3367 = vunpack.c.l.b16 %v2816
    %v3368 = vunpack.c.l.b16 %v2817
    %v3369 = vunpack.c.l.b16 %v2818
    %v3370 = vunpack.c.l.b16 %v2819
    %v3371 = vunpack.c.l.b16 %v2820
    %v3372 = vunpack.c.l.b16 %v2821
    %v3373 = vunpack.c.l.b16 %v2822
    %v3374 = vunpack.c.l.b16 %v2823
    %v3375 = vunpack.c.l.b16 %v2824
    %v3376 = vunpack.c.l.b16 %v2825
    %v3377 = vunpack.c.l.b16 %v2826
    %v3378 = vunpack.c.l.b16 %v2827
    %v3379 = vunpack.c.l.b16 %v2828
    %v3380 = vunpack.c.l.b16 %v2829
    %v3381 = vunpack.c.l.b16 %v2830
    %v3382 = vunpack.c.l.b16 %v2831
    %v3383 = vunpack.c.l.b16 %v2832
    %v3384 = vunpack.c.l.b16 %v2833
    %v3385 = vunpack.c.l.b16 %v2834
    %v3386 = vunpack.c.l.b16 %v2835
    %v3387 = vunpack.c.l.b16 %v2836
    %v3388 = vunpack.c.l.b16 %v2837
    %v3389 = vunpack.c.l.b16 %v2838
    %v3390 = vunpack.c.l.b16 %v2839
    %v3391 = vunpack.c.l.b16 %v2840
    %v3392 = vunpack.c.l.b16 %v2841
    %v3393 = vunpack.c.l.b16 %v2842
    %v3394 = vunpack.c.l.b16 %v2843
    %v3395 = vunpack.c.l.b16 %v2844
    %v3396 = vunpack.c.l.b16 %v2845
    %v3397 = vunpack.c.l.b16 %v2846
    %v3398 = vunpack.c.l.b16 %v2847
    %v3399 = vunpack.c.l.b16 %v2848
    %v3400 = vunpack.c.l.b16 %v2849
    %v3401 = vunpack.c.l.b16 %v2850
    %v3402 = vunpack.c.l.b16 %v2851
    %v3403 = vunpack.c.l.b16 %v2852
    %v3404 = vunpack.c.l.b16 %v2853
    %v3405 = vunpack.c.l.b16 %v2854
    %v3406 = vunpack.c.l.b16 %v2855
    %v3407 = vunpack.c.l.b16 %v2856
    %v3408 = vunpack.c.l.b16 %v2857
    %v3409 = vunpack.c.l.b16 %v2858
    %v3410 = vunpack.c.l.b16 %v2859
    %v3411 = vunpack.c.l.b16 %v2860
    %v3412 = vunpack.c.l.b16 %v2861
    %v3413 = vunpack.c.l.b16 %v2862
    %v3414 = vunpack.c.l.b16 %v2863
    %v3415 = vunpack.c.l.b16 %v2864
    %v3416 = vunpack.c.l.b16 %v2865
    %v3417 = vunpack.c.l.b16 %v2866
    %v3418 = vunpack.c.l.b16 %v2867
    %v3419 = vunpack.c.l.b16 %v2868
    %v3420 = vunpack.c.l.b16 %v2869
    %v3421 = vunpack.c.l.b16 %v2870
    %v3422 = vunpack.c.l.b16 %v2871
    %v3423 = vunpack.c.l.b16 %v2872
    %v3424 = vunpack.c.l.b16 %v2873
    %v3425 = vunpack.c.l.b16 %v2874
    %v3426 = vunpack.c.l.b16 %v2875
    %v3427 = vunpack.c.l.b16 %v2876
    %v3428 = vunpack.c.l.b16 %v2877
    %v3429 = vunpack.c.l.b16 %v2878
    %v3430 = vunpack.c.l.b16 %v2879
    %v3431 = vunpack.c.l.b16 %v2880
    %v3432 = vunpack.c.l.b16 %v2881
    %v3433 = vunpack.c.l.b16 %v2882
    %v3434 = vunpack.c.l.b16 %v2883
    %v3435 = vunpack.c.l.b16 %v2884
    %v3436 = vunpack.c.l.b16 %v2885
    %v3437 = vunpack.c.l.b16 %v2886
    %v3438 = vunpack.c.l.b16 %v2887
    %v3439 = vunpack.c.l.b16 %v2888
    %v3440 = vunpack.c.l.b16 %v2889
    %v3441 = vunpack.c.l.b16 %v2890
    %v3442 = vunpack.c.l.b16 %v2891
    %v3443 = vunpack.c.l.b16 %v2892
    %v3444 = vunpack.c.l.b16 %v2893
    %v3445 = vunpack.c.l.b16 %v2894
    %v3446 = vunpack.c.l.b16 %v2895
    %v3447 = vunpack.c.l.b16 %v2896
    %v3448 = vunpack.c.l.b16 %v2897
    %v3449 = vunpack.c.l.b16 %v2898
    %v3450 = vunpack.c.l.b16 %v2899
    %v3451 = vunpack.c.l.b16 %v2900
    %v3452 = vunpack.c.l.b16 %v2901
    %v3453 = vunpack.c.l.b16 %v2902
    %v3454 = vunpack.c.l.b16 %v2903
    %v3455 = vunpack.c.l.b16 %v2904
    %v3456 = vunpack.c.l.b16 %v2905
    %v3457 = vunpack.c.l.b16 %v2906
    %v3458 = vunpack.c.l.b16 %v2907
    %v3459 = vunpack.c.l.b16 %v2908
    %v3460 = vunpack.c.l.b16 %v2909
    %v3461 = vunpack.c.l.b16 %v2910
    %v3462 = vunpack.c.l.b16 %v2911
    %v3463 = vunpack.c.l.b16 %v2912
    %v3464 = vunpack.c.l.b16 %v2913
    %v3465 = vunpack.c.l.b16 %v2914
    %v3466 = vunpack.c.l.b16 %v2915
    %v3467 = vunpack.c.l.b16 %v2916
    %v3468 = vunpack.c.l.b16 %v2917
    %v3469 = vunpack.c.l.b16 %v2918
    %v3470 = vunpack.c.l.b16 %v2919
    %v3471 = vunpack.c.l.b16 %v2920
    %v3472 = vunpack.c.l.b16 %v2921
    %v3473 = vunpack.c.l.b16 %v2922
    %v3474 = vunpack.c.l.b16 %v2923
    %v3475 = vunpack.c.l.b16 %v2924
    %v3476 = vunpack.c.l.b16 %v2925
    %v3477 = vunpack.c.l.b16 %v2926
    %v3478 = vunpack.c.l.b16 %v2927
    %v3479 = vunpack.c.l.b16 %v2928
    %v3480 = vunpack.c.l.b16 %v2929
    %v3481 = vunpack.c.l.b16 %v2930
    %v3482 = vunpack.c.l.b16 %v2931
    %v3483 = vunpack.c.l.b16 %v2932
    %v3484 = vunpack.c.l.b16 %v2933
    %v3485 = vunpack.c.l.b16 %v2934
    %v3486 = vunpack.c.l.b16 %v2935
    %v3487 = vunpack.c.l.b16 %v2936
    %v3488 = vunpack.c.l.b16 %v2937
    %v3489 = vunpack.c.l.b16 %v2938
    %v3490 = vunpack.c.l.b16 %v2939
    %v3491 = vunpack.c.l.b16 %v2940
    %v3492 = vunpack.c.l.b16 %v2941
    %v3493 = vunpack.c.l.b16 %v2942
    %v3494 = vunpack.c.l.b16 %v2943
    %v3495 = vunpack.c.l.b16 %v2944
    %v3496 = vunpack.c.l.b16 %v2945
    %v3497 = vunpack.c.l.b16 %v2946
    %v3498 = vunpack.c.l.b16 %v2947
    %v3499 = vunpack.c.l.b16 %v2948
    %v3500 = vunpack.c.l.b16 %v2949
    %v3501 = vunpack.c.l.b16 %v2950
    %v3502 = vunpack.c.l.b16 %v2951
    %v3503 = vunpack.c.l.b16 %v2952
    %v3504 = vunpack.c.l.b16 %v2953
    %v3505 = vunpack.c.l.b16 %v2954
    %v3506 = vunpack.c.l.b16 %v2955
    %v3507 = vunpack.c.l.b16 %v2956
    %v3508 = vunpack.c.l.b16 %v2957
    %v3509 = vunpack.c.l.b16 %v2958
    %v3510 = vunpack.c.l.b16 %v2959
    %v3511 = vunpack.c.l.b16 %v2960
    %v3512 = vunpack.c.l.b16 %v2961
    %v3513 = vunpack.c.l.b16 %v2962
    %v3514 = vunpack.c.l.b16 %v2963
    %v3515 = vunpack.c.l.b16 %v2964
    %v3516 = vunpack.c.l.b16 %v2965
    %v3517 = vunpack.c.l.b16 %v2966
    %v3518 = vunpack.c.l.b16 %v2967
    %v3519 = vunpack.c.l.b16 %v2968
    %v3520 = vunpack.c.l.b16 %v2969
    %v3521 = vunpack.c.l.b16 %v2970
    %v3522 = vunpack.c.l.b16 %v2971
    %v3523 = vunpack.c.l.b16 %v2972
    %v3524 = vunpack.c.l.b16 %v2973
    %v3525 = vunpack.c.l.b16 %v2974
    %v3526 = vunpack.c.l.b16 %v2975
    %v3527 = vunpack.c.l.b16 %v2976
    %v3528 = vunpack.c.l.b16 %v2977
    %v3529 = vunpack.c.l.b16 %v2978
    %v3530 = vunpack.c.l.b16 %v2979
    %v3531 = vunpack.c.l.b16 %v2980
    %v3532 = vunpack.c.l.b16 %v2981
    %v3533 = vunpack.c.l.b16 %v2982
    %v3534 = vunpack.c.l.b16 %v2983
    %v3535 = vunpack.c.l.b16 %v2984
    %v3536 = vunpack.c.l.b16 %v2985
    %v3537 = vunpack.c.l.b16 %v2986
    %v3538 = vunpack.c.l.b16 %v2987
    %v3539 = vunpack.c.l.b16 %v2988
    %v3540 = vunpack.c.l.b16 %v2989
    %v3541 = vunpack.c.l.b16 %v2990
    %v3542 = vunpack.c.l.b16 %v2991
    %v3543 = vunpack.c.l.b16 %v2992
    %v3544 = vunpack.c.l.b16 %v2993
    %v3545 = vunpack.c.l.b16 %v2994
    %v3546 = vunpack.c.l.b16 %v2995
    %v3547 = vunpack.c.l.b16 %v2996
    %v3548 = vunpack.c.l.b16 %v2997
    %v3549 = vunpack.c.l.b16 %v2998
    %v3550 = vunpack.c.l.b16 %v2999
    %v3551 = vunpack.c.l.b16 %v3000
    %v3552 = vunpack.c.l.b16 %v3001
    %v3553 = vunpack.c.l.b16 %v3002
    %v3554 = vunpack.c.l.b16 %v3003
    %v3555 = vunpack.c.l.b16 %v3004
    %v3556 = vunpack.c.l.b16 %v3005
    %v3557 = vunpack.c.l.b16 %v3006
    %v3558 = vunpack.c.l.b16 %v3007
    %v3559 = vunpack.c.l.b16 %v3008
    %v3560 = vunpack.c.l.b16 %v3009
    %v3561 = vunpack.c.l.b16 %v3010
    %v3562 = vunpack.c.l.b16 %v3011
    %v3563 = vunpack.c.l.b16 %v3012
    %v3564 = vunpack.c.l.b16 %v3013
    %v3565 = vunpack.c.l.b16 %v3014
    %v3566 = vunpack.c.l.b16 %v3015
    %v3567 = vpack.c.b16 %v3296, %v3295
    %v3568 = vpack.c.b16 %v3298, %v3297
    %v3569 = vpack.c.b16 %v3300, %v3299
    %v3570 = vpack.c.b16 %v3302, %v3301
    %v3571 = vpack.c.b16 %v3304, %v3303
    %v3572 = vpack.c.b16 %v3306, %v3305
    %v3573 = vpack.c.b16 %v3308, %v3307
    %v3574 = vpack.c.b16 %v3310, %v3309
    %v3575 = vpack.c.b16 %v3312, %v3311
    %v3576 = vpack.c.b16 %v3314, %v3313
    %v3577 = vpack.c.b16 %v3316, %v3315
    %v3578 = vpack.c.b16 %v3318, %v3317
    %v3579 = vpack.c.b16 %v3320, %v3319
    %v3580 = vpack.c.b16 %v3322, %v3321
    %v3581 = vpack.c.b16 %v3324, %v3323
    %v3582 = vpack.c.b16 %v3326, %v3325
    %v3583 = vpack.c.b16 %v3328, %v3327
    %v3584 = vpack.c.b16 %v3330, %v3329
    %v3585 = vpack.c.b16 %v3332, %v3331
    %v3586 = vpack.c.b16 %v3334, %v3333
    %v3587 = vpack.c.b16 %v3336, %v3335
    %v3588 = vpack.c.b16 %v3338, %v3337
    %v3589 = vpack.c.b16 %v3340, %v3339
    %v3590 = vpack.c.b16 %v3342, %v3341
    %v3591 = vpack.c.b16 %v3344, %v3343
    %v3592 = vpack.c.b16 %v3346, %v3345
    %v3593 = vpack.c.b16 %v3348, %v3347
    %v3594 = vpack.c.b16 %v3350, %v3349
    %v3595 = vpack.c.b16 %v3352, %v3351
    %v3596 = vpack.c.b16 %v3354, %v3353
    %v3597 = vpack.c.b16 %v3356, %v3355
    %v3598 = vpack.c.b16 %v3358, %v3357
    %v3599 = vpack.c.b16 %v3360, %v3359
    %v3600 = vpack.c.b16 %v3362, %v3361
    %v3601 = vpack.c.b16 %v3364, %v3363
    %v3602 = vpack.c.b16 %v3366, %v3365
    %v3603 = vpack.c.b16 %v3368, %v3367
    %v3604 = vpack.c.b16 %v3370, %v3369
    %v3605 = vpack.c.b16 %v3372, %v3371
    %v3606 = vpack.c.b16 %v3374, %v3373
    %v3607 = vpack.c.b16 %v3376, %v3375
    %v3608 = vpack.c.b16 %v3378, %v3377
    %v3609 = vpack.c.b16 %v3380, %v3379
    %v3610 = vpack.c.b16 %v3382, %v3381
    %v3611 = vpack.c.b16 %v3384, %v3383
    %v3612 = vpack.c.b16 %v3386, %v3385
    %v3613 = vpack.c.b16 %v3388, %v3387
    %v3614 = vpack.c.b16 %v3390, %v3389
    %v3615 = vpack.c.b16 %v3392, %v3391
    %v3616 = vpack.c.b16 %v3394, %v3393
    %v3617 = vpack.c.b16 %v3396, %v3395
    %v3618 = vpack.c.b16 %v3398, %v3397
    %v3619 = vpack.c.b16 %v3400, %v3399
    %v3620 = vpack.c.b16 %v3402, %v3401
    %v3621 = vpack.c.b16 %v3404, %v3403
    %v3622 = vpack.c.b16 %v3406, %v3405
    %v3623 = vpack.c.b16 %v3408, %v3407
    %v3624 = vpack.c.b16 %v3410, %v3409
    %v3625 = vpack.c.b16 %v3412, %v3411
    %v3626 = vpack.c.b16 %v3414, %v3413
    %v3627 = vpack.c.b16 %v3416, %v3415
    %v3628 = vpack.c.b16 %v3418, %v3417
    %v3629 = vpack.c.b16 %v3420, %v3419
    %v3630 = vpack.c.b16 %v3422, %v3421
    %v3631 = vpack.c.b16 %v3424, %v3423
    %v3632 = vpack.c.b16 %v3426, %v3425
    %v3633 = vpack.c.b16 %v3428, %v3427
    %v3634 = vpack.c.b16 %v3430, %v3429
    %v3635 = vpack.c.b16 %v3432, %v3431
    %v3636 = vpack.c.b16 %v3434, %v3433
    %v3637 = vpack.c.b16 %v3436, %v3435
    %v3638 = vpack.c.b16 %v3438, %v3437
    %v3639 = vpack.c.b16 %v3440, %v3439
    %v3640 = vpack.c.b16 %v3442, %v3441
    %v3641 = vpack.c.b16 %v3444, %v3443
    %v3642 = vpack.c.b16 %v3446, %v3445
    %v3643 = vpack.c.b16 %v3448, %v3447
    %v3644 = vpack.c.b16 %v3450, %v3449
    %v3645 = vpack.c.b16 %v3452, %v3451
    %v3646 = vpack.c.b16 %v3454, %v3453
    %v3647 = vpack.c.b16 %v3456, %v3455
    %v3648 = vpack.c.b16 %v3458, %v3457
    %v3649 = vpack.c.b16 %v3460, %v3459
    %v3650 = vpack.c.b16 %v3462, %v3461
    %v3651 = vpack.c.b16 %v3464, %v3463
    %v3652 = vpack.c.b16 %v3466, %v3465
    %v3653 = vpack.c.b16 %v3468, %v3467
    %v3654 = vpack.c.b16 %v3470, %v3469
    %v3655 = vpack.c.b16 %v3472, %v3471
    %v3656 = vpack.c.b16 %v3474, %v3473
    %v3657 = vpack.c.b16 %v3476, %v3475
    %v3658 = vpack.c.b16 %v3478, %v3477
    %v3659 = vpack.c.b16 %v3480, %v3479
    %v3660 = vpack.c.b16 %v3482, %v3481
    %v3661 = vpack.c.b16 %v3484, %v3483
    %v3662 = vpack.c.b16 %v3486, %v3485
    %v3663 = vpack.c.b16 %v3488, %v3487
    %v3664 = vpack.c.b16 %v3490, %v3489
    %v3665 = vpack.c.b16 %v3492, %v3491
    %v3666 = vpack.c.b16 %v3494, %v3493
    %v3667 = vpack.c.b16 %v3496, %v3495
    %v3668 = vpack.c.b16 %v3498, %v3497
    %v3669 = vpack.c.b16 %v3500, %v3499
    %v3670 = vpack.c.b16 %v3502, %v3501
    %v3671 = vpack.c.b16 %v3504, %v3503
    %v3672 = vpack.c.b16 %v3506, %v3505
    %v3673 = vpack.c.b16 %v3508, %v3507
    %v3674 = vpack.c.b16 %v3510, %v3509
    %v3675 = vpack.c.b16 %v3512, %v3511
    %v3676 = vpack.c.b16 %v3514, %v3513
    %v3677 = vpack.c.b16 %v3516, %v3515
    %v3678 = vpack.c.b16 %v3518, %v3517
    %v3679 = vpack.c.b16 %v3520, %v3519
    %v3680 = vpack.c.b16 %v3522, %v3521
    %v3681 = vpack.c.b16 %v3524, %v3523
    %v3682 = vpack.c.b16 %v3526, %v3525
    %v3683 = vpack.c.b16 %v3528, %v3527
    %v3684 = vpack.c.b16 %v3530, %v3529
    %v3685 = vpack.c.b16 %v3532, %v3531
    %v3686 = vpack.c.b16 %v3534, %v3533
    %v3687 = vpack.c.b16 %v3536, %v3535
    %v3688 = vpack.c.b16 %v3538, %v3537
    %v3689 = vpack.c.b16 %v3540, %v3539
    %v3690 = vpack.c.b16 %v3542, %v3541
    %v3691 = vpack.c.b16 %v3544, %v3543
    %v3692 = vpack.c.b16 %v3546, %v3545
    %v3693 = vpack.c.b16 %v3548, %v3547
    %v3694 = vpack.c.b16 %v3550, %v3549
    %v3695 = vpack.c.b16 %v3552, %v3551
    %v3696 = vpack.c.b16 %v3554, %v3553
    %v3697 = vpack.c.b16 %v3556, %v3555
    %v3698 = vpack.c.b16 %v3558, %v3557
    %v3699 = vpack.c.b16 %v3560, %v3559
    %v3700 = vpack.c.b16 %v3562, %v3561
    %v3701 = vpack.c.b16 %v3564, %v3563
    %v3702 = vpack.c.b16 %v3566, %v3565
    %3839 = vmatprep.subr.bf16.mxu0 0
    %3840 = vmatpush1.bf16.msra.mxu0 %v3567
    %3841 = vmatprep.subr.bf16.mxu0 0
    %3842 = vmatpush1.bf16.msra.mxu0 %v3568
    %3843 = vmatprep.subr.bf16.mxu0 0
    %3844 = vmatpush1.bf16.msra.mxu0 %v3569
    %3845 = vmatprep.subr.bf16.mxu0 0
    %3846 = vmatpush1.bf16.msra.mxu0 %v3570
    %3847 = vmatprep.subr.bf16.mxu0 0
    %3848 = vmatpush1.bf16.msra.mxu0 %v3571
    %3849 = vmatprep.subr.bf16.mxu0 0
    %3850 = vmatpush1.bf16.msra.mxu0 %v3572
    %3851 = vmatprep.subr.bf16.mxu0 0
    %3852 = vmatpush1.bf16.msra.mxu0 %v3573
    %3853 = vmatprep.subr.bf16.mxu0 0
    %3854 = vmatpush1.bf16.msra.mxu0 %v3574
    %3855 = vmatprep.subr.bf16.mxu0 0
    %3856 = vmatpush1.bf16.msra.mxu0 %v3575
    %3857 = vmatprep.subr.bf16.mxu0 0
    %3858 = vmatpush1.bf16.msra.mxu0 %v3576
    %3859 = vmatprep.subr.bf16.mxu0 0
    %3860 = vmatpush1.bf16.msra.mxu0 %v3577
    %3861 = vmatprep.subr.bf16.mxu0 0
    %3862 = vmatpush1.bf16.msra.mxu0 %v3578
    %3863 = vmatprep.subr.bf16.mxu0 0
    %3864 = vmatpush1.bf16.msra.mxu0 %v3579
    %3865 = vmatprep.subr.bf16.mxu0 0
    %3866 = vmatpush1.bf16.msra.mxu0 %v3580
    %3867 = vmatprep.subr.bf16.mxu0 0
    %3868 = vmatpush1.bf16.msra.mxu0 %v3581
    %3869 = vmatprep.subr.bf16.mxu0 0
    %3870 = vmatpush1.bf16.msra.mxu0 %v3582
    %3871 = vmatprep.mubr.bf16.mxu0 %v2728
    %3872 = vmatmul.mubr.bf16.gmra.mrb[0].mxu0 %v2727
    %v3873 = vpop.f32.mrb[0].mxu0
    %v3874 = vadd.f32 %v3021, %v3873
    %v3875 = vpop.f32.mrb[0].mxu0
    %v3876 = vpop.f32.mrb[0].mxu0
    %v3877 = vpop.f32.mrb[0].mxu0
    %3878 = vdwg.mxu0
    %3879 = vmatprep.subr.bf16.mxu0 0
    %3880 = vmatpush1.bf16.msra.mxu0 %v3583
    %3881 = vmatprep.subr.bf16.mxu0 0
    %3882 = vmatpush1.bf16.msra.mxu0 %v3584
    %3883 = vmatprep.subr.bf16.mxu0 0
    %3884 = vmatpush1.bf16.msra.mxu0 %v3585
    %3885 = vmatprep.subr.bf16.mxu0 0
    %3886 = vmatpush1.bf16.msra.mxu0 %v3586
    %3887 = vmatprep.subr.bf16.mxu0 0
    %3888 = vmatpush1.bf16.msra.mxu0 %v3587
    %3889 = vmatprep.subr.bf16.mxu0 0
    %3890 = vmatpush1.bf16.msra.mxu0 %v3588
    %3891 = vmatprep.subr.bf16.mxu0 0
    %3892 = vmatpush1.bf16.msra.mxu0 %v3589
    %3893 = vmatprep.subr.bf16.mxu0 0
    %3894 = vmatpush1.bf16.msra.mxu0 %v3590
    %3895 = vmatprep.subr.bf16.mxu0 0
    %3896 = vmatpush1.bf16.msra.mxu0 %v3591
    %3897 = vmatprep.subr.bf16.mxu0 0
    %3898 = vmatpush1.bf16.msra.mxu0 %v3592
    %3899 = vmatprep.subr.bf16.mxu0 0
    %3900 = vmatpush1.bf16.msra.mxu0 %v3593
    %3901 = vmatprep.subr.bf16.mxu0 0
    %3902 = vmatpush1.bf16.msra.mxu0 %v3594
    %3903 = vmatprep.subr.bf16.mxu0 0
    %3904 = vmatpush1.bf16.msra.mxu0 %v3595
    %3905 = vmatprep.subr.bf16.mxu0 0
    %3906 = vmatpush1.bf16.msra.mxu0 %v3596
    %3907 = vmatprep.subr.bf16.mxu0 0
    %3908 = vmatpush1.bf16.msra.mxu0 %v3597
    %3909 = vmatprep.subr.bf16.mxu0 0
    %3910 = vmatpush1.bf16.msra.mxu0 %v3598
    %3911 = vmatprep.mubr.bf16.mxu0 %v2730
    %3912 = vmatmul.mubr.bf16.gmra.mrb[0].mxu0 %v2729
    %v3913 = vpop.f32.mrb[0].mxu0
    %v3914 = vadd.f32 %v3874, %v3913
    %v3915 = vpop.f32.mrb[0].mxu0
    %v3916 = vpop.f32.mrb[0].mxu0
    %v3917 = vpop.f32.mrb[0].mxu0
    %3918 = vdwg.mxu0
    %3919 = vmatprep.subr.bf16.mxu0 0
    %3920 = vmatpush1.bf16.msra.mxu0 %v3599
    %3921 = vmatprep.subr.bf16.mxu0 0
    %3922 = vmatpush1.bf16.msra.mxu0 %v3600
    %3923 = vmatprep.subr.bf16.mxu0 0
    %3924 = vmatpush1.bf16.msra.mxu0 %v3601
    %3925 = vmatprep.subr.bf16.mxu0 0
    %3926 = vmatpush1.bf16.msra.mxu0 %v3602
    %3927 = vmatprep.subr.bf16.mxu0 0
    %3928 = vmatpush1.bf16.msra.mxu0 %v3603
    %3929 = vmatprep.subr.bf16.mxu0 0
    %3930 = vmatpush1.bf16.msra.mxu0 %v3604
    %3931 = vmatprep.subr.bf16.mxu0 0
    %3932 = vmatpush1.bf16.msra.mxu0 %v3605
    %3933 = vmatprep.subr.bf16.mxu0 0
    %3934 = vmatpush1.bf16.msra.mxu0 %v3606
    %3935 = vmatprep.subr.bf16.mxu0 0
    %3936 = vmatpush1.bf16.msra.mxu0 %v3607
    %3937 = vmatprep.subr.bf16.mxu0 0
    %3938 = vmatpush1.bf16.msra.mxu0 %v3608
    %3939 = vmatprep.subr.bf16.mxu0 0
    %3940 = vmatpush1.bf16.msra.mxu0 %v3609
    %3941 = vmatprep.subr.bf16.mxu0 0
    %3942 = vmatpush1.bf16.msra.mxu0 %v3610
    %3943 = vmatprep.subr.bf16.mxu0 0
    %3944 = vmatpush1.bf16.msra.mxu0 %v3611
    %3945 = vmatprep.subr.bf16.mxu0 0
    %3946 = vmatpush1.bf16.msra.mxu0 %v3612
    %3947 = vmatprep.subr.bf16.mxu0 0
    %3948 = vmatpush1.bf16.msra.mxu0 %v3613
    %3949 = vmatprep.subr.bf16.mxu0 0
    %3950 = vmatpush1.bf16.msra.mxu0 %v3614
    %3951 = vmatprep.mubr.bf16.mxu0 %v2732
    %3952 = vmatmul.mubr.bf16.gmra.mrb[0].mxu0 %v2731
    %v3953 = vpop.f32.mrb[0].mxu0
    %v3954 = vadd.f32 %v3914, %v3953
    %v3955 = vpop.f32.mrb[0].mxu0
    %v3956 = vpop.f32.mrb[0].mxu0
    %v3957 = vpop.f32.mrb[0].mxu0
    %3958 = vdwg.mxu0
    %3959 = vmatprep.subr.bf16.mxu0 0
    %3960 = vmatpush1.bf16.msra.mxu0 %v3615
    %3961 = vmatprep.subr.bf16.mxu0 0
    %3962 = vmatpush1.bf16.msra.mxu0 %v3616
    %3963 = vmatprep.subr.bf16.mxu0 0
    %3964 = vmatpush1.bf16.msra.mxu0 %v3617
    %3965 = vmatprep.subr.bf16.mxu0 0
    %3966 = vmatpush1.bf16.msra.mxu0 %v3618
    %3967 = vmatprep.subr.bf16.mxu0 0
    %3968 = vmatpush1.bf16.msra.mxu0 %v3619
    %3969 = vmatprep.subr.bf16.mxu0 0
    %3970 = vmatpush1.bf16.msra.mxu0 %v3620
    %3971 = vmatprep.subr.bf16.mxu0 0
    %3972 = vmatpush1.bf16.msra.mxu0 %v3621
    %3973 = vmatprep.subr.bf16.mxu0 0
    %3974 = vmatpush1.bf16.msra.mxu0 %v3622
    %3975 = vmatprep.subr.bf16.mxu0 0
    %3976 = vmatpush1.bf16.msra.mxu0 %v3623
    %3977 = vmatprep.subr.bf16.mxu0 0
    %3978 = vmatpush1.bf16.msra.mxu0 %v3624
    %3979 = vmatprep.subr.bf16.mxu0 0
    %3980 = vmatpush1.bf16.msra.mxu0 %v3625
    %3981 = vmatprep.subr.bf16.mxu0 0
    %3982 = vmatpush1.bf16.msra.mxu0 %v3626
    %3983 = vmatprep.subr.bf16.mxu0 0
    %3984 = vmatpush1.bf16.msra.mxu0 %v3627
    %3985 = vmatprep.subr.bf16.mxu0 0
    %3986 = vmatpush1.bf16.msra.mxu0 %v3628
    %3987 = vmatprep.subr.bf16.mxu0 0
    %3988 = vmatpush1.bf16.msra.mxu0 %v3629
    %3989 = vmatprep.subr.bf16.mxu0 0
    %3990 = vmatpush1.bf16.msra.mxu0 %v3630
    %3991 = vmatprep.mubr.bf16.mxu0 %v2734
    %3992 = vmatmul.mubr.bf16.gmra.mrb[0].mxu0 %v2733
    %v3993 = vpop.f32.mrb[0].mxu0
    %v3994 = vadd.f32 %v3954, %v3993
    %v3995 = vpop.f32.mrb[0].mxu0
    %v3996 = vpop.f32.mrb[0].mxu0
    %v3997 = vpop.f32.mrb[0].mxu0
    %3998 = vdwg.mxu0
    %3999 = vmatprep.subr.bf16.mxu0 0
    %4000 = vmatpush1.bf16.msra.mxu0 %v3631
    %4001 = vmatprep.subr.bf16.mxu0 0
    %4002 = vmatpush1.bf16.msra.mxu0 %v3632
    %4003 = vmatprep.subr.bf16.mxu0 0
    %4004 = vmatpush1.bf16.msra.mxu0 %v3633
    %4005 = vmatprep.subr.bf16.mxu0 0
    %4006 = vmatpush1.bf16.msra.mxu0 %v3634
    %4007 = vmatprep.subr.bf16.mxu0 0
    %4008 = vmatpush1.bf16.msra.mxu0 %v3635
    %4009 = vmatprep.subr.bf16.mxu0 0
    %4010 = vmatpush1.bf16.msra.mxu0 %v3636
    %4011 = vmatprep.subr.bf16.mxu0 0
    %4012 = vmatpush1.bf16.msra.mxu0 %v3637
    %4013 = vmatprep.subr.bf16.mxu0 0
    %4014 = vmatpush1.bf16.msra.mxu0 %v3638
    %4015 = vmatprep.subr.bf16.mxu0 0
    %4016 = vmatpush1.bf16.msra.mxu0 %v3639
    %4017 = vmatprep.subr.bf16.mxu0 0
    %4018 = vmatpush1.bf16.msra.mxu0 %v3640
    %4019 = vmatprep.subr.bf16.mxu0 0
    %4020 = vmatpush1.bf16.msra.mxu0 %v3641
    %4021 = vmatprep.subr.bf16.mxu0 0
    %4022 = vmatpush1.bf16.msra.mxu0 %v3642
    %4023 = vmatprep.subr.bf16.mxu0 0
    %4024 = vmatpush1.bf16.msra.mxu0 %v3643
    %4025 = vmatprep.subr.bf16.mxu0 0
    %4026 = vmatpush1.bf16.msra.mxu0 %v3644
    %4027 = vmatprep.subr.bf16.mxu0 0
    %4028 = vmatpush1.bf16.msra.mxu0 %v3645
    %4029 = vmatprep.subr.bf16.mxu0 0
    %4030 = vmatpush1.bf16.msra.mxu0 %v3646
    %4031 = vmatprep.mubr.bf16.mxu0 %v2736
    %4032 = vmatmul.mubr.bf16.gmra.mrb[0].mxu0 %v2735
    %v4033 = vpop.f32.mrb[0].mxu0
    %v4034 = vadd.f32 %v3994, %v4033
    %v4035 = vpop.f32.mrb[0].mxu0
    %v4036 = vpop.f32.mrb[0].mxu0
    %v4037 = vpop.f32.mrb[0].mxu0
    %4038 = vdwg.mxu0
    %4039 = vmatprep.subr.bf16.mxu0 0
    %4040 = vmatpush1.bf16.msra.mxu0 %v3647
    %4041 = vmatprep.subr.bf16.mxu0 0
    %4042 = vmatpush1.bf16.msra.mxu0 %v3648
    %4043 = vmatprep.subr.bf16.mxu0 0
    %4044 = vmatpush1.bf16.msra.mxu0 %v3649
    %4045 = vmatprep.subr.bf16.mxu0 0
    %4046 = vmatpush1.bf16.msra.mxu0 %v3650
    %4047 = vmatprep.subr.bf16.mxu0 0
    %4048 = vmatpush1.bf16.msra.mxu0 %v3651
    %4049 = vmatprep.subr.bf16.mxu0 0
    %4050 = vmatpush1.bf16.msra.mxu0 %v3652
    %4051 = vmatprep.subr.bf16.mxu0 0
    %4052 = vmatpush1.bf16.msra.mxu0 %v3653
    %4053 = vmatprep.subr.bf16.mxu0 0
    %4054 = vmatpush1.bf16.msra.mxu0 %v3654
    %4055 = vmatprep.subr.bf16.mxu0 0
    %4056 = vmatpush1.bf16.msra.mxu0 %v3655
    %4057 = vmatprep.subr.bf16.mxu0 0
    %4058 = vmatpush1.bf16.msra.mxu0 %v3656
    %4059 = vmatprep.subr.bf16.mxu0 0
    %4060 = vmatpush1.bf16.msra.mxu0 %v3657
    %4061 = vmatprep.subr.bf16.mxu0 0
    %4062 = vmatpush1.bf16.msra.mxu0 %v3658
    %4063 = vmatprep.subr.bf16.mxu0 0
    %4064 = vmatpush1.bf16.msra.mxu0 %v3659
    %4065 = vmatprep.subr.bf16.mxu0 0
    %4066 = vmatpush1.bf16.msra.mxu0 %v3660
    %4067 = vmatprep.subr.bf16.mxu0 0
    %4068 = vmatpush1.bf16.msra.mxu0 %v3661
    %4069 = vmatprep.subr.bf16.mxu0 0
    %4070 = vmatpush1.bf16.msra.mxu0 %v3662
    %4071 = vmatprep.mubr.bf16.mxu0 %v2738
    %4072 = vmatmul.mubr.bf16.gmra.mrb[0].mxu0 %v2737
    %v4073 = vpop.f32.mrb[0].mxu0
    %v4074 = vadd.f32 %v4034, %v4073
    %v4075 = vpop.f32.mrb[0].mxu0
    %v4076 = vpop.f32.mrb[0].mxu0
    %v4077 = vpop.f32.mrb[0].mxu0
    %4078 = vdwg.mxu0
    %4079 = vmatprep.subr.bf16.mxu0 0
    %4080 = vmatpush1.bf16.msra.mxu0 %v3663
    %4081 = vmatprep.subr.bf16.mxu0 0
    %4082 = vmatpush1.bf16.msra.mxu0 %v3664
    %4083 = vmatprep.subr.bf16.mxu0 0
    %4084 = vmatpush1.bf16.msra.mxu0 %v3665
    %4085 = vmatprep.subr.bf16.mxu0 0
    %4086 = vmatpush1.bf16.msra.mxu0 %v3666
    %4087 = vmatprep.subr.bf16.mxu0 0
    %4088 = vmatpush1.bf16.msra.mxu0 %v3667
    %4089 = vmatprep.subr.bf16.mxu0 0
    %4090 = vmatpush1.bf16.msra.mxu0 %v3668
    %4091 = vmatprep.subr.bf16.mxu0 0
    %4092 = vmatpush1.bf16.msra.mxu0 %v3669
    %4093 = vmatprep.subr.bf16.mxu0 0
    %4094 = vmatpush1.bf16.msra.mxu0 %v3670
    %4095 = vmatprep.subr.bf16.mxu0 0
    %4096 = vmatpush1.bf16.msra.mxu0 %v3671
    %4097 = vmatprep.subr.bf16.mxu0 0
    %4098 = vmatpush1.bf16.msra.mxu0 %v3672
    %4099 = vmatprep.subr.bf16.mxu0 0
    %4100 = vmatpush1.bf16.msra.mxu0 %v3673
    %4101 = vmatprep.subr.bf16.mxu0 0
    %4102 = vmatpush1.bf16.msra.mxu0 %v3674
    %4103 = vmatprep.subr.bf16.mxu0 0
    %4104 = vmatpush1.bf16.msra.mxu0 %v3675
    %4105 = vmatprep.subr.bf16.mxu0 0
    %4106 = vmatpush1.bf16.msra.mxu0 %v3676
    %4107 = vmatprep.subr.bf16.mxu0 0
    %4108 = vmatpush1.bf16.msra.mxu0 %v3677
    %4109 = vmatprep.subr.bf16.mxu0 0
    %4110 = vmatpush1.bf16.msra.mxu0 %v3678
    %4111 = vmatprep.mubr.bf16.mxu0 %v2740
    %4112 = vmatmul.mubr.bf16.gmra.mrb[0].mxu0 %v2739
    %v4113 = vpop.f32.mrb[0].mxu0
    %v4114 = vadd.f32 %v4074, %v4113
    %v4115 = vpop.f32.mrb[0].mxu0
    %v4116 = vpop.f32.mrb[0].mxu0
    %v4117 = vpop.f32.mrb[0].mxu0
    %4118 = vdwg.mxu0
    %4119 = vmatprep.subr.bf16.mxu0 0
    %4120 = vmatpush1.bf16.msra.mxu0 %v3679
    %4121 = vmatprep.subr.bf16.mxu0 0
    %4122 = vmatpush1.bf16.msra.mxu0 %v3680
    %4123 = vmatprep.subr.bf16.mxu0 0
    %4124 = vmatpush1.bf16.msra.mxu0 %v3681
    %4125 = vmatprep.subr.bf16.mxu0 0
    %4126 = vmatpush1.bf16.msra.mxu0 %v3682
    %4127 = vmatprep.subr.bf16.mxu0 0
    %4128 = vmatpush1.bf16.msra.mxu0 %v3683
    %4129 = vmatprep.subr.bf16.mxu0 0
    %4130 = vmatpush1.bf16.msra.mxu0 %v3684
    %4131 = vmatprep.subr.bf16.mxu0 0
    %4132 = vmatpush1.bf16.msra.mxu0 %v3685
    %4133 = vmatprep.subr.bf16.mxu0 0
    %4134 = vmatpush1.bf16.msra.mxu0 %v3686
    %4135 = vmatprep.subr.bf16.mxu0 0
    %4136 = vmatpush1.bf16.msra.mxu0 %v3687
    %4137 = vmatprep.subr.bf16.mxu0 0
    %4138 = vmatpush1.bf16.msra.mxu0 %v3688
    %4139 = vmatprep.subr.bf16.mxu0 0
    %4140 = vmatpush1.bf16.msra.mxu0 %v3689
    %4141 = vmatprep.subr.bf16.mxu0 0
    %4142 = vmatpush1.bf16.msra.mxu0 %v3690
    %4143 = vmatprep.subr.bf16.mxu0 0
    %4144 = vmatpush1.bf16.msra.mxu0 %v3691
    %4145 = vmatprep.subr.bf16.mxu0 0
    %4146 = vmatpush1.bf16.msra.mxu0 %v3692
    %4147 = vmatprep.subr.bf16.mxu0 0
    %4148 = vmatpush1.bf16.msra.mxu0 %v3693
    %4149 = vmatprep.subr.bf16.mxu0 0
    %4150 = vmatpush1.bf16.msra.mxu0 %v3694
    %4151 = vmatprep.mubr.bf16.mxu0 %v2742
    %4152 = vmatmul.mubr.bf16.gmra.mrb[0].mxu0 %v2741
    %v4153 = vpop.f32.mrb[0].mxu0
    %v4154 = vadd.f32 %v4114, %v4153
    %v4155 = vpop.f32.mrb[0].mxu0
    %v4156 = vpop.f32.mrb[0].mxu0
    %v4157 = vpop.f32.mrb[0].mxu0
    %4158 = vdwg.mxu0
    %4159 = vmatprep.subr.bf16.mxu0 0
    %4160 = vmatpush1.bf16.msra.mxu0 %v3695
    %4161 = vmatprep.subr.bf16.mxu0 0
    %4162 = vmatpush1.bf16.msra.mxu0 %v3696
    %4163 = vmatprep.subr.bf16.mxu0 0
    %4164 = vmatpush1.bf16.msra.mxu0 %v3697
    %4165 = vmatprep.subr.bf16.mxu0 0
    %4166 = vmatpush1.bf16.msra.mxu0 %v3698
    %4167 = vmatprep.subr.bf16.mxu0 0
    %4168 = vmatpush1.bf16.msra.mxu0 %v3699
    %4169 = vmatprep.subr.bf16.mxu0 0
    %4170 = vmatpush1.bf16.msra.mxu0 %v3700
    %4171 = vmatprep.subr.bf16.mxu0 0
    %4172 = vmatpush1.bf16.msra.mxu0 %v3701
    %4173 = vmatprep.subr.bf16.mxu0 0
    %4174 = vmatpush1.bf16.msra.mxu0 %v3702
    %4175 = vmatprep.subr.bf16.mxu0 0
    %4176 = vmatpush1.bf16.msra.mxu0 0
    %4177 = vmatprep.subr.bf16.mxu0 0
    %4178 = vmatpush1.bf16.msra.mxu0 0
    %4179 = vmatprep.subr.bf16.mxu0 0
    %4180 = vmatpush1.bf16.msra.mxu0 0
    %4181 = vmatprep.subr.bf16.mxu0 0
    %4182 = vmatpush1.bf16.msra.mxu0 0
    %4183 = vmatprep.subr.bf16.mxu0 0
    %4184 = vmatpush1.bf16.msra.mxu0 0
    %4185 = vmatprep.subr.bf16.mxu0 0
    %4186 = vmatpush1.bf16.msra.mxu0 0
    %4187 = vmatprep.subr.bf16.mxu0 0
    %4188 = vmatpush1.bf16.msra.mxu0 0
    %4189 = vmatprep.subr.bf16.mxu0 0
    %4190 = vmatpush1.bf16.msra.mxu0 0
    %4191 = vmatprep.mubr.bf16.mxu0 0
    %4192 = vmatmul.mubr.bf16.gmra.mrb[0].mxu0 %v2743
    %v4193 = vpop.f32.mrb[0].mxu0
    %v4194 = vadd.f32 %v4154, %v4193
    %v4195 = vpop.f32.mrb[0].mxu0
    %v4196 = vpop.f32.mrb[0].mxu0
    %v4197 = vpop.f32.mrb[0].mxu0
    %4198 = vdwg.mxu0
    %v4199 = vtanh.pop %v4194
    %v4200 = vld [vmem:[#allocation10] sm:$0xf]
    %v4201 = vld [vmem:[#allocation10 + $0x4] sm:$0xf]
    %v4202 = vld [vmem:[#allocation10 + $0x8] sm:$0xf]
    %v4203 = vld [vmem:[#allocation10 + $0xc] sm:$0xf]
    %v4204 = vld [vmem:[#allocation10 + $0x10] sm:$0xf]
    %v4205 = vld [vmem:[#allocation10 + $0x14] sm:$0xf]
    %v4206 = vld [vmem:[#allocation10 + $0x18] sm:$0xf]
    %v4207 = vld [vmem:[#allocation10 + $0x1c] sm:$0xf]
    %v4208 = vld [vmem:[#allocation10 + $0x20] sm:$0xf]
    %v4209 = vld [vmem:[#allocation10 + $0x24] sm:$0xf]
    %v4210 = vld [vmem:[#allocation10 + $0x28] sm:$0xf]
    %v4211 = vld [vmem:[#allocation10 + $0x2c] sm:$0xf]
    %v4212 = vld [vmem:[#allocation10 + $0x30] sm:$0xf]
    %v4213 = vld [vmem:[#allocation10 + $0x34] sm:$0xf]
    %v4214 = vld [vmem:[#allocation10 + $0x38] sm:$0xf]
    %v4215 = vld [vmem:[#allocation10 + $0x3c] sm:$0xf]
    %v4216 = vld [vmem:[#allocation10 + $0x40] sm:$0xf]
    %v4217 = vld [vmem:[#allocation10 + $0x44] sm:$0xf]
    %v4218 = vld [vmem:[#allocation10 + $0x48] sm:$0xf]
    %v4219 = vld [vmem:[#allocation10 + $0x4c] sm:$0xf]
    %v4220 = vld [vmem:[#allocation10 + $0x50] sm:$0xf]
    %v4221 = vld [vmem:[#allocation10 + $0x54] sm:$0xf]
    %v4222 = vld [vmem:[#allocation10 + $0x58] sm:$0xf]
    %v4223 = vld [vmem:[#allocation10 + $0x5c] sm:$0xf]
    %v4224 = vld [vmem:[#allocation10 + $0x60] sm:$0xf]
    %v4225 = vld [vmem:[#allocation10 + $0x64] sm:$0xf]
    %v4226 = vld [vmem:[#allocation10 + $0x68] sm:$0xf]
    %v4227 = vld [vmem:[#allocation10 + $0x6c] sm:$0xf]
    %v4228 = vld [vmem:[#allocation10 + $0x70] sm:$0xf]
    %v4229 = vld [vmem:[#allocation10 + $0x74] sm:$0xf]
    %v4230 = vld [vmem:[#allocation10 + $0x78] sm:$0xf]
    %v4231 = vld [vmem:[#allocation10 + $0x7c] sm:$0xf]
    %v4232 = vld [vmem:[#allocation10 + $0x80] sm:$0xf]
    %v4233 = vld [vmem:[#allocation10 + $0x84] sm:$0xf]
    %v4234 = vld [vmem:[#allocation10 + $0x88] sm:$0xf]
    %v4235 = vld [vmem:[#allocation10 + $0x8c] sm:$0xf]
    %v4236 = vld [vmem:[#allocation10 + $0x90] sm:$0xf]
    %v4237 = vld [vmem:[#allocation10 + $0x94] sm:$0xf]
    %v4238 = vld [vmem:[#allocation10 + $0x98] sm:$0xf]
    %v4239 = vld [vmem:[#allocation10 + $0x9c] sm:$0xf]
    %v4240 = vld [vmem:[#allocation10 + $0xa0] sm:$0xf]
    %v4241 = vld [vmem:[#allocation10 + $0xa4] sm:$0xf]
    %v4242 = vld [vmem:[#allocation10 + $0xa8] sm:$0xf]
    %v4243 = vld [vmem:[#allocation10 + $0xac] sm:$0xf]
    %v4244 = vld [vmem:[#allocation10 + $0xb0] sm:$0xf]
    %v4245 = vld [vmem:[#allocation10 + $0xb4] sm:$0xf]
    %v4246 = vld [vmem:[#allocation10 + $0xb8] sm:$0xf]
    %v4247 = vld [vmem:[#allocation10 + $0xbc] sm:$0xf]
    %v4248 = vld [vmem:[#allocation10 + $0xc0] sm:$0xf]
    %v4249 = vld [vmem:[#allocation10 + $0xc4] sm:$0xf]
    %v4250 = vld [vmem:[#allocation10 + $0xc8] sm:$0xf]
    %v4251 = vld [vmem:[#allocation10 + $0xcc] sm:$0xf]
    %v4252 = vld [vmem:[#allocation10 + $0xd0] sm:$0xf]
    %v4253 = vld [vmem:[#allocation10 + $0xd4] sm:$0xf]
    %v4254 = vld [vmem:[#allocation10 + $0xd8] sm:$0xf]
    %v4255 = vld [vmem:[#allocation10 + $0xdc] sm:$0xf]
    %v4256 = vld [vmem:[#allocation10 + $0xe0] sm:$0xf]
    %v4257 = vld [vmem:[#allocation10 + $0xe4] sm:$0xf]
    %v4258 = vld [vmem:[#allocation10 + $0xe8] sm:$0xf]
    %v4259 = vld [vmem:[#allocation10 + $0xec] sm:$0xf]
    %v4260 = vld [vmem:[#allocation10 + $0xf0] sm:$0xf]
    %v4261 = vld [vmem:[#allocation10 + $0xf4] sm:$0xf]
    %v4262 = vld [vmem:[#allocation10 + $0xf8] sm:$0xf]
    %v4263 = vld [vmem:[#allocation10 + $0xfc] sm:$0xf]
    %v4264 = vld [vmem:[#allocation10 + $0x100] sm:$0xf]
    %v4265 = vld [vmem:[#allocation10 + $0x104] sm:$0xf]
    %v4266 = vld [vmem:[#allocation10 + $0x108] sm:$0xf]
    %v4267 = vld [vmem:[#allocation10 + $0x10c] sm:$0xf]
    %v4268 = vld [vmem:[#allocation10 + $0x110] sm:$0xf]
    %v4269 = vld [vmem:[#allocation10 + $0x114] sm:$0xf]
    %v4270 = vld [vmem:[#allocation10 + $0x118] sm:$0xf]
    %v4271 = vld [vmem:[#allocation10 + $0x11c] sm:$0xf]
    %v4272 = vld [vmem:[#allocation10 + $0x120] sm:$0xf]
    %v4273 = vld [vmem:[#allocation10 + $0x124] sm:$0xf]
    %v4274 = vld [vmem:[#allocation10 + $0x128] sm:$0xf]
    %v4275 = vld [vmem:[#allocation10 + $0x12c] sm:$0xf]
    %v4276 = vld [vmem:[#allocation10 + $0x130] sm:$0xf]
    %v4277 = vld [vmem:[#allocation10 + $0x134] sm:$0xf]
    %v4278 = vld [vmem:[#allocation10 + $0x138] sm:$0xf]
    %v4279 = vld [vmem:[#allocation10 + $0x13c] sm:$0xf]
    %v4280 = vld [vmem:[#allocation10 + $0x140] sm:$0xf]
    %v4281 = vld [vmem:[#allocation10 + $0x144] sm:$0xf]
    %v4282 = vld [vmem:[#allocation10 + $0x148] sm:$0xf]
    %v4283 = vld [vmem:[#allocation10 + $0x14c] sm:$0xf]
    %v4284 = vld [vmem:[#allocation10 + $0x150] sm:$0xf]
    %v4285 = vld [vmem:[#allocation10 + $0x154] sm:$0xf]
    %v4286 = vld [vmem:[#allocation10 + $0x158] sm:$0xf]
    %v4287 = vld [vmem:[#allocation10 + $0x15c] sm:$0xf]
    %v4288 = vld [vmem:[#allocation10 + $0x160] sm:$0xf]
    %v4289 = vld [vmem:[#allocation10 + $0x164] sm:$0xf]
    %v4290 = vld [vmem:[#allocation10 + $0x168] sm:$0xf]
    %v4291 = vld [vmem:[#allocation10 + $0x16c] sm:$0xf]
    %v4292 = vld [vmem:[#allocation10 + $0x170] sm:$0xf]
    %v4293 = vld [vmem:[#allocation10 + $0x174] sm:$0xf]
    %v4294 = vld [vmem:[#allocation10 + $0x178] sm:$0xf]
    %v4295 = vld [vmem:[#allocation10 + $0x17c] sm:$0xf]
    %v4296 = vld [vmem:[#allocation10 + $0x180] sm:$0xf]
    %v4297 = vld [vmem:[#allocation10 + $0x184] sm:$0xf]
    %v4298 = vld [vmem:[#allocation10 + $0x188] sm:$0xf]
    %v4299 = vld [vmem:[#allocation10 + $0x18c] sm:$0xf]
    %v4300 = vld [vmem:[#allocation10 + $0x190] sm:$0xf]
    %v4301 = vld [vmem:[#allocation10 + $0x194] sm:$0xf]
    %v4302 = vld [vmem:[#allocation10 + $0x198] sm:$0xf]
    %v4303 = vld [vmem:[#allocation10 + $0x19c] sm:$0xf]
    %v4304 = vld [vmem:[#allocation10 + $0x1a0] sm:$0xf]
    %v4305 = vld [vmem:[#allocation10 + $0x1a4] sm:$0xf]
    %v4306 = vld [vmem:[#allocation10 + $0x1a8] sm:$0xf]
    %v4307 = vld [vmem:[#allocation10 + $0x1ac] sm:$0xf]
    %v4308 = vld [vmem:[#allocation10 + $0x1b0] sm:$0xf]
    %v4309 = vld [vmem:[#allocation10 + $0x1b4] sm:$0xf]
    %v4310 = vld [vmem:[#allocation10 + $0x1b8] sm:$0xf]
    %v4311 = vld [vmem:[#allocation10 + $0x1bc] sm:$0xf]
    %v4312 = vld [vmem:[#allocation10 + $0x1c0] sm:$0xf]
    %v4313 = vld [vmem:[#allocation10 + $0x1c4] sm:$0xf]
    %v4314 = vld [vmem:[#allocation10 + $0x1c8] sm:$0xf]
    %v4315 = vld [vmem:[#allocation10 + $0x1cc] sm:$0xf]
    %v4316 = vld [vmem:[#allocation10 + $0x1d0] sm:$0xf]
    %v4317 = vld [vmem:[#allocation10 + $0x1d4] sm:$0xf]
    %v4318 = vld [vmem:[#allocation10 + $0x1d8] sm:$0xf]
    %v4319 = vld [vmem:[#allocation10 + $0x1dc] sm:$0xf]
    %v4320 = vld [vmem:[#allocation10 + $0x1e0] sm:$0xf]
    %v4321 = vld [vmem:[#allocation10 + $0x1e4] sm:$0xf]
    %v4322 = vld [vmem:[#allocation10 + $0x1e8] sm:$0xf]
    %v4323 = vld [vmem:[#allocation10 + $0x1ec] sm:$0xf]
    %v4324 = vld [vmem:[#allocation10 + $0x1f0] sm:$0xf]
    %v4325 = vld [vmem:[#allocation10 + $0x1f4] sm:$0xf]
    %v4326 = vld [vmem:[#allocation10 + $0x1f8] sm:$0xf]
    %v4327 = vld [vmem:[#allocation10 + $0x1fc] sm:$0xf]
    %v4328 = vld [vmem:[#allocation10 + $0x200] sm:$0xf]
    %v4329 = vld [vmem:[#allocation10 + $0x204] sm:$0xf]
    %v4330 = vld [vmem:[#allocation10 + $0x208] sm:$0xf]
    %v4331 = vld [vmem:[#allocation10 + $0x20c] sm:$0xf]
    %v4332 = vld [vmem:[#allocation10 + $0x210] sm:$0xf]
    %v4333 = vld [vmem:[#allocation10 + $0x214] sm:$0xf]
    %v4334 = vld [vmem:[#allocation10 + $0x218] sm:$0xf]
    %v4335 = vld [vmem:[#allocation10 + $0x21c] sm:$0xf]
    %v4336 = vld [vmem:[#allocation10 + $0x220] sm:$0xf]
    %v4337 = vld [vmem:[#allocation10 + $0x224] sm:$0xf]
    %v4338 = vld [vmem:[#allocation10 + $0x228] sm:$0xf]
    %v4339 = vld [vmem:[#allocation10 + $0x22c] sm:$0xf]
    %v4340 = vld [vmem:[#allocation10 + $0x230] sm:$0xf]
    %v4341 = vld [vmem:[#allocation10 + $0x234] sm:$0xf]
    %v4342 = vld [vmem:[#allocation10 + $0x238] sm:$0xf]
    %v4343 = vld [vmem:[#allocation10 + $0x23c] sm:$0xf]
    %v4344 = vld [vmem:[#allocation10 + $0x240] sm:$0xf]
    %v4345 = vld [vmem:[#allocation10 + $0x244] sm:$0xf]
    %v4346 = vld [vmem:[#allocation10 + $0x248] sm:$0xf]
    %v4347 = vld [vmem:[#allocation10 + $0x24c] sm:$0xf]
    %v4348 = vld [vmem:[#allocation10 + $0x250] sm:$0xf]
    %v4349 = vld [vmem:[#allocation10 + $0x254] sm:$0xf]
    %v4350 = vld [vmem:[#allocation10 + $0x258] sm:$0xf]
    %v4351 = vld [vmem:[#allocation10 + $0x25c] sm:$0xf]
    %v4352 = vld [vmem:[#allocation10 + $0x260] sm:$0xf]
    %v4353 = vld [vmem:[#allocation10 + $0x264] sm:$0xf]
    %v4354 = vld [vmem:[#allocation10 + $0x268] sm:$0xf]
    %v4355 = vld [vmem:[#allocation10 + $0x26c] sm:$0xf]
    %v4356 = vld [vmem:[#allocation10 + $0x270] sm:$0xf]
    %v4357 = vld [vmem:[#allocation10 + $0x274] sm:$0xf]
    %v4358 = vld [vmem:[#allocation10 + $0x278] sm:$0xf]
    %v4359 = vld [vmem:[#allocation10 + $0x27c] sm:$0xf]
    %v4360 = vld [vmem:[#allocation10 + $0x280] sm:$0xf]
    %v4361 = vld [vmem:[#allocation10 + $0x284] sm:$0xf]
    %v4362 = vld [vmem:[#allocation10 + $0x288] sm:$0xf]
    %v4363 = vld [vmem:[#allocation10 + $0x28c] sm:$0xf]
    %v4364 = vld [vmem:[#allocation10 + $0x290] sm:$0xf]
    %v4365 = vld [vmem:[#allocation10 + $0x294] sm:$0xf]
    %v4366 = vld [vmem:[#allocation10 + $0x298] sm:$0xf]
    %v4367 = vld [vmem:[#allocation10 + $0x29c] sm:$0xf]
    %v4368 = vld [vmem:[#allocation10 + $0x2a0] sm:$0xf]
    %v4369 = vld [vmem:[#allocation10 + $0x2a4] sm:$0xf]
    %v4370 = vld [vmem:[#allocation10 + $0x2a8] sm:$0xf]
    %v4371 = vld [vmem:[#allocation10 + $0x2ac] sm:$0xf]
    %v4372 = vld [vmem:[#allocation10 + $0x2b0] sm:$0xf]
    %v4373 = vld [vmem:[#allocation10 + $0x2b4] sm:$0xf]
    %v4374 = vld [vmem:[#allocation10 + $0x2b8] sm:$0xf]
    %v4375 = vld [vmem:[#allocation10 + $0x2bc] sm:$0xf]
    %v4376 = vld [vmem:[#allocation10 + $0x2c0] sm:$0xf]
    %v4377 = vld [vmem:[#allocation10 + $0x2c4] sm:$0xf]
    %v4378 = vld [vmem:[#allocation10 + $0x2c8] sm:$0xf]
    %v4379 = vld [vmem:[#allocation10 + $0x2cc] sm:$0xf]
    %v4380 = vld [vmem:[#allocation10 + $0x2d0] sm:$0xf]
    %v4381 = vld [vmem:[#allocation10 + $0x2d4] sm:$0xf]
    %v4382 = vld [vmem:[#allocation10 + $0x2d8] sm:$0xf]
    %v4383 = vld [vmem:[#allocation10 + $0x2dc] sm:$0xf]
    %v4384 = vld [vmem:[#allocation10 + $0x2e0] sm:$0xf]
    %v4385 = vld [vmem:[#allocation10 + $0x2e4] sm:$0xf]
    %v4386 = vld [vmem:[#allocation10 + $0x2e8] sm:$0xf]
    %v4387 = vld [vmem:[#allocation10 + $0x2ec] sm:$0xf]
    %v4388 = vld [vmem:[#allocation10 + $0x2f0] sm:$0xf]
    %v4389 = vld [vmem:[#allocation10 + $0x2f4] sm:$0xf]
    %v4390 = vld [vmem:[#allocation10 + $0x2f8] sm:$0xf]
    %v4391 = vld [vmem:[#allocation10 + $0x2fc] sm:$0xf]
    %v4392 = vld [vmem:[#allocation10 + $0x300] sm:$0xf]
    %v4393 = vld [vmem:[#allocation10 + $0x304] sm:$0xf]
    %v4394 = vld [vmem:[#allocation10 + $0x308] sm:$0xf]
    %v4395 = vld [vmem:[#allocation10 + $0x30c] sm:$0xf]
    %v4396 = vld [vmem:[#allocation10 + $0x310] sm:$0xf]
    %v4397 = vld [vmem:[#allocation10 + $0x314] sm:$0xf]
    %v4398 = vld [vmem:[#allocation10 + $0x318] sm:$0xf]
    %v4399 = vld [vmem:[#allocation10 + $0x31c] sm:$0xf]
    %v4400 = vld [vmem:[#allocation10 + $0x320] sm:$0xf]
    %v4401 = vld [vmem:[#allocation10 + $0x324] sm:$0xf]
    %v4402 = vld [vmem:[#allocation10 + $0x328] sm:$0xf]
    %v4403 = vld [vmem:[#allocation10 + $0x32c] sm:$0xf]
    %v4404 = vld [vmem:[#allocation10 + $0x330] sm:$0xf]
    %v4405 = vld [vmem:[#allocation10 + $0x334] sm:$0xf]
    %v4406 = vld [vmem:[#allocation10 + $0x338] sm:$0xf]
    %v4407 = vld [vmem:[#allocation10 + $0x33c] sm:$0xf]
    %v4408 = vld [vmem:[#allocation10 + $0x340] sm:$0xf]
    %v4409 = vld [vmem:[#allocation10 + $0x344] sm:$0xf]
    %v4410 = vld [vmem:[#allocation10 + $0x348] sm:$0xf]
    %v4411 = vld [vmem:[#allocation10 + $0x34c] sm:$0xf]
    %v4412 = vld [vmem:[#allocation10 + $0x350] sm:$0xf]
    %v4413 = vld [vmem:[#allocation10 + $0x354] sm:$0xf]
    %v4414 = vld [vmem:[#allocation10 + $0x358] sm:$0xf]
    %v4415 = vld [vmem:[#allocation10 + $0x35c] sm:$0xf]
    %v4416 = vld [vmem:[#allocation10 + $0x360] sm:$0xf]
    %v4417 = vld [vmem:[#allocation10 + $0x364] sm:$0xf]
    %v4418 = vld [vmem:[#allocation10 + $0x368] sm:$0xf]
    %v4419 = vld [vmem:[#allocation10 + $0x36c] sm:$0xf]
    %v4420 = vld [vmem:[#allocation10 + $0x370] sm:$0xf]
    %v4421 = vld [vmem:[#allocation10 + $0x374] sm:$0xf]
    %v4422 = vld [vmem:[#allocation10 + $0x378] sm:$0xf]
    %v4423 = vld [vmem:[#allocation10 + $0x37c] sm:$0xf]
    %v4424 = vld [vmem:[#allocation10 + $0x380] sm:$0xf]
    %v4425 = vld [vmem:[#allocation10 + $0x384] sm:$0xf]
    %v4426 = vld [vmem:[#allocation10 + $0x388] sm:$0xf]
    %v4427 = vld [vmem:[#allocation10 + $0x38c] sm:$0xf]
    %v4428 = vld [vmem:[#allocation10 + $0x390] sm:$0xf]
    %v4429 = vld [vmem:[#allocation10 + $0x394] sm:$0xf]
    %v4430 = vld [vmem:[#allocation10 + $0x398] sm:$0xf]
    %v4431 = vld [vmem:[#allocation10 + $0x39c] sm:$0xf]
    %v4432 = vld [vmem:[#allocation10 + $0x3a0] sm:$0xf]
    %v4433 = vld [vmem:[#allocation10 + $0x3a4] sm:$0xf]
    %v4434 = vld [vmem:[#allocation10 + $0x3a8] sm:$0xf]
    %v4435 = vld [vmem:[#allocation10 + $0x3ac] sm:$0xf]
    %v4436 = vld [vmem:[#allocation10 + $0x3b0] sm:$0xf]
    %v4437 = vld [vmem:[#allocation10 + $0x3b4] sm:$0xf]
    %v4438 = vld [vmem:[#allocation10 + $0x3b8] sm:$0xf]
    %v4439 = vld [vmem:[#allocation10 + $0x3bc] sm:$0xf]
    %v4440 = vld [vmem:[#allocation10 + $0x3c0] sm:$0xf]
    %v4441 = vld [vmem:[#allocation10 + $0x3c4] sm:$0xf]
    %v4442 = vld [vmem:[#allocation10 + $0x3c8] sm:$0xf]
    %v4443 = vld [vmem:[#allocation10 + $0x3cc] sm:$0xf]
    %v4444 = vld [vmem:[#allocation10 + $0x3d0] sm:$0xf]
    %v4445 = vld [vmem:[#allocation10 + $0x3d4] sm:$0xf]
    %v4446 = vld [vmem:[#allocation10 + $0x3d8] sm:$0xf]
    %v4447 = vld [vmem:[#allocation10 + $0x3dc] sm:$0xf]
    %v4448 = vld [vmem:[#allocation10 + $0x3e0] sm:$0xf]
    %v4449 = vld [vmem:[#allocation10 + $0x3e4] sm:$0xf]
    %v4450 = vld [vmem:[#allocation10 + $0x3e8] sm:$0xf]
    %v4451 = vld [vmem:[#allocation10 + $0x3ec] sm:$0xf]
    %v4452 = vld [vmem:[#allocation10 + $0x3f0] sm:$0xf]
    %v4453 = vld [vmem:[#allocation10 + $0x3f4] sm:$0xf]
    %v4454 = vld [vmem:[#allocation10 + $0x3f8] sm:$0xf]
    %v4455 = vld [vmem:[#allocation10 + $0x3fc] sm:$0xf]
    %v4456 = vld [vmem:[%s3] sm:$0xf]
    %v4457 = vld [vmem:[%s10] sm:$0x1]
    %4459 = vset.pattern.permute.xlu0 0
    %4460 = vperm.xlu0 %4459, %v4456
    %v4461 = vpop.permute.xlu0 %4460
    %v4464 = vlaneseq
    %v4465 = vshrl.u32 %v4464, 7
    %v4466 = vsub.s32 0, %v4465
    %v4467 = vrot.slane %v4457, %v4466
    %v4469 = vmul.f32 %v4461, %v4467
    %v4726 = vunpack.c.l.b16 %v4200
    %v4727 = vunpack.c.l.b16 %v4201
    %v4728 = vunpack.c.l.b16 %v4202
    %v4729 = vunpack.c.l.b16 %v4203
    %v4730 = vunpack.c.l.b16 %v4204
    %v4731 = vunpack.c.l.b16 %v4205
    %v4732 = vunpack.c.l.b16 %v4206
    %v4733 = vunpack.c.l.b16 %v4207
    %v4734 = vunpack.c.l.b16 %v4208
    %v4735 = vunpack.c.l.b16 %v4209
    %v4736 = vunpack.c.l.b16 %v4210
    %v4737 = vunpack.c.l.b16 %v4211
    %v4738 = vunpack.c.l.b16 %v4212
    %v4739 = vunpack.c.l.b16 %v4213
    %v4740 = vunpack.c.l.b16 %v4214
    %v4741 = vunpack.c.l.b16 %v4215
    %v4742 = vunpack.c.l.b16 %v4216
    %v4743 = vunpack.c.l.b16 %v4217
    %v4744 = vunpack.c.l.b16 %v4218
    %v4745 = vunpack.c.l.b16 %v4219
    %v4746 = vunpack.c.l.b16 %v4220
    %v4747 = vunpack.c.l.b16 %v4221
    %v4748 = vunpack.c.l.b16 %v4222
    %v4749 = vunpack.c.l.b16 %v4223
    %v4750 = vunpack.c.l.b16 %v4224
    %v4751 = vunpack.c.l.b16 %v4225
    %v4752 = vunpack.c.l.b16 %v4226
    %v4753 = vunpack.c.l.b16 %v4227
    %v4754 = vunpack.c.l.b16 %v4228
    %v4755 = vunpack.c.l.b16 %v4229
    %v4756 = vunpack.c.l.b16 %v4230
    %v4757 = vunpack.c.l.b16 %v4231
    %v4758 = vunpack.c.l.b16 %v4232
    %v4759 = vunpack.c.l.b16 %v4233
    %v4760 = vunpack.c.l.b16 %v4234
    %v4761 = vunpack.c.l.b16 %v4235
    %v4762 = vunpack.c.l.b16 %v4236
    %v4763 = vunpack.c.l.b16 %v4237
    %v4764 = vunpack.c.l.b16 %v4238
    %v4765 = vunpack.c.l.b16 %v4239
    %v4766 = vunpack.c.l.b16 %v4240
    %v4767 = vunpack.c.l.b16 %v4241
    %v4768 = vunpack.c.l.b16 %v4242
    %v4769 = vunpack.c.l.b16 %v4243
    %v4770 = vunpack.c.l.b16 %v4244
    %v4771 = vunpack.c.l.b16 %v4245
    %v4772 = vunpack.c.l.b16 %v4246
    %v4773 = vunpack.c.l.b16 %v4247
    %v4774 = vunpack.c.l.b16 %v4248
    %v4775 = vunpack.c.l.b16 %v4249
    %v4776 = vunpack.c.l.b16 %v4250
    %v4777 = vunpack.c.l.b16 %v4251
    %v4778 = vunpack.c.l.b16 %v4252
    %v4779 = vunpack.c.l.b16 %v4253
    %v4780 = vunpack.c.l.b16 %v4254
    %v4781 = vunpack.c.l.b16 %v4255
    %v4782 = vunpack.c.l.b16 %v4256
    %v4783 = vunpack.c.l.b16 %v4257
    %v4784 = vunpack.c.l.b16 %v4258
    %v4785 = vunpack.c.l.b16 %v4259
    %v4786 = vunpack.c.l.b16 %v4260
    %v4787 = vunpack.c.l.b16 %v4261
    %v4788 = vunpack.c.l.b16 %v4262
    %v4789 = vunpack.c.l.b16 %v4263
    %v4790 = vunpack.c.l.b16 %v4264
    %v4791 = vunpack.c.l.b16 %v4265
    %v4792 = vunpack.c.l.b16 %v4266
    %v4793 = vunpack.c.l.b16 %v4267
    %v4794 = vunpack.c.l.b16 %v4268
    %v4795 = vunpack.c.l.b16 %v4269
    %v4796 = vunpack.c.l.b16 %v4270
    %v4797 = vunpack.c.l.b16 %v4271
    %v4798 = vunpack.c.l.b16 %v4272
    %v4799 = vunpack.c.l.b16 %v4273
    %v4800 = vunpack.c.l.b16 %v4274
    %v4801 = vunpack.c.l.b16 %v4275
    %v4802 = vunpack.c.l.b16 %v4276
    %v4803 = vunpack.c.l.b16 %v4277
    %v4804 = vunpack.c.l.b16 %v4278
    %v4805 = vunpack.c.l.b16 %v4279
    %v4806 = vunpack.c.l.b16 %v4280
    %v4807 = vunpack.c.l.b16 %v4281
    %v4808 = vunpack.c.l.b16 %v4282
    %v4809 = vunpack.c.l.b16 %v4283
    %v4810 = vunpack.c.l.b16 %v4284
    %v4811 = vunpack.c.l.b16 %v4285
    %v4812 = vunpack.c.l.b16 %v4286
    %v4813 = vunpack.c.l.b16 %v4287
    %v4814 = vunpack.c.l.b16 %v4288
    %v4815 = vunpack.c.l.b16 %v4289
    %v4816 = vunpack.c.l.b16 %v4290
    %v4817 = vunpack.c.l.b16 %v4291
    %v4818 = vunpack.c.l.b16 %v4292
    %v4819 = vunpack.c.l.b16 %v4293
    %v4820 = vunpack.c.l.b16 %v4294
    %v4821 = vunpack.c.l.b16 %v4295
    %v4822 = vunpack.c.l.b16 %v4296
    %v4823 = vunpack.c.l.b16 %v4297
    %v4824 = vunpack.c.l.b16 %v4298
    %v4825 = vunpack.c.l.b16 %v4299
    %v4826 = vunpack.c.l.b16 %v4300
    %v4827 = vunpack.c.l.b16 %v4301
    %v4828 = vunpack.c.l.b16 %v4302
    %v4829 = vunpack.c.l.b16 %v4303
    %v4830 = vunpack.c.l.b16 %v4304
    %v4831 = vunpack.c.l.b16 %v4305
    %v4832 = vunpack.c.l.b16 %v4306
    %v4833 = vunpack.c.l.b16 %v4307
    %v4834 = vunpack.c.l.b16 %v4308
    %v4835 = vunpack.c.l.b16 %v4309
    %v4836 = vunpack.c.l.b16 %v4310
    %v4837 = vunpack.c.l.b16 %v4311
    %v4838 = vunpack.c.l.b16 %v4312
    %v4839 = vunpack.c.l.b16 %v4313
    %v4840 = vunpack.c.l.b16 %v4314
    %v4841 = vunpack.c.l.b16 %v4315
    %v4842 = vunpack.c.l.b16 %v4316
    %v4843 = vunpack.c.l.b16 %v4317
    %v4844 = vunpack.c.l.b16 %v4318
    %v4845 = vunpack.c.l.b16 %v4319
    %v4846 = vunpack.c.l.b16 %v4320
    %v4847 = vunpack.c.l.b16 %v4321
    %v4848 = vunpack.c.l.b16 %v4322
    %v4849 = vunpack.c.l.b16 %v4323
    %v4850 = vunpack.c.l.b16 %v4324
    %v4851 = vunpack.c.l.b16 %v4325
    %v4852 = vunpack.c.l.b16 %v4326
    %v4853 = vunpack.c.l.b16 %v4327
    %v4854 = vunpack.c.l.b16 %v4328
    %v4855 = vunpack.c.l.b16 %v4329
    %v4856 = vunpack.c.l.b16 %v4330
    %v4857 = vunpack.c.l.b16 %v4331
    %v4858 = vunpack.c.l.b16 %v4332
    %v4859 = vunpack.c.l.b16 %v4333
    %v4860 = vunpack.c.l.b16 %v4334
    %v4861 = vunpack.c.l.b16 %v4335
    %v4862 = vunpack.c.l.b16 %v4336
    %v4863 = vunpack.c.l.b16 %v4337
    %v4864 = vunpack.c.l.b16 %v4338
    %v4865 = vunpack.c.l.b16 %v4339
    %v4866 = vunpack.c.l.b16 %v4340
    %v4867 = vunpack.c.l.b16 %v4341
    %v4868 = vunpack.c.l.b16 %v4342
    %v4869 = vunpack.c.l.b16 %v4343
    %v4870 = vunpack.c.l.b16 %v4344
    %v4871 = vunpack.c.l.b16 %v4345
    %v4872 = vunpack.c.l.b16 %v4346
    %v4873 = vunpack.c.l.b16 %v4347
    %v4874 = vunpack.c.l.b16 %v4348
    %v4875 = vunpack.c.l.b16 %v4349
    %v4876 = vunpack.c.l.b16 %v4350
    %v4877 = vunpack.c.l.b16 %v4351
    %v4878 = vunpack.c.l.b16 %v4352
    %v4879 = vunpack.c.l.b16 %v4353
    %v4880 = vunpack.c.l.b16 %v4354
    %v4881 = vunpack.c.l.b16 %v4355
    %v4882 = vunpack.c.l.b16 %v4356
    %v4883 = vunpack.c.l.b16 %v4357
    %v4884 = vunpack.c.l.b16 %v4358
    %v4885 = vunpack.c.l.b16 %v4359
    %v4886 = vunpack.c.l.b16 %v4360
    %v4887 = vunpack.c.l.b16 %v4361
    %v4888 = vunpack.c.l.b16 %v4362
    %v4889 = vunpack.c.l.b16 %v4363
    %v4890 = vunpack.c.l.b16 %v4364
    %v4891 = vunpack.c.l.b16 %v4365
    %v4892 = vunpack.c.l.b16 %v4366
    %v4893 = vunpack.c.l.b16 %v4367
    %v4894 = vunpack.c.l.b16 %v4368
    %v4895 = vunpack.c.l.b16 %v4369
    %v4896 = vunpack.c.l.b16 %v4370
    %v4897 = vunpack.c.l.b16 %v4371
    %v4898 = vunpack.c.l.b16 %v4372
    %v4899 = vunpack.c.l.b16 %v4373
    %v4900 = vunpack.c.l.b16 %v4374
    %v4901 = vunpack.c.l.b16 %v4375
    %v4902 = vunpack.c.l.b16 %v4376
    %v4903 = vunpack.c.l.b16 %v4377
    %v4904 = vunpack.c.l.b16 %v4378
    %v4905 = vunpack.c.l.b16 %v4379
    %v4906 = vunpack.c.l.b16 %v4380
    %v4907 = vunpack.c.l.b16 %v4381
    %v4908 = vunpack.c.l.b16 %v4382
    %v4909 = vunpack.c.l.b16 %v4383
    %v4910 = vunpack.c.l.b16 %v4384
    %v4911 = vunpack.c.l.b16 %v4385
    %v4912 = vunpack.c.l.b16 %v4386
    %v4913 = vunpack.c.l.b16 %v4387
    %v4914 = vunpack.c.l.b16 %v4388
    %v4915 = vunpack.c.l.b16 %v4389
    %v4916 = vunpack.c.l.b16 %v4390
    %v4917 = vunpack.c.l.b16 %v4391
    %v4918 = vunpack.c.l.b16 %v4392
    %v4919 = vunpack.c.l.b16 %v4393
    %v4920 = vunpack.c.l.b16 %v4394
    %v4921 = vunpack.c.l.b16 %v4395
    %v4922 = vunpack.c.l.b16 %v4396
    %v4923 = vunpack.c.l.b16 %v4397
    %v4924 = vunpack.c.l.b16 %v4398
    %v4925 = vunpack.c.l.b16 %v4399
    %v4926 = vunpack.c.l.b16 %v4400
    %v4927 = vunpack.c.l.b16 %v4401
    %v4928 = vunpack.c.l.b16 %v4402
    %v4929 = vunpack.c.l.b16 %v4403
    %v4930 = vunpack.c.l.b16 %v4404
    %v4931 = vunpack.c.l.b16 %v4405
    %v4932 = vunpack.c.l.b16 %v4406
    %v4933 = vunpack.c.l.b16 %v4407
    %v4934 = vunpack.c.l.b16 %v4408
    %v4935 = vunpack.c.l.b16 %v4409
    %v4936 = vunpack.c.l.b16 %v4410
    %v4937 = vunpack.c.l.b16 %v4411
    %v4938 = vunpack.c.l.b16 %v4412
    %v4939 = vunpack.c.l.b16 %v4413
    %v4940 = vunpack.c.l.b16 %v4414
    %v4941 = vunpack.c.l.b16 %v4415
    %v4942 = vunpack.c.l.b16 %v4416
    %v4943 = vunpack.c.l.b16 %v4417
    %v4944 = vunpack.c.l.b16 %v4418
    %v4945 = vunpack.c.l.b16 %v4419
    %v4946 = vunpack.c.l.b16 %v4420
    %v4947 = vunpack.c.l.b16 %v4421
    %v4948 = vunpack.c.l.b16 %v4422
    %v4949 = vunpack.c.l.b16 %v4423
    %v4950 = vunpack.c.l.b16 %v4424
    %v4951 = vunpack.c.l.b16 %v4425
    %v4952 = vunpack.c.l.b16 %v4426
    %v4953 = vunpack.c.l.b16 %v4427
    %v4954 = vunpack.c.l.b16 %v4428
    %v4955 = vunpack.c.l.b16 %v4429
    %v4956 = vunpack.c.l.b16 %v4430
    %v4957 = vunpack.c.l.b16 %v4431
    %v4958 = vunpack.c.l.b16 %v4432
    %v4959 = vunpack.c.l.b16 %v4433
    %v4960 = vunpack.c.l.b16 %v4434
    %v4961 = vunpack.c.l.b16 %v4435
    %v4962 = vunpack.c.l.b16 %v4436
    %v4963 = vunpack.c.l.b16 %v4437
    %v4964 = vunpack.c.l.b16 %v4438
    %v4965 = vunpack.c.l.b16 %v4439
    %v4966 = vunpack.c.l.b16 %v4440
    %v4967 = vunpack.c.l.b16 %v4441
    %v4968 = vunpack.c.l.b16 %v4442
    %v4969 = vunpack.c.l.b16 %v4443
    %v4970 = vunpack.c.l.b16 %v4444
    %v4971 = vunpack.c.l.b16 %v4445
    %v4972 = vunpack.c.l.b16 %v4446
    %v4973 = vunpack.c.l.b16 %v4447
    %v4974 = vunpack.c.l.b16 %v4448
    %v4975 = vunpack.c.l.b16 %v4449
    %v4976 = vunpack.c.l.b16 %v4450
    %v4977 = vunpack.c.l.b16 %v4451
    %v4978 = vunpack.c.l.b16 %v4452
    %v4979 = vunpack.c.l.b16 %v4453
    %v4980 = vunpack.c.l.b16 %v4454
    %v4981 = vunpack.c.l.b16 %v4455
    %v4982 = vpack.c.b16 %v4727, %v4726
    %v4983 = vpack.c.b16 %v4729, %v4728
    %v4984 = vpack.c.b16 %v4731, %v4730
    %v4985 = vpack.c.b16 %v4733, %v4732
    %v4986 = vpack.c.b16 %v4735, %v4734
    %v4987 = vpack.c.b16 %v4737, %v4736
    %v4988 = vpack.c.b16 %v4739, %v4738
    %v4989 = vpack.c.b16 %v4741, %v4740
    %v4990 = vpack.c.b16 %v4743, %v4742
    %v4991 = vpack.c.b16 %v4745, %v4744
    %v4992 = vpack.c.b16 %v4747, %v4746
    %v4993 = vpack.c.b16 %v4749, %v4748
    %v4994 = vpack.c.b16 %v4751, %v4750
    %v4995 = vpack.c.b16 %v4753, %v4752
    %v4996 = vpack.c.b16 %v4755, %v4754
    %v4997 = vpack.c.b16 %v4757, %v4756
    %v4998 = vpack.c.b16 %v4759, %v4758
    %v4999 = vpack.c.b16 %v4761, %v4760
    %v5000 = vpack.c.b16 %v4763, %v4762
    %v5001 = vpack.c.b16 %v4765, %v4764
    %v5002 = vpack.c.b16 %v4767, %v4766
    %v5003 = vpack.c.b16 %v4769, %v4768
    %v5004 = vpack.c.b16 %v4771, %v4770
    %v5005 = vpack.c.b16 %v4773, %v4772
    %v5006 = vpack.c.b16 %v4775, %v4774
    %v5007 = vpack.c.b16 %v4777, %v4776
    %v5008 = vpack.c.b16 %v4779, %v4778
    %v5009 = vpack.c.b16 %v4781, %v4780
    %v5010 = vpack.c.b16 %v4783, %v4782
    %v5011 = vpack.c.b16 %v4785, %v4784
    %v5012 = vpack.c.b16 %v4787, %v4786
    %v5013 = vpack.c.b16 %v4789, %v4788
    %v5014 = vpack.c.b16 %v4791, %v4790
    %v5015 = vpack.c.b16 %v4793, %v4792
    %v5016 = vpack.c.b16 %v4795, %v4794
    %v5017 = vpack.c.b16 %v4797, %v4796
    %v5018 = vpack.c.b16 %v4799, %v4798
    %v5019 = vpack.c.b16 %v4801, %v4800
    %v5020 = vpack.c.b16 %v4803, %v4802
    %v5021 = vpack.c.b16 %v4805, %v4804
    %v5022 = vpack.c.b16 %v4807, %v4806
    %v5023 = vpack.c.b16 %v4809, %v4808
    %v5024 = vpack.c.b16 %v4811, %v4810
    %v5025 = vpack.c.b16 %v4813, %v4812
    %v5026 = vpack.c.b16 %v4815, %v4814
    %v5027 = vpack.c.b16 %v4817, %v4816
    %v5028 = vpack.c.b16 %v4819, %v4818
    %v5029 = vpack.c.b16 %v4821, %v4820
    %v5030 = vpack.c.b16 %v4823, %v4822
    %v5031 = vpack.c.b16 %v4825, %v4824
    %v5032 = vpack.c.b16 %v4827, %v4826
    %v5033 = vpack.c.b16 %v4829, %v4828
    %v5034 = vpack.c.b16 %v4831, %v4830
    %v5035 = vpack.c.b16 %v4833, %v4832
    %v5036 = vpack.c.b16 %v4835, %v4834
    %v5037 = vpack.c.b16 %v4837, %v4836
    %v5038 = vpack.c.b16 %v4839, %v4838
    %v5039 = vpack.c.b16 %v4841, %v4840
    %v5040 = vpack.c.b16 %v4843, %v4842
    %v5041 = vpack.c.b16 %v4845, %v4844
    %v5042 = vpack.c.b16 %v4847, %v4846
    %v5043 = vpack.c.b16 %v4849, %v4848
    %v5044 = vpack.c.b16 %v4851, %v4850
    %v5045 = vpack.c.b16 %v4853, %v4852
    %v5046 = vpack.c.b16 %v4855, %v4854
    %v5047 = vpack.c.b16 %v4857, %v4856
    %v5048 = vpack.c.b16 %v4859, %v4858
    %v5049 = vpack.c.b16 %v4861, %v4860
    %v5050 = vpack.c.b16 %v4863, %v4862
    %v5051 = vpack.c.b16 %v4865, %v4864
    %v5052 = vpack.c.b16 %v4867, %v4866
    %v5053 = vpack.c.b16 %v4869, %v4868
    %v5054 = vpack.c.b16 %v4871, %v4870
    %v5055 = vpack.c.b16 %v4873, %v4872
    %v5056 = vpack.c.b16 %v4875, %v4874
    %v5057 = vpack.c.b16 %v4877, %v4876
    %v5058 = vpack.c.b16 %v4879, %v4878
    %v5059 = vpack.c.b16 %v4881, %v4880
    %v5060 = vpack.c.b16 %v4883, %v4882
    %v5061 = vpack.c.b16 %v4885, %v4884
    %v5062 = vpack.c.b16 %v4887, %v4886
    %v5063 = vpack.c.b16 %v4889, %v4888
    %v5064 = vpack.c.b16 %v4891, %v4890
    %v5065 = vpack.c.b16 %v4893, %v4892
    %v5066 = vpack.c.b16 %v4895, %v4894
    %v5067 = vpack.c.b16 %v4897, %v4896
    %v5068 = vpack.c.b16 %v4899, %v4898
    %v5069 = vpack.c.b16 %v4901, %v4900
    %v5070 = vpack.c.b16 %v4903, %v4902
    %v5071 = vpack.c.b16 %v4905, %v4904
    %v5072 = vpack.c.b16 %v4907, %v4906
    %v5073 = vpack.c.b16 %v4909, %v4908
    %v5074 = vpack.c.b16 %v4911, %v4910
    %v5075 = vpack.c.b16 %v4913, %v4912
    %v5076 = vpack.c.b16 %v4915, %v4914
    %v5077 = vpack.c.b16 %v4917, %v4916
    %v5078 = vpack.c.b16 %v4919, %v4918
    %v5079 = vpack.c.b16 %v4921, %v4920
    %v5080 = vpack.c.b16 %v4923, %v4922
    %v5081 = vpack.c.b16 %v4925, %v4924
    %v5082 = vpack.c.b16 %v4927, %v4926
    %v5083 = vpack.c.b16 %v4929, %v4928
    %v5084 = vpack.c.b16 %v4931, %v4930
    %v5085 = vpack.c.b16 %v4933, %v4932
    %v5086 = vpack.c.b16 %v4935, %v4934
    %v5087 = vpack.c.b16 %v4937, %v4936
    %v5088 = vpack.c.b16 %v4939, %v4938
    %v5089 = vpack.c.b16 %v4941, %v4940
    %v5090 = vpack.c.b16 %v4943, %v4942
    %v5091 = vpack.c.b16 %v4945, %v4944
    %v5092 = vpack.c.b16 %v4947, %v4946
    %v5093 = vpack.c.b16 %v4949, %v4948
    %v5094 = vpack.c.b16 %v4951, %v4950
    %v5095 = vpack.c.b16 %v4953, %v4952
    %v5096 = vpack.c.b16 %v4955, %v4954
    %v5097 = vpack.c.b16 %v4957, %v4956
    %v5098 = vpack.c.b16 %v4959, %v4958
    %v5099 = vpack.c.b16 %v4961, %v4960
    %v5100 = vpack.c.b16 %v4963, %v4962
    %v5101 = vpack.c.b16 %v4965, %v4964
    %v5102 = vpack.c.b16 %v4967, %v4966
    %v5103 = vpack.c.b16 %v4969, %v4968
    %v5104 = vpack.c.b16 %v4971, %v4970
    %v5105 = vpack.c.b16 %v4973, %v4972
    %v5106 = vpack.c.b16 %v4975, %v4974
    %v5107 = vpack.c.b16 %v4977, %v4976
    %v5108 = vpack.c.b16 %v4979, %v4978
    %v5109 = vpack.c.b16 %v4981, %v4980
    %5238 = vmatprep.subr.bf16.mxu0 0
    %5239 = vmatpush1.bf16.msra.mxu0 %v4982
    %5240 = vmatprep.subr.bf16.mxu0 0
    %5241 = vmatpush1.bf16.msra.mxu0 %v4983
    %5242 = vmatprep.subr.bf16.mxu0 0
    %5243 = vmatpush1.bf16.msra.mxu0 %v4984
    %5244 = vmatprep.subr.bf16.mxu0 0
    %5245 = vmatpush1.bf16.msra.mxu0 %v4985
    %5246 = vmatprep.subr.bf16.mxu0 0
    %5247 = vmatpush1.bf16.msra.mxu0 %v4986
    %5248 = vmatprep.subr.bf16.mxu0 0
    %5249 = vmatpush1.bf16.msra.mxu0 %v4987
    %5250 = vmatprep.subr.bf16.mxu0 0
    %5251 = vmatpush1.bf16.msra.mxu0 %v4988
    %5252 = vmatprep.subr.bf16.mxu0 0
    %5253 = vmatpush1.bf16.msra.mxu0 %v4989
    %5254 = vmatprep.subr.bf16.mxu0 0
    %5255 = vmatpush1.bf16.msra.mxu0 %v4990
    %5256 = vmatprep.subr.bf16.mxu0 0
    %5257 = vmatpush1.bf16.msra.mxu0 %v4991
    %5258 = vmatprep.subr.bf16.mxu0 0
    %5259 = vmatpush1.bf16.msra.mxu0 %v4992
    %5260 = vmatprep.subr.bf16.mxu0 0
    %5261 = vmatpush1.bf16.msra.mxu0 %v4993
    %5262 = vmatprep.subr.bf16.mxu0 0
    %5263 = vmatpush1.bf16.msra.mxu0 %v4994
    %5264 = vmatprep.subr.bf16.mxu0 0
    %5265 = vmatpush1.bf16.msra.mxu0 %v4995
    %5266 = vmatprep.subr.bf16.mxu0 0
    %5267 = vmatpush1.bf16.msra.mxu0 %v4996
    %5268 = vmatprep.subr.bf16.mxu0 0
    %5269 = vmatpush1.bf16.msra.mxu0 %v4997
    %5270 = vmatprep.mubr.bf16.mxu0 %v2728
    %5271 = vmatmul.mubr.bf16.gmra.mrb[0].mxu0 %v2727
    %v5272 = vpop.f32.mrb[0].mxu0
    %v5273 = vadd.f32 %v4469, %v5272
    %v5274 = vpop.f32.mrb[0].mxu0
    %v5275 = vpop.f32.mrb[0].mxu0
    %v5276 = vpop.f32.mrb[0].mxu0
    %5277 = vdwg.mxu0
    %5278 = vmatprep.subr.bf16.mxu0 0
    %5279 = vmatpush1.bf16.msra.mxu0 %v4998
    %5280 = vmatprep.subr.bf16.mxu0 0
    %5281 = vmatpush1.bf16.msra.mxu0 %v4999
    %5282 = vmatprep.subr.bf16.mxu0 0
    %5283 = vmatpush1.bf16.msra.mxu0 %v5000
    %5284 = vmatprep.subr.bf16.mxu0 0
    %5285 = vmatpush1.bf16.msra.mxu0 %v5001
    %5286 = vmatprep.subr.bf16.mxu0 0
    %5287 = vmatpush1.bf16.msra.mxu0 %v5002
    %5288 = vmatprep.subr.bf16.mxu0 0
    %5289 = vmatpush1.bf16.msra.mxu0 %v5003
    %5290 = vmatprep.subr.bf16.mxu0 0
    %5291 = vmatpush1.bf16.msra.mxu0 %v5004
    %5292 = vmatprep.subr.bf16.mxu0 0
    %5293 = vmatpush1.bf16.msra.mxu0 %v5005
    %5294 = vmatprep.subr.bf16.mxu0 0
    %5295 = vmatpush1.bf16.msra.mxu0 %v5006
    %5296 = vmatprep.subr.bf16.mxu0 0
    %5297 = vmatpush1.bf16.msra.mxu0 %v5007
    %5298 = vmatprep.subr.bf16.mxu0 0
    %5299 = vmatpush1.bf16.msra.mxu0 %v5008
    %5300 = vmatprep.subr.bf16.mxu0 0
    %5301 = vmatpush1.bf16.msra.mxu0 %v5009
    %5302 = vmatprep.subr.bf16.mxu0 0
    %5303 = vmatpush1.bf16.msra.mxu0 %v5010
    %5304 = vmatprep.subr.bf16.mxu0 0
    %5305 = vmatpush1.bf16.msra.mxu0 %v5011
    %5306 = vmatprep.subr.bf16.mxu0 0
    %5307 = vmatpush1.bf16.msra.mxu0 %v5012
    %5308 = vmatprep.subr.bf16.mxu0 0
    %5309 = vmatpush1.bf16.msra.mxu0 %v5013
    %5310 = vmatprep.mubr.bf16.mxu0 %v2730
    %5311 = vmatmul.mubr.bf16.gmra.mrb[0].mxu0 %v2729
    %v5312 = vpop.f32.mrb[0].mxu0
    %v5313 = vadd.f32 %v5273, %v5312
    %v5314 = vpop.f32.mrb[0].mxu0
    %v5315 = vpop.f32.mrb[0].mxu0
    %v5316 = vpop.f32.mrb[0].mxu0
    %5317 = vdwg.mxu0
    %5318 = vmatprep.subr.bf16.mxu0 0
    %5319 = vmatpush1.bf16.msra.mxu0 %v5014
    %5320 = vmatprep.subr.bf16.mxu0 0
    %5321 = vmatpush1.bf16.msra.mxu0 %v5015
    %5322 = vmatprep.subr.bf16.mxu0 0
    %5323 = vmatpush1.bf16.msra.mxu0 %v5016
    %5324 = vmatprep.subr.bf16.mxu0 0
    %5325 = vmatpush1.bf16.msra.mxu0 %v5017
    %5326 = vmatprep.subr.bf16.mxu0 0
    %5327 = vmatpush1.bf16.msra.mxu0 %v5018
    %5328 = vmatprep.subr.bf16.mxu0 0
    %5329 = vmatpush1.bf16.msra.mxu0 %v5019
    %5330 = vmatprep.subr.bf16.mxu0 0
    %5331 = vmatpush1.bf16.msra.mxu0 %v5020
    %5332 = vmatprep.subr.bf16.mxu0 0
    %5333 = vmatpush1.bf16.msra.mxu0 %v5021
    %5334 = vmatprep.subr.bf16.mxu0 0
    %5335 = vmatpush1.bf16.msra.mxu0 %v5022
    %5336 = vmatprep.subr.bf16.mxu0 0
    %5337 = vmatpush1.bf16.msra.mxu0 %v5023
    %5338 = vmatprep.subr.bf16.mxu0 0
    %5339 = vmatpush1.bf16.msra.mxu0 %v5024
    %5340 = vmatprep.subr.bf16.mxu0 0
    %5341 = vmatpush1.bf16.msra.mxu0 %v5025
    %5342 = vmatprep.subr.bf16.mxu0 0
    %5343 = vmatpush1.bf16.msra.mxu0 %v5026
    %5344 = vmatprep.subr.bf16.mxu0 0
    %5345 = vmatpush1.bf16.msra.mxu0 %v5027
    %5346 = vmatprep.subr.bf16.mxu0 0
    %5347 = vmatpush1.bf16.msra.mxu0 %v5028
    %5348 = vmatprep.subr.bf16.mxu0 0
    %5349 = vmatpush1.bf16.msra.mxu0 %v5029
    %5350 = vmatprep.mubr.bf16.mxu0 %v2732
    %5351 = vmatmul.mubr.bf16.gmra.mrb[0].mxu0 %v2731
    %v5352 = vpop.f32.mrb[0].mxu0
    %v5353 = vadd.f32 %v5313, %v5352
    %v5354 = vpop.f32.mrb[0].mxu0
    %v5355 = vpop.f32.mrb[0].mxu0
    %v5356 = vpop.f32.mrb[0].mxu0
    %5357 = vdwg.mxu0
    %5358 = vmatprep.subr.bf16.mxu0 0
    %5359 = vmatpush1.bf16.msra.mxu0 %v5030
    %5360 = vmatprep.subr.bf16.mxu0 0
    %5361 = vmatpush1.bf16.msra.mxu0 %v5031
    %5362 = vmatprep.subr.bf16.mxu0 0
    %5363 = vmatpush1.bf16.msra.mxu0 %v5032
    %5364 = vmatprep.subr.bf16.mxu0 0
    %5365 = vmatpush1.bf16.msra.mxu0 %v5033
    %5366 = vmatprep.subr.bf16.mxu0 0
    %5367 = vmatpush1.bf16.msra.mxu0 %v5034
    %5368 = vmatprep.subr.bf16.mxu0 0
    %5369 = vmatpush1.bf16.msra.mxu0 %v5035
    %5370 = vmatprep.subr.bf16.mxu0 0
    %5371 = vmatpush1.bf16.msra.mxu0 %v5036
    %5372 = vmatprep.subr.bf16.mxu0 0
    %5373 = vmatpush1.bf16.msra.mxu0 %v5037
    %5374 = vmatprep.subr.bf16.mxu0 0
    %5375 = vmatpush1.bf16.msra.mxu0 %v5038
    %5376 = vmatprep.subr.bf16.mxu0 0
    %5377 = vmatpush1.bf16.msra.mxu0 %v5039
    %5378 = vmatprep.subr.bf16.mxu0 0
    %5379 = vmatpush1.bf16.msra.mxu0 %v5040
    %5380 = vmatprep.subr.bf16.mxu0 0
    %5381 = vmatpush1.bf16.msra.mxu0 %v5041
    %5382 = vmatprep.subr.bf16.mxu0 0
    %5383 = vmatpush1.bf16.msra.mxu0 %v5042
    %5384 = vmatprep.subr.bf16.mxu0 0
    %5385 = vmatpush1.bf16.msra.mxu0 %v5043
    %5386 = vmatprep.subr.bf16.mxu0 0
    %5387 = vmatpush1.bf16.msra.mxu0 %v5044
    %5388 = vmatprep.subr.bf16.mxu0 0
    %5389 = vmatpush1.bf16.msra.mxu0 %v5045
    %5390 = vmatprep.mubr.bf16.mxu0 %v2734
    %5391 = vmatmul.mubr.bf16.gmra.mrb[0].mxu0 %v2733
    %v5392 = vpop.f32.mrb[0].mxu0
    %v5393 = vadd.f32 %v5353, %v5392
    %v5394 = vpop.f32.mrb[0].mxu0
    %v5395 = vpop.f32.mrb[0].mxu0
    %v5396 = vpop.f32.mrb[0].mxu0
    %5397 = vdwg.mxu0
    %5398 = vmatprep.subr.bf16.mxu0 0
    %5399 = vmatpush1.bf16.msra.mxu0 %v5046
    %5400 = vmatprep.subr.bf16.mxu0 0
    %5401 = vmatpush1.bf16.msra.mxu0 %v5047
    %5402 = vmatprep.subr.bf16.mxu0 0
    %5403 = vmatpush1.bf16.msra.mxu0 %v5048
    %5404 = vmatprep.subr.bf16.mxu0 0
    %5405 = vmatpush1.bf16.msra.mxu0 %v5049
    %5406 = vmatprep.subr.bf16.mxu0 0
    %5407 = vmatpush1.bf16.msra.mxu0 %v5050
    %5408 = vmatprep.subr.bf16.mxu0 0
    %5409 = vmatpush1.bf16.msra.mxu0 %v5051
    %5410 = vmatprep.subr.bf16.mxu0 0
    %5411 = vmatpush1.bf16.msra.mxu0 %v5052
    %5412 = vmatprep.subr.bf16.mxu0 0
    %5413 = vmatpush1.bf16.msra.mxu0 %v5053
    %5414 = vmatprep.subr.bf16.mxu0 0
    %5415 = vmatpush1.bf16.msra.mxu0 %v5054
    %5416 = vmatprep.subr.bf16.mxu0 0
    %5417 = vmatpush1.bf16.msra.mxu0 %v5055
    %5418 = vmatprep.subr.bf16.mxu0 0
    %5419 = vmatpush1.bf16.msra.mxu0 %v5056
    %5420 = vmatprep.subr.bf16.mxu0 0
    %5421 = vmatpush1.bf16.msra.mxu0 %v5057
    %5422 = vmatprep.subr.bf16.mxu0 0
    %5423 = vmatpush1.bf16.msra.mxu0 %v5058
    %5424 = vmatprep.subr.bf16.mxu0 0
    %5425 = vmatpush1.bf16.msra.mxu0 %v5059
    %5426 = vmatprep.subr.bf16.mxu0 0
    %5427 = vmatpush1.bf16.msra.mxu0 %v5060
    %5428 = vmatprep.subr.bf16.mxu0 0
    %5429 = vmatpush1.bf16.msra.mxu0 %v5061
    %5430 = vmatprep.mubr.bf16.mxu0 %v2736
    %5431 = vmatmul.mubr.bf16.gmra.mrb[0].mxu0 %v2735
    %v5432 = vpop.f32.mrb[0].mxu0
    %v5433 = vadd.f32 %v5393, %v5432
    %v5434 = vpop.f32.mrb[0].mxu0
    %v5435 = vpop.f32.mrb[0].mxu0
    %v5436 = vpop.f32.mrb[0].mxu0
    %5437 = vdwg.mxu0
    %5438 = vmatprep.subr.bf16.mxu0 0
    %5439 = vmatpush1.bf16.msra.mxu0 %v5062
    %5440 = vmatprep.subr.bf16.mxu0 0
    %5441 = vmatpush1.bf16.msra.mxu0 %v5063
    %5442 = vmatprep.subr.bf16.mxu0 0
    %5443 = vmatpush1.bf16.msra.mxu0 %v5064
    %5444 = vmatprep.subr.bf16.mxu0 0
    %5445 = vmatpush1.bf16.msra.mxu0 %v5065
    %5446 = vmatprep.subr.bf16.mxu0 0
    %5447 = vmatpush1.bf16.msra.mxu0 %v5066
    %5448 = vmatprep.subr.bf16.mxu0 0
    %5449 = vmatpush1.bf16.msra.mxu0 %v5067
    %5450 = vmatprep.subr.bf16.mxu0 0
    %5451 = vmatpush1.bf16.msra.mxu0 %v5068
    %5452 = vmatprep.subr.bf16.mxu0 0
    %5453 = vmatpush1.bf16.msra.mxu0 %v5069
    %5454 = vmatprep.subr.bf16.mxu0 0
    %5455 = vmatpush1.bf16.msra.mxu0 %v5070
    %5456 = vmatprep.subr.bf16.mxu0 0
    %5457 = vmatpush1.bf16.msra.mxu0 %v5071
    %5458 = vmatprep.subr.bf16.mxu0 0
    %5459 = vmatpush1.bf16.msra.mxu0 %v5072
    %5460 = vmatprep.subr.bf16.mxu0 0
    %5461 = vmatpush1.bf16.msra.mxu0 %v5073
    %5462 = vmatprep.subr.bf16.mxu0 0
    %5463 = vmatpush1.bf16.msra.mxu0 %v5074
    %5464 = vmatprep.subr.bf16.mxu0 0
    %5465 = vmatpush1.bf16.msra.mxu0 %v5075
    %5466 = vmatprep.subr.bf16.mxu0 0
    %5467 = vmatpush1.bf16.msra.mxu0 %v5076
    %5468 = vmatprep.subr.bf16.mxu0 0
    %5469 = vmatpush1.bf16.msra.mxu0 %v5077
    %5470 = vmatprep.mubr.bf16.mxu0 %v2738
    %5471 = vmatmul.mubr.bf16.gmra.mrb[0].mxu0 %v2737
    %v5472 = vpop.f32.mrb[0].mxu0
    %v5473 = vadd.f32 %v5433, %v5472
    %v5474 = vpop.f32.mrb[0].mxu0
    %v5475 = vpop.f32.mrb[0].mxu0
    %v5476 = vpop.f32.mrb[0].mxu0
    %5477 = vdwg.mxu0
    %5478 = vmatprep.subr.bf16.mxu0 0
    %5479 = vmatpush1.bf16.msra.mxu0 %v5078
    %5480 = vmatprep.subr.bf16.mxu0 0
    %5481 = vmatpush1.bf16.msra.mxu0 %v5079
    %5482 = vmatprep.subr.bf16.mxu0 0
    %5483 = vmatpush1.bf16.msra.mxu0 %v5080
    %5484 = vmatprep.subr.bf16.mxu0 0
    %5485 = vmatpush1.bf16.msra.mxu0 %v5081
    %5486 = vmatprep.subr.bf16.mxu0 0
    %5487 = vmatpush1.bf16.msra.mxu0 %v5082
    %5488 = vmatprep.subr.bf16.mxu0 0
    %5489 = vmatpush1.bf16.msra.mxu0 %v5083
    %5490 = vmatprep.subr.bf16.mxu0 0
    %5491 = vmatpush1.bf16.msra.mxu0 %v5084
    %5492 = vmatprep.subr.bf16.mxu0 0
    %5493 = vmatpush1.bf16.msra.mxu0 %v5085
    %5494 = vmatprep.subr.bf16.mxu0 0
    %5495 = vmatpush1.bf16.msra.mxu0 %v5086
    %5496 = vmatprep.subr.bf16.mxu0 0
    %5497 = vmatpush1.bf16.msra.mxu0 %v5087
    %5498 = vmatprep.subr.bf16.mxu0 0
    %5499 = vmatpush1.bf16.msra.mxu0 %v5088
    %5500 = vmatprep.subr.bf16.mxu0 0
    %5501 = vmatpush1.bf16.msra.mxu0 %v5089
    %5502 = vmatprep.subr.bf16.mxu0 0
    %5503 = vmatpush1.bf16.msra.mxu0 %v5090
    %5504 = vmatprep.subr.bf16.mxu0 0
    %5505 = vmatpush1.bf16.msra.mxu0 %v5091
    %5506 = vmatprep.subr.bf16.mxu0 0
    %5507 = vmatpush1.bf16.msra.mxu0 %v5092
    %5508 = vmatprep.subr.bf16.mxu0 0
    %5509 = vmatpush1.bf16.msra.mxu0 %v5093
    %5510 = vmatprep.mubr.bf16.mxu0 %v2740
    %5511 = vmatmul.mubr.bf16.gmra.mrb[0].mxu0 %v2739
    %v5512 = vpop.f32.mrb[0].mxu0
    %v5513 = vadd.f32 %v5473, %v5512
    %v5514 = vpop.f32.mrb[0].mxu0
    %v5515 = vpop.f32.mrb[0].mxu0
    %v5516 = vpop.f32.mrb[0].mxu0
    %5517 = vdwg.mxu0
    %5518 = vmatprep.subr.bf16.mxu0 0
    %5519 = vmatpush1.bf16.msra.mxu0 %v5094
    %5520 = vmatprep.subr.bf16.mxu0 0
    %5521 = vmatpush1.bf16.msra.mxu0 %v5095
    %5522 = vmatprep.subr.bf16.mxu0 0
    %5523 = vmatpush1.bf16.msra.mxu0 %v5096
    %5524 = vmatprep.subr.bf16.mxu0 0
    %5525 = vmatpush1.bf16.msra.mxu0 %v5097
    %5526 = vmatprep.subr.bf16.mxu0 0
    %5527 = vmatpush1.bf16.msra.mxu0 %v5098
    %5528 = vmatprep.subr.bf16.mxu0 0
    %5529 = vmatpush1.bf16.msra.mxu0 %v5099
    %5530 = vmatprep.subr.bf16.mxu0 0
    %5531 = vmatpush1.bf16.msra.mxu0 %v5100
    %5532 = vmatprep.subr.bf16.mxu0 0
    %5533 = vmatpush1.bf16.msra.mxu0 %v5101
    %5534 = vmatprep.subr.bf16.mxu0 0
    %5535 = vmatpush1.bf16.msra.mxu0 %v5102
    %5536 = vmatprep.subr.bf16.mxu0 0
    %5537 = vmatpush1.bf16.msra.mxu0 %v5103
    %5538 = vmatprep.subr.bf16.mxu0 0
    %5539 = vmatpush1.bf16.msra.mxu0 %v5104
    %5540 = vmatprep.subr.bf16.mxu0 0
    %5541 = vmatpush1.bf16.msra.mxu0 %v5105
    %5542 = vmatprep.subr.bf16.mxu0 0
    %5543 = vmatpush1.bf16.msra.mxu0 %v5106
    %5544 = vmatprep.subr.bf16.mxu0 0
    %5545 = vmatpush1.bf16.msra.mxu0 %v5107
    %5546 = vmatprep.subr.bf16.mxu0 0
    %5547 = vmatpush1.bf16.msra.mxu0 %v5108
    %5548 = vmatprep.subr.bf16.mxu0 0
    %5549 = vmatpush1.bf16.msra.mxu0 %v5109
    %5550 = vmatprep.mubr.bf16.mxu0 %v2742
    %5551 = vmatmul.mubr.bf16.gmra.mrb[0].mxu0 %v2741
    %v5552 = vpop.f32.mrb[0].mxu0
    %v5553 = vadd.f32 %v5513, %v5552
    %v5554 = vpop.f32.mrb[0].mxu0
    %v5555 = vpop.f32.mrb[0].mxu0
    %v5556 = vpop.f32.mrb[0].mxu0
    %5557 = vdwg.mxu0
    %v5558 = vld [vmem:[%s11] sm:$0x1]
    %v5560 = vlaneseq
    %v5561 = vshrl.u32 %v5560, 7
    %v5562 = vsub.s32 0, %v5561
    %v5563 = vrot.slane %v5558, %v5562
    %v5565 = vadd.f32 %v5553, %v5563
    %v5566 = vld [vmem:[#allocation8] sm:$0xff]
    %v5567 = vld [vmem:[#allocation8 + $0x8] sm:$0xff]
    %v5568 = vld [vmem:[#allocation8 + $0x10] sm:$0xff]
    %v5569 = vld [vmem:[#allocation8 + $0x18] sm:$0xff]
    %v5570 = vld [vmem:[#allocation8 + $0x20] sm:$0xff]
    %v5571 = vld [vmem:[#allocation8 + $0x28] sm:$0xff]
    %v5572 = vld [vmem:[#allocation8 + $0x30] sm:$0xff]
    %v5573 = vld [vmem:[#allocation8 + $0x38] sm:$0xff]
    %v5574 = vld [vmem:[#allocation8 + $0x40] sm:$0xff]
    %v5575 = vld [vmem:[#allocation8 + $0x48] sm:$0xff]
    %v5576 = vld [vmem:[#allocation8 + $0x50] sm:$0xff]
    %v5577 = vld [vmem:[#allocation8 + $0x58] sm:$0xff]
    %v5578 = vld [vmem:[#allocation8 + $0x60] sm:$0xff]
    %v5579 = vld [vmem:[#allocation8 + $0x68] sm:$0xff]
    %v5580 = vld [vmem:[#allocation8 + $0x70] sm:$0xff]
    %v5581 = vld [vmem:[#allocation8 + $0x78] sm:$0xff]
    %5582 = vmatprep.subr.mxu0 0.0
    %5583 = vmatpush1.msra.mxu0 %v5566
    %5584 = vmatprep.subr.mxu0 0.0
    %5585 = vmatpush1.msra.mxu0 %v5567
    %5586 = vmatprep.subr.mxu0 0.0
    %5587 = vmatpush1.msra.mxu0 %v5568
    %5588 = vmatprep.subr.mxu0 0.0
    %5589 = vmatpush1.msra.mxu0 %v5569
    %5590 = vmatprep.subr.mxu0 0.0
    %5591 = vmatpush1.msra.mxu0 %v5570
    %5592 = vmatprep.subr.mxu0 0.0
    %5593 = vmatpush1.msra.mxu0 %v5571
    %5594 = vmatprep.subr.mxu0 0.0
    %5595 = vmatpush1.msra.mxu0 %v5572
    %5596 = vmatprep.subr.mxu0 0.0
    %5597 = vmatpush1.msra.mxu0 %v5573
    %5598 = vmatprep.subr.mxu0 0.0
    %5599 = vmatpush1.msra.mxu0 %v5574
    %5600 = vmatprep.subr.mxu0 0.0
    %5601 = vmatpush1.msra.mxu0 %v5575
    %5602 = vmatprep.subr.mxu0 0.0
    %5603 = vmatpush1.msra.mxu0 %v5576
    %5604 = vmatprep.subr.mxu0 0.0
    %5605 = vmatpush1.msra.mxu0 %v5577
    %5606 = vmatprep.subr.mxu0 0.0
    %5607 = vmatpush1.msra.mxu0 %v5578
    %5608 = vmatprep.subr.mxu0 0.0
    %5609 = vmatpush1.msra.mxu0 %v5579
    %5610 = vmatprep.subr.mxu0 0.0
    %5611 = vmatpush1.msra.mxu0 %v5580
    %5612 = vmatprep.subr.mxu0 0.0
    %5613 = vmatpush1.msra.mxu0 %v5581
    %5614 = vmatprep.subr.mxu0 0.0
    %5615 = vmatpush1.msra.mxu0 0.0
    %5616 = vmatprep.subr.mxu0 0.0
    %5617 = vmatpush1.msra.mxu0 0.0
    %5618 = vmatprep.subr.mxu0 0.0
    %5619 = vmatpush1.msra.mxu0 0.0
    %5620 = vmatprep.subr.mxu0 0.0
    %5621 = vmatpush1.msra.mxu0 0.0
    %5622 = vmatprep.subr.mxu0 0.0
    %5623 = vmatpush1.msra.mxu0 0.0
    %5624 = vmatprep.subr.mxu0 0.0
    %5625 = vmatpush1.msra.mxu0 0.0
    %5626 = vmatprep.subr.mxu0 0.0
    %5627 = vmatpush1.msra.mxu0 0.0
    %5628 = vmatprep.subr.mxu0 0.0
    %5629 = vmatpush1.msra.mxu0 0.0
    %5630 = vmatprep.subr.mxu0 0.0
    %5631 = vmatpush1.msra.mxu0 0.0
    %5632 = vmatprep.subr.mxu0 0.0
    %5633 = vmatpush1.msra.mxu0 0.0
    %5634 = vmatprep.subr.mxu0 0.0
    %5635 = vmatpush1.msra.mxu0 0.0
    %5636 = vmatprep.subr.mxu0 0.0
    %5637 = vmatpush1.msra.mxu0 0.0
    %5638 = vmatprep.subr.mxu0 0.0
    %5639 = vmatpush1.msra.mxu0 0.0
    %5640 = vmatprep.subr.mxu0 0.0
    %5641 = vmatpush1.msra.mxu0 0.0
    %5642 = vmatprep.subr.mxu0 0.0
    %5643 = vmatpush1.msra.mxu0 0.0
    %5644 = vmatprep.subr.mxu0 0.0
    %5645 = vmatpush1.msra.mxu0 0.0
    %5646 = vmatprep.mubr.f32.mxu0 0.0
    %5647 = vmatmul.mubr.f32.gmra.mrb[0].mxu0 %v4199
    %v5648 = vpop.f32.mrb[0].mxu0
    %v5649 = vadd.f32 %v5565, %v5648
    %v5650 = vpop.f32.mrb[0].mxu0
    %5651 = vdwg.mxu0
    %v5652 = vtanh.pop %v5649
    %v5653 = vld [vmem:[#allocation11] sm:$0xff]
    %v5654 = vld [vmem:[#allocation11 + $0x8] sm:$0xff]
    %v5655 = vld [vmem:[#allocation11 + $0x10] sm:$0xff]
    %v5656 = vld [vmem:[#allocation11 + $0x18] sm:$0xff]
    %v5657 = vld [vmem:[#allocation11 + $0x20] sm:$0xff]
    %v5658 = vld [vmem:[#allocation11 + $0x28] sm:$0xff]
    %v5659 = vld [vmem:[#allocation11 + $0x30] sm:$0xff]
    %v5660 = vld [vmem:[#allocation11 + $0x38] sm:$0xff]
    %v5661 = vld [vmem:[#allocation11 + $0x40] sm:$0xff]
    %v5662 = vld [vmem:[#allocation11 + $0x48] sm:$0xff]
    %v5663 = vld [vmem:[#allocation11 + $0x50] sm:$0xff]
    %v5664 = vld [vmem:[#allocation11 + $0x58] sm:$0xff]
    %v5665 = vld [vmem:[#allocation11 + $0x60] sm:$0xff]
    %v5666 = vld [vmem:[#allocation11 + $0x68] sm:$0xff]
    %v5667 = vld [vmem:[#allocation11 + $0x70] sm:$0xff]
    %v5668 = vld [vmem:[#allocation11 + $0x78] sm:$0xff]
    %v5669 = vld [vmem:[#allocation11 + $0x80] sm:$0xff]
    %v5670 = vld [vmem:[#allocation11 + $0x88] sm:$0xff]
    %v5671 = vld [vmem:[#allocation11 + $0x90] sm:$0xff]
    %v5672 = vld [vmem:[#allocation11 + $0x98] sm:$0xff]
    %v5673 = vld [vmem:[#allocation11 + $0xa0] sm:$0xff]
    %v5674 = vld [vmem:[#allocation11 + $0xa8] sm:$0xff]
    %v5675 = vld [vmem:[#allocation11 + $0xb0] sm:$0xff]
    %v5676 = vld [vmem:[#allocation11 + $0xb8] sm:$0xff]
    %v5677 = vld [vmem:[#allocation11 + $0xc0] sm:$0xff]
    %v5678 = vld [vmem:[#allocation11 + $0xc8] sm:$0xff]
    %v5679 = vld [vmem:[#allocation11 + $0xd0] sm:$0xff]
    %v5680 = vld [vmem:[#allocation11 + $0xd8] sm:$0xff]
    %v5681 = vld [vmem:[#allocation11 + $0xe0] sm:$0xff]
    %v5682 = vld [vmem:[#allocation11 + $0xe8] sm:$0xff]
    %v5683 = vld [vmem:[#allocation11 + $0xf0] sm:$0xff]
    %v5684 = vld [vmem:[#allocation11 + $0xf8] sm:$0xff]
    %v5685 = vld [vmem:[#allocation11 + $0x100] sm:$0xff]
    %v5686 = vld [vmem:[#allocation11 + $0x108] sm:$0xff]
    %v5687 = vld [vmem:[#allocation11 + $0x110] sm:$0xff]
    %v5688 = vld [vmem:[#allocation11 + $0x118] sm:$0xff]
    %v5689 = vld [vmem:[#allocation11 + $0x120] sm:$0xff]
    %v5690 = vld [vmem:[#allocation11 + $0x128] sm:$0xff]
    %v5691 = vld [vmem:[#allocation11 + $0x130] sm:$0xff]
    %v5692 = vld [vmem:[#allocation11 + $0x138] sm:$0xff]
    %v5693 = vld [vmem:[#allocation11 + $0x140] sm:$0xff]
    %v5694 = vld [vmem:[#allocation11 + $0x148] sm:$0xff]
    %v5695 = vld [vmem:[#allocation11 + $0x150] sm:$0xff]
    %v5696 = vld [vmem:[#allocation11 + $0x158] sm:$0xff]
    %v5697 = vld [vmem:[#allocation11 + $0x160] sm:$0xff]
    %v5698 = vld [vmem:[#allocation11 + $0x168] sm:$0xff]
    %v5699 = vld [vmem:[#allocation11 + $0x170] sm:$0xff]
    %v5700 = vld [vmem:[#allocation11 + $0x178] sm:$0xff]
    %v5701 = vld [vmem:[#allocation11 + $0x180] sm:$0xff]
    %v5702 = vld [vmem:[#allocation11 + $0x188] sm:$0xff]
    %v5703 = vld [vmem:[#allocation11 + $0x190] sm:$0xff]
    %v5704 = vld [vmem:[#allocation11 + $0x198] sm:$0xff]
    %v5705 = vld [vmem:[#allocation11 + $0x1a0] sm:$0xff]
    %v5706 = vld [vmem:[#allocation11 + $0x1a8] sm:$0xff]
    %v5707 = vld [vmem:[#allocation11 + $0x1b0] sm:$0xff]
    %v5708 = vld [vmem:[#allocation11 + $0x1b8] sm:$0xff]
    %v5709 = vld [vmem:[#allocation11 + $0x1c0] sm:$0xff]
    %v5710 = vld [vmem:[#allocation11 + $0x1c8] sm:$0xff]
    %v5711 = vld [vmem:[#allocation11 + $0x1d0] sm:$0xff]
    %v5712 = vld [vmem:[#allocation11 + $0x1d8] sm:$0xff]
    %v5713 = vld [vmem:[#allocation11 + $0x1e0] sm:$0xff]
    %v5714 = vld [vmem:[#allocation11 + $0x1e8] sm:$0xff]
    %v5715 = vld [vmem:[#allocation11 + $0x1f0] sm:$0xff]
    %v5716 = vld [vmem:[#allocation11 + $0x1f8] sm:$0xff]
    %v5717 = vld [vmem:[#allocation11 + $0x200] sm:$0xff]
    %v5718 = vld [vmem:[#allocation11 + $0x208] sm:$0xff]
    %v5719 = vld [vmem:[#allocation11 + $0x210] sm:$0xff]
    %v5720 = vld [vmem:[#allocation11 + $0x218] sm:$0xff]
    %v5721 = vld [vmem:[#allocation11 + $0x220] sm:$0xff]
    %v5722 = vld [vmem:[#allocation11 + $0x228] sm:$0xff]
    %v5723 = vld [vmem:[#allocation11 + $0x230] sm:$0xff]
    %v5724 = vld [vmem:[#allocation11 + $0x238] sm:$0xff]
    %v5725 = vld [vmem:[#allocation11 + $0x240] sm:$0xff]
    %v5726 = vld [vmem:[#allocation11 + $0x248] sm:$0xff]
    %v5727 = vld [vmem:[#allocation11 + $0x250] sm:$0xff]
    %v5728 = vld [vmem:[#allocation11 + $0x258] sm:$0xff]
    %v5729 = vld [vmem:[#allocation11 + $0x260] sm:$0xff]
    %v5730 = vld [vmem:[#allocation11 + $0x268] sm:$0xff]
    %v5731 = vld [vmem:[#allocation11 + $0x270] sm:$0xff]
    %v5732 = vld [vmem:[#allocation11 + $0x278] sm:$0xff]
    %v5733 = vld [vmem:[#allocation11 + $0x280] sm:$0xff]
    %v5734 = vld [vmem:[#allocation11 + $0x288] sm:$0xff]
    %v5735 = vld [vmem:[#allocation11 + $0x290] sm:$0xff]
    %v5736 = vld [vmem:[#allocation11 + $0x298] sm:$0xff]
    %v5737 = vld [vmem:[#allocation11 + $0x2a0] sm:$0xff]
    %v5738 = vld [vmem:[#allocation11 + $0x2a8] sm:$0xff]
    %v5739 = vld [vmem:[#allocation11 + $0x2b0] sm:$0xff]
    %v5740 = vld [vmem:[#allocation11 + $0x2b8] sm:$0xff]
    %v5741 = vld [vmem:[#allocation11 + $0x2c0] sm:$0xff]
    %v5742 = vld [vmem:[#allocation11 + $0x2c8] sm:$0xff]
    %v5743 = vld [vmem:[#allocation11 + $0x2d0] sm:$0xff]
    %v5744 = vld [vmem:[#allocation11 + $0x2d8] sm:$0xff]
    %v5745 = vld [vmem:[#allocation11 + $0x2e0] sm:$0xff]
    %v5746 = vld [vmem:[#allocation11 + $0x2e8] sm:$0xff]
    %v5747 = vld [vmem:[#allocation11 + $0x2f0] sm:$0xff]
    %v5748 = vld [vmem:[#allocation11 + $0x2f8] sm:$0xff]
    %v5749 = vld [vmem:[#allocation11 + $0x300] sm:$0xff]
    %v5750 = vld [vmem:[#allocation11 + $0x308] sm:$0xff]
    %v5751 = vld [vmem:[#allocation11 + $0x310] sm:$0xff]
    %v5752 = vld [vmem:[#allocation11 + $0x318] sm:$0xff]
    %v5753 = vld [vmem:[#allocation11 + $0x320] sm:$0xff]
    %v5754 = vld [vmem:[#allocation11 + $0x328] sm:$0xff]
    %v5755 = vld [vmem:[#allocation11 + $0x330] sm:$0xff]
    %v5756 = vld [vmem:[#allocation11 + $0x338] sm:$0xff]
    %v5757 = vld [vmem:[#allocation11 + $0x340] sm:$0xff]
    %v5758 = vld [vmem:[#allocation11 + $0x348] sm:$0xff]
    %v5759 = vld [vmem:[#allocation11 + $0x350] sm:$0xff]
    %v5760 = vld [vmem:[#allocation11 + $0x358] sm:$0xff]
    %v5761 = vld [vmem:[#allocation11 + $0x360] sm:$0xff]
    %v5762 = vld [vmem:[#allocation11 + $0x368] sm:$0xff]
    %v5763 = vld [vmem:[#allocation11 + $0x370] sm:$0xff]
    %v5764 = vld [vmem:[#allocation11 + $0x378] sm:$0xff]
    %v5765 = vld [vmem:[#allocation11 + $0x380] sm:$0xff]
    %v5766 = vld [vmem:[#allocation11 + $0x388] sm:$0xff]
    %v5767 = vld [vmem:[#allocation11 + $0x390] sm:$0xff]
    %v5768 = vld [vmem:[#allocation11 + $0x398] sm:$0xff]
    %v5769 = vld [vmem:[#allocation11 + $0x3a0] sm:$0xff]
    %v5770 = vld [vmem:[#allocation11 + $0x3a8] sm:$0xff]
    %v5771 = vld [vmem:[#allocation11 + $0x3b0] sm:$0xff]
    %v5772 = vld [vmem:[#allocation11 + $0x3b8] sm:$0xff]
    %v5773 = vld [vmem:[#allocation11 + $0x3c0] sm:$0xff]
    %v5774 = vld [vmem:[#allocation11 + $0x3c8] sm:$0xff]
    %v5775 = vld [vmem:[#allocation11 + $0x3d0] sm:$0xff]
    %v5776 = vld [vmem:[#allocation11 + $0x3d8] sm:$0xff]
    %v5777 = vld [vmem:[#allocation11 + $0x3e0] sm:$0xff]
    %v5778 = vld [vmem:[#allocation11 + $0x3e8] sm:$0xff]
    %v5779 = vld [vmem:[#allocation11 + $0x3f0] sm:$0xff]
    %v5780 = vld [vmem:[#allocation11 + $0x3f8] sm:$0xff]
    %v5781 = vld [vmem:[%s13] sm:$0xf]
    %v5783 = vlaneseq
    %v5784 = vshrl.u32 %v5783, 7
    %v5785 = vsub.s32 0, %v5784
    %v5786 = vrot.slane %v5781, %v5785
    %v5787 = vlaneseq
    %v5788 = vshrl.u32 %v5787, 7
    %v5789 = vsub.s32 1, %v5788
    %v5790 = vrot.slane %v5781, %v5789
    %v5791 = vlaneseq
    %v5792 = vshrl.u32 %v5791, 7
    %v5793 = vsub.s32 2, %v5792
    %v5794 = vrot.slane %v5781, %v5793
    %v5795 = vlaneseq
    %v5796 = vshrl.u32 %v5795, 7
    %v5797 = vsub.s32 3, %v5796
    %v5798 = vrot.slane %v5781, %v5797
    %5803 = vmatprep.subr.mxu0 %v5654
    %5804 = vmatpush1.msra.mxu0 %v5653
    %5805 = vmatprep.subr.mxu0 %v5658
    %5806 = vmatpush1.msra.mxu0 %v5657
    %5807 = vmatprep.subr.mxu0 %v5662
    %5808 = vmatpush1.msra.mxu0 %v5661
    %5809 = vmatprep.subr.mxu0 %v5666
    %5810 = vmatpush1.msra.mxu0 %v5665
    %5811 = vmatprep.subr.mxu0 %v5670
    %5812 = vmatpush1.msra.mxu0 %v5669
    %5813 = vmatprep.subr.mxu0 %v5674
    %5814 = vmatpush1.msra.mxu0 %v5673
    %5815 = vmatprep.subr.mxu0 %v5678
    %5816 = vmatpush1.msra.mxu0 %v5677
    %5817 = vmatprep.subr.mxu0 %v5682
    %5818 = vmatpush1.msra.mxu0 %v5681
    %5819 = vmatprep.subr.mxu0 %v5686
    %5820 = vmatpush1.msra.mxu0 %v5685
    %5821 = vmatprep.subr.mxu0 %v5690
    %5822 = vmatpush1.msra.mxu0 %v5689
    %5823 = vmatprep.subr.mxu0 %v5694
    %5824 = vmatpush1.msra.mxu0 %v5693
    %5825 = vmatprep.subr.mxu0 %v5698
    %5826 = vmatpush1.msra.mxu0 %v5697
    %5827 = vmatprep.subr.mxu0 %v5702
    %5828 = vmatpush1.msra.mxu0 %v5701
    %5829 = vmatprep.subr.mxu0 %v5706
    %5830 = vmatpush1.msra.mxu0 %v5705
    %5831 = vmatprep.subr.mxu0 %v5710
    %5832 = vmatpush1.msra.mxu0 %v5709
    %5833 = vmatprep.subr.mxu0 %v5714
    %5834 = vmatpush1.msra.mxu0 %v5713
    %5835 = vmatprep.subr.mxu0 %v5718
    %5836 = vmatpush1.msra.mxu0 %v5717
    %5837 = vmatprep.subr.mxu0 %v5722
    %5838 = vmatpush1.msra.mxu0 %v5721
    %5839 = vmatprep.subr.mxu0 %v5726
    %5840 = vmatpush1.msra.mxu0 %v5725
    %5841 = vmatprep.subr.mxu0 %v5730
    %5842 = vmatpush1.msra.mxu0 %v5729
    %5843 = vmatprep.subr.mxu0 %v5734
    %5844 = vmatpush1.msra.mxu0 %v5733
    %5845 = vmatprep.subr.mxu0 %v5738
    %5846 = vmatpush1.msra.mxu0 %v5737
    %5847 = vmatprep.subr.mxu0 %v5742
    %5848 = vmatpush1.msra.mxu0 %v5741
    %5849 = vmatprep.subr.mxu0 %v5746
    %5850 = vmatpush1.msra.mxu0 %v5745
    %5851 = vmatprep.subr.mxu0 %v5750
    %5852 = vmatpush1.msra.mxu0 %v5749
    %5853 = vmatprep.subr.mxu0 %v5754
    %5854 = vmatpush1.msra.mxu0 %v5753
    %5855 = vmatprep.subr.mxu0 %v5758
    %5856 = vmatpush1.msra.mxu0 %v5757
    %5857 = vmatprep.subr.mxu0 %v5762
    %5858 = vmatpush1.msra.mxu0 %v5761
    %5859 = vmatprep.subr.mxu0 %v5766
    %5860 = vmatpush1.msra.mxu0 %v5765
    %5861 = vmatprep.subr.mxu0 %v5770
    %5862 = vmatpush1.msra.mxu0 %v5769
    %5863 = vmatprep.subr.mxu0 %v5774
    %5864 = vmatpush1.msra.mxu0 %v5773
    %5865 = vmatprep.subr.mxu0 %v5778
    %5866 = vmatpush1.msra.mxu0 %v5777
    %5867 = vmatprep.mubr.f32.mxu0 %v4199
    %5868 = vmatmul.mubr.f32.gmra.mrb[0].mxu0 %v5652
    %v5869 = vpop.f32.mrb[0].mxu0
    %v5870 = vadd.f32 %v5786, %v5869
    %v5871 = vpop.f32.mrb[0].mxu0
    %v5872 = vadd.f32 %v5790, %v5871
    %5873 = vdwg.mxu0
    %5874 = vmatprep.subr.mxu0 %v5656
    %5875 = vmatpush1.msra.mxu0 %v5655
    %5876 = vmatprep.subr.mxu0 %v5660
    %5877 = vmatpush1.msra.mxu0 %v5659
    %5878 = vmatprep.subr.mxu0 %v5664
    %5879 = vmatpush1.msra.mxu0 %v5663
    %5880 = vmatprep.subr.mxu0 %v5668
    %5881 = vmatpush1.msra.mxu0 %v5667
    %5882 = vmatprep.subr.mxu0 %v5672
    %5883 = vmatpush1.msra.mxu0 %v5671
    %5884 = vmatprep.subr.mxu0 %v5676
    %5885 = vmatpush1.msra.mxu0 %v5675
    %5886 = vmatprep.subr.mxu0 %v5680
    %5887 = vmatpush1.msra.mxu0 %v5679
    %5888 = vmatprep.subr.mxu0 %v5684
    %5889 = vmatpush1.msra.mxu0 %v5683
    %5890 = vmatprep.subr.mxu0 %v5688
    %5891 = vmatpush1.msra.mxu0 %v5687
    %5892 = vmatprep.subr.mxu0 %v5692
    %5893 = vmatpush1.msra.mxu0 %v5691
    %5894 = vmatprep.subr.mxu0 %v5696
    %5895 = vmatpush1.msra.mxu0 %v5695
    %5896 = vmatprep.subr.mxu0 %v5700
    %5897 = vmatpush1.msra.mxu0 %v5699
    %5898 = vmatprep.subr.mxu0 %v5704
    %5899 = vmatpush1.msra.mxu0 %v5703
    %5900 = vmatprep.subr.mxu0 %v5708
    %5901 = vmatpush1.msra.mxu0 %v5707
    %5902 = vmatprep.subr.mxu0 %v5712
    %5903 = vmatpush1.msra.mxu0 %v5711
    %5904 = vmatprep.subr.mxu0 %v5716
    %5905 = vmatpush1.msra.mxu0 %v5715
    %5906 = vmatprep.subr.mxu0 %v5720
    %5907 = vmatpush1.msra.mxu0 %v5719
    %5908 = vmatprep.subr.mxu0 %v5724
    %5909 = vmatpush1.msra.mxu0 %v5723
    %5910 = vmatprep.subr.mxu0 %v5728
    %5911 = vmatpush1.msra.mxu0 %v5727
    %5912 = vmatprep.subr.mxu0 %v5732
    %5913 = vmatpush1.msra.mxu0 %v5731
    %5914 = vmatprep.subr.mxu0 %v5736
    %5915 = vmatpush1.msra.mxu0 %v5735
    %5916 = vmatprep.subr.mxu0 %v5740
    %5917 = vmatpush1.msra.mxu0 %v5739
    %5918 = vmatprep.subr.mxu0 %v5744
    %5919 = vmatpush1.msra.mxu0 %v5743
    %5920 = vmatprep.subr.mxu0 %v5748
    %5921 = vmatpush1.msra.mxu0 %v5747
    %5922 = vmatprep.subr.mxu0 %v5752
    %5923 = vmatpush1.msra.mxu0 %v5751
    %5924 = vmatprep.subr.mxu0 %v5756
    %5925 = vmatpush1.msra.mxu0 %v5755
    %5926 = vmatprep.subr.mxu0 %v5760
    %5927 = vmatpush1.msra.mxu0 %v5759
    %5928 = vmatprep.subr.mxu0 %v5764
    %5929 = vmatpush1.msra.mxu0 %v5763
    %5930 = vmatprep.subr.mxu0 %v5768
    %5931 = vmatpush1.msra.mxu0 %v5767
    %5932 = vmatprep.subr.mxu0 %v5772
    %5933 = vmatpush1.msra.mxu0 %v5771
    %5934 = vmatprep.subr.mxu0 %v5776
    %5935 = vmatpush1.msra.mxu0 %v5775
    %5936 = vmatprep.subr.mxu0 %v5780
    %5937 = vmatpush1.msra.mxu0 %v5779
    %5938 = vmatprep.mubr.f32.mxu0 %v4199
    %5939 = vmatmul.mubr.f32.gmra.mrb[0].mxu0 %v5652
    %v5940 = vpop.f32.mrb[0].mxu0
    %v5941 = vadd.f32 %v5794, %v5940
    %v5942 = vpop.f32.mrb[0].mxu0
    %v5943 = vadd.f32 %v5798, %v5942
    %5944 = vdwg.mxu0
    %v5945 = vxor.u32 %v5870, 2147483648
    %v5946 = vmul.f32 %v5945, 1.442695
    %v5947 = vpow.pop %v5946
    %v5948 = vadd.f32 %v5947, 1.0
    %v5949 = vrcp.pop %v5948
    %v5950 = vmul.f32 1.0, %v5949
    %v5951 = vxor.u32 %v5872, 2147483648
    %v5952 = vmul.f32 %v5951, 1.442695
    %v5953 = vpow.pop %v5952
    %v5954 = vadd.f32 %v5953, 1.0
    %v5955 = vrcp.pop %v5954
    %v5956 = vmul.f32 1.0, %v5955
    %v5957 = vmul.f32 %v5950, %v5943
    %v5958 = vadd.f32 %v5941, %v5957
    %v5959 = vtanh.pop %v5958
    %v5960 = vsub.f32 1.0, %v5956
    %v5961 = vmul.f32 %v5960, %v5959
    %v5962 = vmul.f32 %v5956, %v4199
    %v5963 = vadd.f32 %v5961, %v5962
    %5964 = vmatprep.subr.mxu0 0.0
    %5965 = vmatpush1.msra.mxu0 %v5566
    %5966 = vmatprep.subr.mxu0 0.0
    %5967 = vmatpush1.msra.mxu0 %v5567
    %5968 = vmatprep.subr.mxu0 0.0
    %5969 = vmatpush1.msra.mxu0 %v5568
    %5970 = vmatprep.subr.mxu0 0.0
    %5971 = vmatpush1.msra.mxu0 %v5569
    %5972 = vmatprep.subr.mxu0 0.0
    %5973 = vmatpush1.msra.mxu0 %v5570
    %5974 = vmatprep.subr.mxu0 0.0
    %5975 = vmatpush1.msra.mxu0 %v5571
    %5976 = vmatprep.subr.mxu0 0.0
    %5977 = vmatpush1.msra.mxu0 %v5572
    %5978 = vmatprep.subr.mxu0 0.0
    %5979 = vmatpush1.msra.mxu0 %v5573
    %5980 = vmatprep.subr.mxu0 0.0
    %5981 = vmatpush1.msra.mxu0 %v5574
    %5982 = vmatprep.subr.mxu0 0.0
    %5983 = vmatpush1.msra.mxu0 %v5575
    %5984 = vmatprep.subr.mxu0 0.0
    %5985 = vmatpush1.msra.mxu0 %v5576
    %5986 = vmatprep.subr.mxu0 0.0
    %5987 = vmatpush1.msra.mxu0 %v5577
    %5988 = vmatprep.subr.mxu0 0.0
    %5989 = vmatpush1.msra.mxu0 %v5578
    %5990 = vmatprep.subr.mxu0 0.0
    %5991 = vmatpush1.msra.mxu0 %v5579
    %5992 = vmatprep.subr.mxu0 0.0
    %5993 = vmatpush1.msra.mxu0 %v5580
    %5994 = vmatprep.subr.mxu0 0.0
    %5995 = vmatpush1.msra.mxu0 %v5581
    %5996 = vmatprep.subr.mxu0 0.0
    %5997 = vmatpush1.msra.mxu0 0.0
    %5998 = vmatprep.subr.mxu0 0.0
    %5999 = vmatpush1.msra.mxu0 0.0
    %6000 = vmatprep.subr.mxu0 0.0
    %6001 = vmatpush1.msra.mxu0 0.0
    %6002 = vmatprep.subr.mxu0 0.0
    %6003 = vmatpush1.msra.mxu0 0.0
    %6004 = vmatprep.subr.mxu0 0.0
    %6005 = vmatpush1.msra.mxu0 0.0
    %6006 = vmatprep.subr.mxu0 0.0
    %6007 = vmatpush1.msra.mxu0 0.0
    %6008 = vmatprep.subr.mxu0 0.0
    %6009 = vmatpush1.msra.mxu0 0.0
    %6010 = vmatprep.subr.mxu0 0.0
    %6011 = vmatpush1.msra.mxu0 0.0
    %6012 = vmatprep.subr.mxu0 0.0
    %6013 = vmatpush1.msra.mxu0 0.0
    %6014 = vmatprep.subr.mxu0 0.0
    %6015 = vmatpush1.msra.mxu0 0.0
    %6016 = vmatprep.subr.mxu0 0.0
    %6017 = vmatpush1.msra.mxu0 0.0
    %6018 = vmatprep.subr.mxu0 0.0
    %6019 = vmatpush1.msra.mxu0 0.0
    %6020 = vmatprep.subr.mxu0 0.0
    %6021 = vmatpush1.msra.mxu0 0.0
    %6022 = vmatprep.subr.mxu0 0.0
    %6023 = vmatpush1.msra.mxu0 0.0
    %6024 = vmatprep.subr.mxu0 0.0
    %6025 = vmatpush1.msra.mxu0 0.0
    %6026 = vmatprep.subr.mxu0 0.0
    %6027 = vmatpush1.msra.mxu0 0.0
    %6028 = vmatprep.mubr.f32.mxu0 0.0
    %6029 = vmatmul.mubr.f32.gmra.mrb[0].mxu0 %v5963
    %v6030 = vpop.f32.mrb[0].mxu0
    %v6031 = vadd.f32 %v5565, %v6030
    %v6032 = vpop.f32.mrb[0].mxu0
    %6033 = vdwg.mxu0
    %v6034 = vtanh.pop %v6031
    %6035 = vmatprep.subr.mxu0 %v5654
    %6036 = vmatpush1.msra.mxu0 %v5653
    %6037 = vmatprep.subr.mxu0 %v5658
    %6038 = vmatpush1.msra.mxu0 %v5657
    %6039 = vmatprep.subr.mxu0 %v5662
    %6040 = vmatpush1.msra.mxu0 %v5661
    %6041 = vmatprep.subr.mxu0 %v5666
    %6042 = vmatpush1.msra.mxu0 %v5665
    %6043 = vmatprep.subr.mxu0 %v5670
    %6044 = vmatpush1.msra.mxu0 %v5669
    %6045 = vmatprep.subr.mxu0 %v5674
    %6046 = vmatpush1.msra.mxu0 %v5673
    %6047 = vmatprep.subr.mxu0 %v5678
    %6048 = vmatpush1.msra.mxu0 %v5677
    %6049 = vmatprep.subr.mxu0 %v5682
    %6050 = vmatpush1.msra.mxu0 %v5681
    %6051 = vmatprep.subr.mxu0 %v5686
    %6052 = vmatpush1.msra.mxu0 %v5685
    %6053 = vmatprep.subr.mxu0 %v5690
    %6054 = vmatpush1.msra.mxu0 %v5689
    %6055 = vmatprep.subr.mxu0 %v5694
    %6056 = vmatpush1.msra.mxu0 %v5693
    %6057 = vmatprep.subr.mxu0 %v5698
    %6058 = vmatpush1.msra.mxu0 %v5697
    %6059 = vmatprep.subr.mxu0 %v5702
    %6060 = vmatpush1.msra.mxu0 %v5701
    %6061 = vmatprep.subr.mxu0 %v5706
    %6062 = vmatpush1.msra.mxu0 %v5705
    %6063 = vmatprep.subr.mxu0 %v5710
    %6064 = vmatpush1.msra.mxu0 %v5709
    %6065 = vmatprep.subr.mxu0 %v5714
    %6066 = vmatpush1.msra.mxu0 %v5713
    %6067 = vmatprep.subr.mxu0 %v5718
    %6068 = vmatpush1.msra.mxu0 %v5717
    %6069 = vmatprep.subr.mxu0 %v5722
    %6070 = vmatpush1.msra.mxu0 %v5721
    %6071 = vmatprep.subr.mxu0 %v5726
    %6072 = vmatpush1.msra.mxu0 %v5725
    %6073 = vmatprep.subr.mxu0 %v5730
    %6074 = vmatpush1.msra.mxu0 %v5729
    %6075 = vmatprep.subr.mxu0 %v5734
    %6076 = vmatpush1.msra.mxu0 %v5733
    %6077 = vmatprep.subr.mxu0 %v5738
    %6078 = vmatpush1.msra.mxu0 %v5737
    %6079 = vmatprep.subr.mxu0 %v5742
    %6080 = vmatpush1.msra.mxu0 %v5741
    %6081 = vmatprep.subr.mxu0 %v5746
    %6082 = vmatpush1.msra.mxu0 %v5745
    %6083 = vmatprep.subr.mxu0 %v5750
    %6084 = vmatpush1.msra.mxu0 %v5749
    %6085 = vmatprep.subr.mxu0 %v5754
    %6086 = vmatpush1.msra.mxu0 %v5753
    %6087 = vmatprep.subr.mxu0 %v5758
    %6088 = vmatpush1.msra.mxu0 %v5757
    %6089 = vmatprep.subr.mxu0 %v5762
    %6090 = vmatpush1.msra.mxu0 %v5761
    %6091 = vmatprep.subr.mxu0 %v5766
    %6092 = vmatpush1.msra.mxu0 %v5765
    %6093 = vmatprep.subr.mxu0 %v5770
    %6094 = vmatpush1.msra.mxu0 %v5769
    %6095 = vmatprep.subr.mxu0 %v5774
    %6096 = vmatpush1.msra.mxu0 %v5773
    %6097 = vmatprep.subr.mxu0 %v5778
    %6098 = vmatpush1.msra.mxu0 %v5777
    %6099 = vmatprep.mubr.f32.mxu0 %v5963
    %6100 = vmatmul.mubr.f32.gmra.mrb[0].mxu0 %v6034
    %v6101 = vpop.f32.mrb[0].mxu0
    %v6102 = vadd.f32 %v5786, %v6101
    %v6103 = vpop.f32.mrb[0].mxu0
    %v6104 = vadd.f32 %v5790, %v6103
    %6105 = vdwg.mxu0
    %6106 = vmatprep.subr.mxu0 %v5656
    %6107 = vmatpush1.msra.mxu0 %v5655
    %6108 = vmatprep.subr.mxu0 %v5660
    %6109 = vmatpush1.msra.mxu0 %v5659
    %6110 = vmatprep.subr.mxu0 %v5664
    %6111 = vmatpush1.msra.mxu0 %v5663
    %6112 = vmatprep.subr.mxu0 %v5668
    %6113 = vmatpush1.msra.mxu0 %v5667
    %6114 = vmatprep.subr.mxu0 %v5672
    %6115 = vmatpush1.msra.mxu0 %v5671
    %6116 = vmatprep.subr.mxu0 %v5676
    %6117 = vmatpush1.msra.mxu0 %v5675
    %6118 = vmatprep.subr.mxu0 %v5680
    %6119 = vmatpush1.msra.mxu0 %v5679
    %6120 = vmatprep.subr.mxu0 %v5684
    %6121 = vmatpush1.msra.mxu0 %v5683
    %6122 = vmatprep.subr.mxu0 %v5688
    %6123 = vmatpush1.msra.mxu0 %v5687
    %6124 = vmatprep.subr.mxu0 %v5692
    %6125 = vmatpush1.msra.mxu0 %v5691
    %6126 = vmatprep.subr.mxu0 %v5696
    %6127 = vmatpush1.msra.mxu0 %v5695
    %6128 = vmatprep.subr.mxu0 %v5700
    %6129 = vmatpush1.msra.mxu0 %v5699
    %6130 = vmatprep.subr.mxu0 %v5704
    %6131 = vmatpush1.msra.mxu0 %v5703
    %6132 = vmatprep.subr.mxu0 %v5708
    %6133 = vmatpush1.msra.mxu0 %v5707
    %6134 = vmatprep.subr.mxu0 %v5712
    %6135 = vmatpush1.msra.mxu0 %v5711
    %6136 = vmatprep.subr.mxu0 %v5716
    %6137 = vmatpush1.msra.mxu0 %v5715
    %6138 = vmatprep.subr.mxu0 %v5720
    %6139 = vmatpush1.msra.mxu0 %v5719
    %6140 = vmatprep.subr.mxu0 %v5724
    %6141 = vmatpush1.msra.mxu0 %v5723
    %6142 = vmatprep.subr.mxu0 %v5728
    %6143 = vmatpush1.msra.mxu0 %v5727
    %6144 = vmatprep.subr.mxu0 %v5732
    %6145 = vmatpush1.msra.mxu0 %v5731
    %6146 = vmatprep.subr.mxu0 %v5736
    %6147 = vmatpush1.msra.mxu0 %v5735
    %6148 = vmatprep.subr.mxu0 %v5740
    %6149 = vmatpush1.msra.mxu0 %v5739
    %6150 = vmatprep.subr.mxu0 %v5744
    %6151 = vmatpush1.msra.mxu0 %v5743
    %6152 = vmatprep.subr.mxu0 %v5748
    %6153 = vmatpush1.msra.mxu0 %v5747
    %6154 = vmatprep.subr.mxu0 %v5752
    %6155 = vmatpush1.msra.mxu0 %v5751
    %6156 = vmatprep.subr.mxu0 %v5756
    %6157 = vmatpush1.msra.mxu0 %v5755
    %6158 = vmatprep.subr.mxu0 %v5760
    %6159 = vmatpush1.msra.mxu0 %v5759
    %6160 = vmatprep.subr.mxu0 %v5764
    %6161 = vmatpush1.msra.mxu0 %v5763
    %6162 = vmatprep.subr.mxu0 %v5768
    %6163 = vmatpush1.msra.mxu0 %v5767
    %6164 = vmatprep.subr.mxu0 %v5772
    %6165 = vmatpush1.msra.mxu0 %v5771
    %6166 = vmatprep.subr.mxu0 %v5776
    %6167 = vmatpush1.msra.mxu0 %v5775
    %6168 = vmatprep.subr.mxu0 %v5780
    %6169 = vmatpush1.msra.mxu0 %v5779
    %6170 = vmatprep.mubr.f32.mxu0 %v5963
    %6171 = vmatmul.mubr.f32.gmra.mrb[0].mxu0 %v6034
    %v6172 = vpop.f32.mrb[0].mxu0
    %v6173 = vadd.f32 %v5794, %v6172
    %v6174 = vpop.f32.mrb[0].mxu0
    %v6175 = vadd.f32 %v5798, %v6174
    %6176 = vdwg.mxu0
    %v6177 = vxor.u32 %v6102, 2147483648
    %v6178 = vmul.f32 %v6177, 1.442695
    %v6179 = vpow.pop %v6178
    %v6180 = vadd.f32 %v6179, 1.0
    %v6181 = vrcp.pop %v6180
    %v6182 = vmul.f32 1.0, %v6181
    %v6183 = vxor.u32 %v6104, 2147483648
    %v6184 = vmul.f32 %v6183, 1.442695
    %v6185 = vpow.pop %v6184
    %v6186 = vadd.f32 %v6185, 1.0
    %v6187 = vrcp.pop %v6186
    %v6188 = vmul.f32 1.0, %v6187
    %v6189 = vmul.f32 %v6182, %v6175
    %v6190 = vadd.f32 %v6173, %v6189
    %v6191 = vtanh.pop %v6190
    %v6192 = vsub.f32 1.0, %v6188
    %v6193 = vmul.f32 %v6192, %v6191
    %v6194 = vmul.f32 %v6188, %v5963
    %v6195 = vadd.f32 %v6193, %v6194
    %6196 = vmatprep.subr.mxu0 0.0
    %6197 = vmatpush1.msra.mxu0 %v5566
    %6198 = vmatprep.subr.mxu0 0.0
    %6199 = vmatpush1.msra.mxu0 %v5567
    %6200 = vmatprep.subr.mxu0 0.0
    %6201 = vmatpush1.msra.mxu0 %v5568
    %6202 = vmatprep.subr.mxu0 0.0
    %6203 = vmatpush1.msra.mxu0 %v5569
    %6204 = vmatprep.subr.mxu0 0.0
    %6205 = vmatpush1.msra.mxu0 %v5570
    %6206 = vmatprep.subr.mxu0 0.0
    %6207 = vmatpush1.msra.mxu0 %v5571
    %6208 = vmatprep.subr.mxu0 0.0
    %6209 = vmatpush1.msra.mxu0 %v5572
    %6210 = vmatprep.subr.mxu0 0.0
    %6211 = vmatpush1.msra.mxu0 %v5573
    %6212 = vmatprep.subr.mxu0 0.0
    %6213 = vmatpush1.msra.mxu0 %v5574
    %6214 = vmatprep.subr.mxu0 0.0
    %6215 = vmatpush1.msra.mxu0 %v5575
    %6216 = vmatprep.subr.mxu0 0.0
    %6217 = vmatpush1.msra.mxu0 %v5576
    %6218 = vmatprep.subr.mxu0 0.0
    %6219 = vmatpush1.msra.mxu0 %v5577
    %6220 = vmatprep.subr.mxu0 0.0
    %6221 = vmatpush1.msra.mxu0 %v5578
    %6222 = vmatprep.subr.mxu0 0.0
    %6223 = vmatpush1.msra.mxu0 %v5579
    %6224 = vmatprep.subr.mxu0 0.0
    %6225 = vmatpush1.msra.mxu0 %v5580
    %6226 = vmatprep.subr.mxu0 0.0
    %6227 = vmatpush1.msra.mxu0 %v5581
    %6228 = vmatprep.subr.mxu0 0.0
    %6229 = vmatpush1.msra.mxu0 0.0
    %6230 = vmatprep.subr.mxu0 0.0
    %6231 = vmatpush1.msra.mxu0 0.0
    %6232 = vmatprep.subr.mxu0 0.0
    %6233 = vmatpush1.msra.mxu0 0.0
    %6234 = vmatprep.subr.mxu0 0.0
    %6235 = vmatpush1.msra.mxu0 0.0
    %6236 = vmatprep.subr.mxu0 0.0
    %6237 = vmatpush1.msra.mxu0 0.0
    %6238 = vmatprep.subr.mxu0 0.0
    %6239 = vmatpush1.msra.mxu0 0.0
    %6240 = vmatprep.subr.mxu0 0.0
    %6241 = vmatpush1.msra.mxu0 0.0
    %6242 = vmatprep.subr.mxu0 0.0
    %6243 = vmatpush1.msra.mxu0 0.0
    %6244 = vmatprep.subr.mxu0 0.0
    %6245 = vmatpush1.msra.mxu0 0.0
    %6246 = vmatprep.subr.mxu0 0.0
    %6247 = vmatpush1.msra.mxu0 0.0
    %6248 = vmatprep.subr.mxu0 0.0
    %6249 = vmatpush1.msra.mxu0 0.0
    %6250 = vmatprep.subr.mxu0 0.0
    %6251 = vmatpush1.msra.mxu0 0.0
    %6252 = vmatprep.subr.mxu0 0.0
    %6253 = vmatpush1.msra.mxu0 0.0
    %6254 = vmatprep.subr.mxu0 0.0
    %6255 = vmatpush1.msra.mxu0 0.0
    %6256 = vmatprep.subr.mxu0 0.0
    %6257 = vmatpush1.msra.mxu0 0.0
    %6258 = vmatprep.subr.mxu0 0.0
    %6259 = vmatpush1.msra.mxu0 0.0
    %6260 = vmatprep.mubr.f32.mxu0 0.0
    %6261 = vmatmul.mubr.f32.gmra.mrb[0].mxu0 %v6195
    %v6262 = vpop.f32.mrb[0].mxu0
    %v6263 = vadd.f32 %v5565, %v6262
    %v6264 = vpop.f32.mrb[0].mxu0
    %6265 = vdwg.mxu0
    %v6266 = vtanh.pop %v6263
    %6267 = vmatprep.subr.mxu0 %v5654
    %6268 = vmatpush1.msra.mxu0 %v5653
    %6269 = vmatprep.subr.mxu0 %v5658
    %6270 = vmatpush1.msra.mxu0 %v5657
    %6271 = vmatprep.subr.mxu0 %v5662
    %6272 = vmatpush1.msra.mxu0 %v5661
    %6273 = vmatprep.subr.mxu0 %v5666
    %6274 = vmatpush1.msra.mxu0 %v5665
    %6275 = vmatprep.subr.mxu0 %v5670
    %6276 = vmatpush1.msra.mxu0 %v5669
    %6277 = vmatprep.subr.mxu0 %v5674
    %6278 = vmatpush1.msra.mxu0 %v5673
    %6279 = vmatprep.subr.mxu0 %v5678
    %6280 = vmatpush1.msra.mxu0 %v5677
    %6281 = vmatprep.subr.mxu0 %v5682
    %6282 = vmatpush1.msra.mxu0 %v5681
    %6283 = vmatprep.subr.mxu0 %v5686
    %6284 = vmatpush1.msra.mxu0 %v5685
    %6285 = vmatprep.subr.mxu0 %v5690
    %6286 = vmatpush1.msra.mxu0 %v5689
    %6287 = vmatprep.subr.mxu0 %v5694
    %6288 = vmatpush1.msra.mxu0 %v5693
    %6289 = vmatprep.subr.mxu0 %v5698
    %6290 = vmatpush1.msra.mxu0 %v5697
    %6291 = vmatprep.subr.mxu0 %v5702
    %6292 = vmatpush1.msra.mxu0 %v5701
    %6293 = vmatprep.subr.mxu0 %v5706
    %6294 = vmatpush1.msra.mxu0 %v5705
    %6295 = vmatprep.subr.mxu0 %v5710
    %6296 = vmatpush1.msra.mxu0 %v5709
    %6297 = vmatprep.subr.mxu0 %v5714
    %6298 = vmatpush1.msra.mxu0 %v5713
    %6299 = vmatprep.subr.mxu0 %v5718
    %6300 = vmatpush1.msra.mxu0 %v5717
    %6301 = vmatprep.subr.mxu0 %v5722
    %6302 = vmatpush1.msra.mxu0 %v5721
    %6303 = vmatprep.subr.mxu0 %v5726
    %6304 = vmatpush1.msra.mxu0 %v5725
    %6305 = vmatprep.subr.mxu0 %v5730
    %6306 = vmatpush1.msra.mxu0 %v5729
    %6307 = vmatprep.subr.mxu0 %v5734
    %6308 = vmatpush1.msra.mxu0 %v5733
    %6309 = vmatprep.subr.mxu0 %v5738
    %6310 = vmatpush1.msra.mxu0 %v5737
    %6311 = vmatprep.subr.mxu0 %v5742
    %6312 = vmatpush1.msra.mxu0 %v5741
    %6313 = vmatprep.subr.mxu0 %v5746
    %6314 = vmatpush1.msra.mxu0 %v5745
    %6315 = vmatprep.subr.mxu0 %v5750
    %6316 = vmatpush1.msra.mxu0 %v5749
    %6317 = vmatprep.subr.mxu0 %v5754
    %6318 = vmatpush1.msra.mxu0 %v5753
    %6319 = vmatprep.subr.mxu0 %v5758
    %6320 = vmatpush1.msra.mxu0 %v5757
    %6321 = vmatprep.subr.mxu0 %v5762
    %6322 = vmatpush1.msra.mxu0 %v5761
    %6323 = vmatprep.subr.mxu0 %v5766
    %6324 = vmatpush1.msra.mxu0 %v5765
    %6325 = vmatprep.subr.mxu0 %v5770
    %6326 = vmatpush1.msra.mxu0 %v5769
    %6327 = vmatprep.subr.mxu0 %v5774
    %6328 = vmatpush1.msra.mxu0 %v5773
    %6329 = vmatprep.subr.mxu0 %v5778
    %6330 = vmatpush1.msra.mxu0 %v5777
    %6331 = vmatprep.mubr.f32.mxu0 %v6195
    %6332 = vmatmul.mubr.f32.gmra.mrb[0].mxu0 %v6266
    %v6333 = vpop.f32.mrb[0].mxu0
    %v6334 = vadd.f32 %v5786, %v6333
    %v6335 = vpop.f32.mrb[0].mxu0
    %v6336 = vadd.f32 %v5790, %v6335
    %6337 = vdwg.mxu0
    %6338 = vmatprep.subr.mxu0 %v5656
    %6339 = vmatpush1.msra.mxu0 %v5655
    %6340 = vmatprep.subr.mxu0 %v5660
    %6341 = vmatpush1.msra.mxu0 %v5659
    %6342 = vmatprep.subr.mxu0 %v5664
    %6343 = vmatpush1.msra.mxu0 %v5663
    %6344 = vmatprep.subr.mxu0 %v5668
    %6345 = vmatpush1.msra.mxu0 %v5667
    %6346 = vmatprep.subr.mxu0 %v5672
    %6347 = vmatpush1.msra.mxu0 %v5671
    %6348 = vmatprep.subr.mxu0 %v5676
    %6349 = vmatpush1.msra.mxu0 %v5675
    %6350 = vmatprep.subr.mxu0 %v5680
    %6351 = vmatpush1.msra.mxu0 %v5679
    %6352 = vmatprep.subr.mxu0 %v5684
    %6353 = vmatpush1.msra.mxu0 %v5683
    %6354 = vmatprep.subr.mxu0 %v5688
    %6355 = vmatpush1.msra.mxu0 %v5687
    %6356 = vmatprep.subr.mxu0 %v5692
    %6357 = vmatpush1.msra.mxu0 %v5691
    %6358 = vmatprep.subr.mxu0 %v5696
    %6359 = vmatpush1.msra.mxu0 %v5695
    %6360 = vmatprep.subr.mxu0 %v5700
    %6361 = vmatpush1.msra.mxu0 %v5699
    %6362 = vmatprep.subr.mxu0 %v5704
    %6363 = vmatpush1.msra.mxu0 %v5703
    %6364 = vmatprep.subr.mxu0 %v5708
    %6365 = vmatpush1.msra.mxu0 %v5707
    %6366 = vmatprep.subr.mxu0 %v5712
    %6367 = vmatpush1.msra.mxu0 %v5711
    %6368 = vmatprep.subr.mxu0 %v5716
    %6369 = vmatpush1.msra.mxu0 %v5715
    %6370 = vmatprep.subr.mxu0 %v5720
    %6371 = vmatpush1.msra.mxu0 %v5719
    %6372 = vmatprep.subr.mxu0 %v5724
    %6373 = vmatpush1.msra.mxu0 %v5723
    %6374 = vmatprep.subr.mxu0 %v5728
    %6375 = vmatpush1.msra.mxu0 %v5727
    %6376 = vmatprep.subr.mxu0 %v5732
    %6377 = vmatpush1.msra.mxu0 %v5731
    %6378 = vmatprep.subr.mxu0 %v5736
    %6379 = vmatpush1.msra.mxu0 %v5735
    %6380 = vmatprep.subr.mxu0 %v5740
    %6381 = vmatpush1.msra.mxu0 %v5739
    %6382 = vmatprep.subr.mxu0 %v5744
    %6383 = vmatpush1.msra.mxu0 %v5743
    %6384 = vmatprep.subr.mxu0 %v5748
    %6385 = vmatpush1.msra.mxu0 %v5747
    %6386 = vmatprep.subr.mxu0 %v5752
    %6387 = vmatpush1.msra.mxu0 %v5751
    %6388 = vmatprep.subr.mxu0 %v5756
    %6389 = vmatpush1.msra.mxu0 %v5755
    %6390 = vmatprep.subr.mxu0 %v5760
    %6391 = vmatpush1.msra.mxu0 %v5759
    %6392 = vmatprep.subr.mxu0 %v5764
    %6393 = vmatpush1.msra.mxu0 %v5763
    %6394 = vmatprep.subr.mxu0 %v5768
    %6395 = vmatpush1.msra.mxu0 %v5767
    %6396 = vmatprep.subr.mxu0 %v5772
    %6397 = vmatpush1.msra.mxu0 %v5771
    %6398 = vmatprep.subr.mxu0 %v5776
    %6399 = vmatpush1.msra.mxu0 %v5775
    %6400 = vmatprep.subr.mxu0 %v5780
    %6401 = vmatpush1.msra.mxu0 %v5779
    %6402 = vmatprep.mubr.f32.mxu0 %v6195
    %6403 = vmatmul.mubr.f32.gmra.mrb[0].mxu0 %v6266
    %v6404 = vpop.f32.mrb[0].mxu0
    %v6405 = vadd.f32 %v5794, %v6404
    %v6406 = vpop.f32.mrb[0].mxu0
    %v6407 = vadd.f32 %v5798, %v6406
    %6408 = vdwg.mxu0
    %v6409 = vxor.u32 %v6334, 2147483648
    %v6410 = vmul.f32 %v6409, 1.442695
    %v6411 = vpow.pop %v6410
    %v6412 = vadd.f32 %v6411, 1.0
    %v6413 = vrcp.pop %v6412
    %v6414 = vmul.f32 1.0, %v6413
    %v6415 = vxor.u32 %v6336, 2147483648
    %v6416 = vmul.f32 %v6415, 1.442695
    %v6417 = vpow.pop %v6416
    %v6418 = vadd.f32 %v6417, 1.0
    %v6419 = vrcp.pop %v6418
    %v6420 = vmul.f32 1.0, %v6419
    %v6421 = vmul.f32 %v6414, %v6407
    %v6422 = vadd.f32 %v6405, %v6421
    %v6423 = vtanh.pop %v6422
    %v6424 = vsub.f32 1.0, %v6420
    %v6425 = vmul.f32 %v6424, %v6423
    %v6426 = vmul.f32 %v6420, %v6195
    %v6427 = vadd.f32 %v6425, %v6426
    %v6428 = vld [vmem:[#allocation13] sm:$0xff]
    %v6429 = vld [vmem:[#allocation13 + $0x8] sm:$0xff]
    %v6430 = vld [vmem:[#allocation13 + $0x10] sm:$0xff]
    %v6431 = vld [vmem:[#allocation13 + $0x18] sm:$0xff]
    %v6432 = vld [vmem:[#allocation13 + $0x20] sm:$0xff]
    %v6433 = vld [vmem:[#allocation13 + $0x28] sm:$0xff]
    %v6434 = vld [vmem:[#allocation13 + $0x30] sm:$0xff]
    %v6435 = vld [vmem:[#allocation13 + $0x38] sm:$0xff]
    %v6436 = vld [vmem:[#allocation13 + $0x40] sm:$0xff]
    %v6437 = vld [vmem:[#allocation13 + $0x48] sm:$0xff]
    %v6438 = vld [vmem:[#allocation13 + $0x50] sm:$0xff]
    %v6439 = vld [vmem:[#allocation13 + $0x58] sm:$0xff]
    %v6440 = vld [vmem:[#allocation13 + $0x60] sm:$0xff]
    %v6441 = vld [vmem:[#allocation13 + $0x68] sm:$0xff]
    %v6442 = vld [vmem:[#allocation13 + $0x70] sm:$0xff]
    %v6443 = vld [vmem:[#allocation13 + $0x78] sm:$0xff]
    %v6444 = vld [vmem:[#allocation13 + $0x80] sm:$0xff]
    %v6445 = vld [vmem:[#allocation13 + $0x88] sm:$0xff]
    %v6446 = vld [vmem:[#allocation13 + $0x90] sm:$0xff]
    %v6447 = vld [vmem:[#allocation13 + $0x98] sm:$0xff]
    %v6448 = vld [vmem:[#allocation13 + $0xa0] sm:$0xff]
    %v6449 = vld [vmem:[#allocation13 + $0xa8] sm:$0xff]
    %v6450 = vld [vmem:[#allocation13 + $0xb0] sm:$0xff]
    %v6451 = vld [vmem:[#allocation13 + $0xb8] sm:$0xff]
    %v6452 = vld [vmem:[#allocation13 + $0xc0] sm:$0xff]
    %v6453 = vld [vmem:[#allocation13 + $0xc8] sm:$0xff]
    %v6454 = vld [vmem:[#allocation13 + $0xd0] sm:$0xff]
    %v6455 = vld [vmem:[#allocation13 + $0xd8] sm:$0xff]
    %v6456 = vld [vmem:[#allocation13 + $0xe0] sm:$0xff]
    %v6457 = vld [vmem:[#allocation13 + $0xe8] sm:$0xff]
    %v6458 = vld [vmem:[#allocation13 + $0xf0] sm:$0xff]
    %v6459 = vld [vmem:[#allocation13 + $0xf8] sm:$0xff]
    %v6460 = vld [vmem:[%s15] sm:$0x1]
    %v6462 = vlaneseq
    %v6463 = vshrl.u32 %v6462, 7
    %v6464 = vsub.s32 0, %v6463
    %v6465 = vrot.slane %v6460, %v6464
    %6467 = vmatprep.subr.mxu0 0.0
    %6468 = vmatpush1.msra.mxu0 %v6428
    %6469 = vmatprep.subr.mxu0 0.0
    %6470 = vmatpush1.msra.mxu0 %v6429
    %6471 = vmatprep.subr.mxu0 0.0
    %6472 = vmatpush1.msra.mxu0 %v6430
    %6473 = vmatprep.subr.mxu0 0.0
    %6474 = vmatpush1.msra.mxu0 %v6431
    %6475 = vmatprep.subr.mxu0 0.0
    %6476 = vmatpush1.msra.mxu0 %v6432
    %6477 = vmatprep.subr.mxu0 0.0
    %6478 = vmatpush1.msra.mxu0 %v6433
    %6479 = vmatprep.subr.mxu0 0.0
    %6480 = vmatpush1.msra.mxu0 %v6434
    %6481 = vmatprep.subr.mxu0 0.0
    %6482 = vmatpush1.msra.mxu0 %v6435
    %6483 = vmatprep.subr.mxu0 0.0
    %6484 = vmatpush1.msra.mxu0 %v6436
    %6485 = vmatprep.subr.mxu0 0.0
    %6486 = vmatpush1.msra.mxu0 %v6437
    %6487 = vmatprep.subr.mxu0 0.0
    %6488 = vmatpush1.msra.mxu0 %v6438
    %6489 = vmatprep.subr.mxu0 0.0
    %6490 = vmatpush1.msra.mxu0 %v6439
    %6491 = vmatprep.subr.mxu0 0.0
    %6492 = vmatpush1.msra.mxu0 %v6440
    %6493 = vmatprep.subr.mxu0 0.0
    %6494 = vmatpush1.msra.mxu0 %v6441
    %6495 = vmatprep.subr.mxu0 0.0
    %6496 = vmatpush1.msra.mxu0 %v6442
    %6497 = vmatprep.subr.mxu0 0.0
    %6498 = vmatpush1.msra.mxu0 %v6443
    %6499 = vmatprep.subr.mxu0 0.0
    %6500 = vmatpush1.msra.mxu0 %v6444
    %6501 = vmatprep.subr.mxu0 0.0
    %6502 = vmatpush1.msra.mxu0 %v6445
    %6503 = vmatprep.subr.mxu0 0.0
    %6504 = vmatpush1.msra.mxu0 %v6446
    %6505 = vmatprep.subr.mxu0 0.0
    %6506 = vmatpush1.msra.mxu0 %v6447
    %6507 = vmatprep.subr.mxu0 0.0
    %6508 = vmatpush1.msra.mxu0 %v6448
    %6509 = vmatprep.subr.mxu0 0.0
    %6510 = vmatpush1.msra.mxu0 %v6449
    %6511 = vmatprep.subr.mxu0 0.0
    %6512 = vmatpush1.msra.mxu0 %v6450
    %6513 = vmatprep.subr.mxu0 0.0
    %6514 = vmatpush1.msra.mxu0 %v6451
    %6515 = vmatprep.subr.mxu0 0.0
    %6516 = vmatpush1.msra.mxu0 %v6452
    %6517 = vmatprep.subr.mxu0 0.0
    %6518 = vmatpush1.msra.mxu0 %v6453
    %6519 = vmatprep.subr.mxu0 0.0
    %6520 = vmatpush1.msra.mxu0 %v6454
    %6521 = vmatprep.subr.mxu0 0.0
    %6522 = vmatpush1.msra.mxu0 %v6455
    %6523 = vmatprep.subr.mxu0 0.0
    %6524 = vmatpush1.msra.mxu0 %v6456
    %6525 = vmatprep.subr.mxu0 0.0
    %6526 = vmatpush1.msra.mxu0 %v6457
    %6527 = vmatprep.subr.mxu0 0.0
    %6528 = vmatpush1.msra.mxu0 %v6458
    %6529 = vmatprep.subr.mxu0 0.0
    %6530 = vmatpush1.msra.mxu0 %v6459
    %6531 = vmatprep.mubr.f32.mxu0 %v6427
    %6532 = vmatmul.mubr.f32.gmra.mrb[0].mxu0 %v4199
    %v6533 = vpop.f32.mrb[0].mxu0
    %v6534 = vadd.f32 %v6465, %v6533
    %v6535 = vpop.f32.mrb[0].mxu0
    %6536 = vdwg.mxu0
    %6537 = vst [vmem:[#allocation14] sm:$0xf] %v6534
    // Predicated region
    $region94: #{ggnn_forward.1} parent=1 // pred_check
      _
    $region95: #{ggnn_forward.1} parent=1 // pred_check_branch
      %6539 = sbr.rel (0) target = $region97
    $region96: #{ggnn_forward.1} parent=1 // pred_region
      %s6541 = ssub.s32 64, 64
      %6542 = vsyncadd [#allocation4], %s6541
      %s6544 = sshll.u32 [#allocation14], 4
      %s6545 = int_to_ptr.vmem [resolvable:$true] %s6544
      %6547 = dma.vmem_to_hbm [thread:$0]  %s6545, 64, %s16, [#allocation4]
    $region97: #{ggnn_forward.1} parent=1 // pred_fallthru
      _
    // Predicated region
    $region98: #{ggnn_forward.1} parent=1 // pred_check
      _
    $region99: #{ggnn_forward.1} parent=1 // pred_check_branch
      %6549 = sbr.rel (0) target = $region101
    $region100: #{ggnn_forward.1} parent=1 // pred_region
      %6550 = dma.done [#allocation4], 64
    $region101: #{ggnn_forward.1} parent=1 // pred_fallthru
      _
    %6551 = vsyncpa [#allocation3], 1
    %6552 = vsyncpa [#allocation6], 1
    %6553 = vsyncpa [#allocation9], 1
    %6554 = vsyncpa [#allocation12], 1
    %6555 = vsyncpa [#allocation4], 1

</llo_original>
